<compile_context>
chip_gen: v7x
topology: tpu7x:2x2x1
jax: 0.10.0
libtpu: 0.0.40
codegen_flags: <defaults>
</compile_context>

<pallas_src>
import jax
import jax.numpy as jnp
from jax.experimental import pallas as pl
from jax.experimental.pallas import tpu as pltpu

# ----------------------------- config (small) -----------------------------
VOCAB = 100
MAX_POS = 16
D = 32          # hidden size
H = 4           # attention heads
DH = D // H     # head dim
FFN = 64        # intermediate size
LAYERS = 2
EPS = 1e-12
DTYPE = jnp.float32
WDTYPE = jnp.bfloat16   # matmul-weight storage dtype (MXU-native)


# ------------------------------ fused kernel -------------------------------
def _encoder_kernel(x_ref, mask_ref, embln_ref, wqkv_ref, bqkv_ref, wo_ref,
                    bo_ref, ln1_ref, w1_ref, b1_ref, w2_ref, b2_ref, ln2_ref,
                    out_ref):
    """Whole encoder for the whole batch in one invocation.

    x_ref:   [B*S, D] f32 (token + position embeddings, rows of all sentences)
    mask_ref:[B, S]   f32 attention mask
    Weights are VMEM-resident (<100 KB total, bf16 for matmul operands).
    """
    B, S = mask_ref.shape
    x = x_ref[...]                                        # [B*S, D] f32
    mask = mask_ref[...]                                  # [B, S]   f32

    def layer_norm(y, gb):                                # gb: [2, D] = (gamma, beta)
        # Independent reductions: var = E[x^2] - mean^2 (no reduce-after-reduce).
        mu = jnp.mean(y, axis=-1, keepdims=True)
        ms = jnp.mean(y * y, axis=-1, keepdims=True)
        var = ms - mu * mu
        return (y - mu) * jax.lax.rsqrt(var + EPS) * gb[0:1, :] + gb[1:2, :]

    x = layer_norm(x, embln_ref[...])
    scale = 1.0 / float(DH) ** 0.5

    for l in range(LAYERS):                               # static unroll
        # Fused QKV projection on the whole [B*S, D] slab (bf16 in, f32 acc).
        qkv = (jnp.dot(x.astype(jnp.bfloat16), wqkv_ref[l],
                       preferred_element_type=jnp.float32)
               + bqkv_ref[l])                             # [B*S, 3D] f32

        # Per-row attention (scores/softmax/PV need the per-row key mask);
        # at D=32 the per-head lane slices stay within a single vreg width.
        attn_rows = []
        for b in range(B):                                # static unroll
            row = qkv[b * S:(b + 1) * S, :]               # [S, 3D]
            bias = (1.0 - mask[b:b + 1, :]) * (-1e9)      # [1, S] additive key mask
            heads = []
            for h in range(H):                            # static unroll
                qh = row[:, h * DH:(h + 1) * DH].astype(jnp.bfloat16)
                kh = row[:, D + h * DH:D + (h + 1) * DH].astype(jnp.bfloat16)
                vh = row[:, 2 * D + h * DH:2 * D + (h + 1) * DH].astype(jnp.bfloat16)
                # Contract the head dim directly (no k.T materialization).
                s = jnp.einsum('qd,kd->qk', qh, kh,
                               preferred_element_type=jnp.float32) * scale + bias
                m = jnp.max(s, axis=-1, keepdims=True)
                p = jnp.exp(s - m)
                p = p * pl.reciprocal(jnp.sum(p, axis=-1, keepdims=True),
                                      approx=True)        # EUP slot
                heads.append(jnp.dot(p.astype(jnp.bfloat16), vh,
                                     preferred_element_type=jnp.float32))
            attn_rows.append(jnp.concatenate(heads, axis=-1))   # [S, D]
        attn = jnp.concatenate(attn_rows, axis=0)               # [B*S, D]

        # Single merged output projection per layer (was 4 per-head matmuls).
        attn = jnp.dot(attn.astype(jnp.bfloat16), wo_ref[l],
                       preferred_element_type=jnp.float32) + bo_ref[l]
        x = layer_norm(x + attn, ln1_ref[l])              # residual + LN1 fused

        # Feed-forward network on the whole [B*S, *] slab.
        h1 = jnp.dot(x.astype(jnp.bfloat16), w1_ref[l],
                     preferred_element_type=jnp.float32) + b1_ref[l]
        # TODO(synk): HF BERT uses exact erf GELU; tanh approximation kept
        # (synthetic weights, elementwise math stays f32 for v5e).
        h1 = jax.nn.gelu(h1)
        h2 = jnp.dot(h1.astype(jnp.bfloat16), w2_ref[l],
                     preferred_element_type=jnp.float32) + b2_ref[l]
        x = layer_norm(x + h2, ln2_ref[l])                # residual + LN2 fused

    # Masked mean pooling epilogue (mask-weighted sum expressed as matmuls),
    # written as ONE lane-dense [B, D] store; the divide is exact (scalar/row).
    pooled = []
    for b in range(B):
        pooled.append(jnp.dot(mask[b:b + 1, :], x[b * S:(b + 1) * S, :],
                              preferred_element_type=jnp.float32))   # [1, D]
    pooled = jnp.concatenate(pooled, axis=0)                          # [B, D]
    cnt = jnp.maximum(jnp.sum(mask, axis=-1, keepdims=True), 1e-9)    # [B, 1]
    out_ref[...] = (pooled / cnt).astype(out_ref.dtype)


# ------------------------------ parameter init -----------------------------
def init_params(key):
    ks = jax.random.split(key, 2 + LAYERS)
    std = 0.02
    params = {
        "word_emb": std * jax.random.normal(ks[0], (VOCAB, D), DTYPE),
        "pos_emb": std * jax.random.normal(ks[1], (MAX_POS, D), DTYPE),
        "emb_ln": jnp.stack([jnp.ones((D,), DTYPE), jnp.zeros((D,), DTYPE)]),  # [2, D]
    }
    wqkv, bqkv, wo, bo, ln1, w1, b1, w2, b2, ln2 = ([] for _ in range(10))
    for l in range(LAYERS):
        lk = jax.random.split(ks[2 + l], 6)
        # Fused QKV weight: [D, 3D] = concat(Wq, Wk, Wv) along output axis (bf16).
        wqkv.append(jnp.concatenate(
            [std * jax.random.normal(lk[i], (D, D), DTYPE) for i in range(3)],
            axis=1).astype(WDTYPE))
        bqkv.append(jnp.zeros((1, 3 * D), DTYPE))
        wo.append((std * jax.random.normal(lk[3], (D, D), DTYPE)).astype(WDTYPE))
        bo.append(jnp.zeros((1, D), DTYPE))
        ln1.append(jnp.stack([jnp.ones((D,), DTYPE), jnp.zeros((D,), DTYPE)]))
        w1.append((std * jax.random.normal(lk[4], (D, FFN), DTYPE)).astype(WDTYPE))
        b1.append(jnp.zeros((1, FFN), DTYPE))
        w2.append((std * jax.random.normal(lk[5], (FFN, D), DTYPE)).astype(WDTYPE))
        b2.append(jnp.zeros((1, D), DTYPE))
        ln2.append(jnp.stack([jnp.ones((D,), DTYPE), jnp.zeros((D,), DTYPE)]))
    params.update({
        "wqkv": jnp.stack(wqkv), "bqkv": jnp.stack(bqkv),
        "wo": jnp.stack(wo), "bo": jnp.stack(bo), "ln1": jnp.stack(ln1),
        "w1": jnp.stack(w1), "b1": jnp.stack(b1),
        "w2": jnp.stack(w2), "b2": jnp.stack(b2), "ln2": jnp.stack(ln2),
    })
    return params


# ------------------------------- forward pass -------------------------------
def encode(token_ids, attention_mask, params):
    """token_ids: [B, S] int32, attention_mask: [B, S] -> [B, D] embeddings."""
    B, S = token_ids.shape
    # Glue: embedding gather + positional add (dynamic gather stays in XLA),
    # rows of all sentences merged into the matmul M dimension.
    x = params["word_emb"][token_ids] + params["pos_emb"][:S][None, :, :]   # [B, S, D]
    x = x.reshape(B * S, D).astype(DTYPE)
    mask = attention_mask.astype(DTYPE)

    def full(shape):
        n = len(shape)
        return pl.BlockSpec(shape, lambda i, _n=n: (0,) * _n)

    return pl.pallas_call(
        _encoder_kernel,
        out_shape=jax.ShapeDtypeStruct((B, D), DTYPE),
        grid=(1,),                                        # single fused invocation
        in_specs=[
            full((B * S, D)),                             # merged activation slab
            full((B, S)),                                 # attention mask
            full((2, D)),                                 # embedding LN
            full((LAYERS, D, 3 * D)),                     # fused QKV weights (bf16)
            full((LAYERS, 1, 3 * D)),                     # fused QKV biases
            full((LAYERS, D, D)),                         # Wo (bf16)
            full((LAYERS, 1, D)),                         # bo
            full((LAYERS, 2, D)),                         # LN1 (gamma, beta)
            full((LAYERS, D, FFN)),                       # W1 (bf16)
            full((LAYERS, 1, FFN)),                       # b1
            full((LAYERS, FFN, D)),                       # W2 (bf16)
            full((LAYERS, 1, D)),                         # b2
            full((LAYERS, 2, D)),                         # LN2 (gamma, beta)
        ],
        out_specs=full((B, D)),
        compiler_params=pltpu.CompilerParams(
            dimension_semantics=("arbitrary",)),
    )(x, mask, params["emb_ln"], params["wqkv"], params["bqkv"], params["wo"],
      params["bo"], params["ln1"], params["w1"], params["b1"], params["w2"],
      params["b2"], params["ln2"])


# ----------------------------------- main -----------------------------------
if __name__ == "__main__":
    key = jax.random.PRNGKey(0)
    k_ids, k_params = jax.random.split(key)

    B, S = 2, 8
    token_ids = jax.random.randint(k_ids, (B, S), 0, VOCAB, dtype=jnp.int32)
    # second sentence has 2 padding tokens at the end
    attention_mask = jnp.array(
        [[1, 1, 1, 1, 1, 1, 1, 1],
         [1, 1, 1, 1, 1, 1, 0, 0]], dtype=jnp.float32)

    params = init_params(k_params)

    embeddings = jax.jit(encode)(token_ids, attention_mask, params)
    embeddings = jax.block_until_ready(embeddings)

    assert embeddings.shape == (B, D)
    assert bool(jnp.all(jnp.isfinite(embeddings)))
    print("KERNEL_OK")
</pallas_src>

<mosaic_0001>
module attributes {stable_mosaic.version = 11 : i64} {
  func.func @_encoder_kernel(%arg0: i32, %arg1: memref<16x32xf32, #tpu.memory_space<vmem>>, %arg2: memref<2x8xf32, #tpu.memory_space<vmem>>, %arg3: memref<2x32xf32, #tpu.memory_space<vmem>>, %arg4: memref<2x32x96xbf16, #tpu.memory_space<vmem>>, %arg5: memref<2x1x96xf32, #tpu.memory_space<vmem>>, %arg6: memref<2x32x32xbf16, #tpu.memory_space<vmem>>, %arg7: memref<2x1x32xf32, #tpu.memory_space<vmem>>, %arg8: memref<2x2x32xf32, #tpu.memory_space<vmem>>, %arg9: memref<2x32x64xbf16, #tpu.memory_space<vmem>>, %arg10: memref<2x1x64xf32, #tpu.memory_space<vmem>>, %arg11: memref<2x64x32xbf16, #tpu.memory_space<vmem>>, %arg12: memref<2x1x32xf32, #tpu.memory_space<vmem>>, %arg13: memref<2x2x32xf32, #tpu.memory_space<vmem>>, %arg14: memref<2x32xf32, #tpu.memory_space<vmem>>) attributes {dimension_semantics = [#tpu.dimension_semantics<arbitrary>], iteration_bounds = array<i64: 1>, scalar_prefetch = 0 : i64, scratch_operands = 0 : i64, tpu.core_type = #tpu.core_type<tc>, window_params = [{pipeline_mode = #tpu.pipeline_mode<synchronous>, transform_indices = @transform_0, window_bounds = array<i64: 16, 32>}, {pipeline_mode = #tpu.pipeline_mode<synchronous>, transform_indices = @transform_1, window_bounds = array<i64: 2, 8>}, {pipeline_mode = #tpu.pipeline_mode<synchronous>, transform_indices = @transform_2, window_bounds = array<i64: 2, 32>}, {pipeline_mode = #tpu.pipeline_mode<synchronous>, transform_indices = @transform_3, window_bounds = array<i64: 2, 32, 96>}, {pipeline_mode = #tpu.pipeline_mode<synchronous>, transform_indices = @transform_4, window_bounds = array<i64: 2, 1, 96>}, {pipeline_mode = #tpu.pipeline_mode<synchronous>, transform_indices = @transform_5, window_bounds = array<i64: 2, 32, 32>}, {pipeline_mode = #tpu.pipeline_mode<synchronous>, transform_indices = @transform_6, window_bounds = array<i64: 2, 1, 32>}, {pipeline_mode = #tpu.pipeline_mode<synchronous>, transform_indices = @transform_7, window_bounds = array<i64: 2, 2, 32>}, {pipeline_mode = #tpu.pipeline_mode<synchronous>, transform_indices = @transform_8, window_bounds = array<i64: 2, 32, 64>}, {pipeline_mode = #tpu.pipeline_mode<synchronous>, transform_indices = @transform_9, window_bounds = array<i64: 2, 1, 64>}, {pipeline_mode = #tpu.pipeline_mode<synchronous>, transform_indices = @transform_10, window_bounds = array<i64: 2, 64, 32>}, {pipeline_mode = #tpu.pipeline_mode<synchronous>, transform_indices = @transform_11, window_bounds = array<i64: 2, 1, 32>}, {pipeline_mode = #tpu.pipeline_mode<synchronous>, transform_indices = @transform_12, window_bounds = array<i64: 2, 2, 32>}, {pipeline_mode = #tpu.pipeline_mode<synchronous>, transform_indices = @transform_13, window_bounds = array<i64: 2, 32>}]} {
    %c0 = arith.constant 0 : index
    %c0_0 = arith.constant 0 : index
    %0 = vector.load %arg1[%c0, %c0_0] : memref<16x32xf32, #tpu.memory_space<vmem>>, vector<16x32xf32>
    %c0_1 = arith.constant 0 : index
    %c0_2 = arith.constant 0 : index
    %1 = vector.load %arg2[%c0_1, %c0_2] : memref<2x8xf32, #tpu.memory_space<vmem>>, vector<2x8xf32>
    %c0_3 = arith.constant 0 : index
    %c0_4 = arith.constant 0 : index
    %2 = vector.load %arg3[%c0_3, %c0_4] : memref<2x32xf32, #tpu.memory_space<vmem>>, vector<2x32xf32>
    %cst = arith.constant dense<0.000000e+00> : vector<16xf32>
    %3 = vector.multi_reduction <add>, %0, %cst [1] : vector<16x32xf32> to vector<16xf32>
    %4 = vector.shape_cast %3 : vector<16xf32> to vector<16x1xf32>
    %cst_5 = arith.constant 3.200000e+01 : f32
    %5 = vector.broadcast %cst_5 : f32 to vector<16x1xf32>
    %6 = arith.divf %4, %5 : vector<16x1xf32>
    %7 = arith.mulf %0, %0 : vector<16x32xf32>
    %cst_6 = arith.constant dense<0.000000e+00> : vector<16xf32>
    %8 = vector.multi_reduction <add>, %7, %cst_6 [1] : vector<16x32xf32> to vector<16xf32>
    %9 = vector.shape_cast %8 : vector<16xf32> to vector<16x1xf32>
    %cst_7 = arith.constant 3.200000e+01 : f32
    %10 = vector.broadcast %cst_7 : f32 to vector<16x1xf32>
    %11 = arith.divf %9, %10 : vector<16x1xf32>
    %12 = arith.mulf %6, %6 : vector<16x1xf32>
    %13 = arith.subf %11, %12 : vector<16x1xf32>
    %14 = vector.broadcast %6 : vector<16x1xf32> to vector<16x32xf32>
    %15 = arith.subf %0, %14 : vector<16x32xf32>
    %cst_8 = arith.constant 9.99999996E-13 : f32
    %16 = vector.broadcast %cst_8 : f32 to vector<16x1xf32>
    %17 = arith.addf %13, %16 : vector<16x1xf32>
    %18 = math.rsqrt %17 : vector<16x1xf32>
    %19 = vector.broadcast %18 : vector<16x1xf32> to vector<16x32xf32>
    %20 = arith.mulf %15, %19 : vector<16x32xf32>
    %21 = vector.extract_strided_slice %2 {offsets = [0, 0], sizes = [1, 32], strides = [1, 1]} : vector<2x32xf32> to vector<1x32xf32>
    %22 = vector.broadcast %21 : vector<1x32xf32> to vector<16x32xf32>
    %23 = arith.mulf %20, %22 : vector<16x32xf32>
    %24 = vector.extract_strided_slice %2 {offsets = [1, 0], sizes = [1, 32], strides = [1, 1]} : vector<2x32xf32> to vector<1x32xf32>
    %25 = vector.broadcast %24 : vector<1x32xf32> to vector<16x32xf32>
    %26 = arith.addf %23, %25 : vector<16x32xf32>
    %27 = arith.truncf %26 : vector<16x32xf32> to vector<16x32xbf16>
    %c0_9 = arith.constant 0 : index
    %c0_10 = arith.constant 0 : index
    %c0_11 = arith.constant 0 : index
    %28 = vector.load %arg4[%c0_9, %c0_10, %c0_11] : memref<2x32x96xbf16, #tpu.memory_space<vmem>>, vector<1x32x96xbf16>
    %29 = vector.shape_cast %28 : vector<1x32x96xbf16> to vector<32x96xbf16>
    %cst_12 = arith.constant dense<0.000000e+00> : vector<16x96xf32>
    %30 = tpu.matmul %27, %29, %cst_12 {dimension_numbers = #tpu.dot_dimension_numbers<[1], [0], [0], [1], [0, 0, 1, 1], [], []>} : vector<16x32xbf16>, vector<32x96xbf16>, vector<16x96xf32> -> vector<16x96xf32>
    %c0_13 = arith.constant 0 : index
    %c0_14 = arith.constant 0 : index
    %c0_15 = arith.constant 0 : index
    %31 = vector.load %arg5[%c0_13, %c0_14, %c0_15] : memref<2x1x96xf32, #tpu.memory_space<vmem>>, vector<1x1x96xf32>
    %32 = vector.shape_cast %31 : vector<1x1x96xf32> to vector<1x96xf32>
    %33 = vector.broadcast %32 : vector<1x96xf32> to vector<16x96xf32>
    %34 = arith.addf %30, %33 : vector<16x96xf32>
    %35 = vector.extract_strided_slice %34 {offsets = [0, 0], sizes = [8, 96], strides = [1, 1]} : vector<16x96xf32> to vector<8x96xf32>
    %36 = vector.extract_strided_slice %1 {offsets = [0, 0], sizes = [1, 8], strides = [1, 1]} : vector<2x8xf32> to vector<1x8xf32>
    %cst_16 = arith.constant 1.000000e+00 : f32
    %37 = vector.broadcast %cst_16 : f32 to vector<1x8xf32>
    %38 = arith.subf %37, %36 : vector<1x8xf32>
    %cst_17 = arith.constant -1.000000e+09 : f32
    %39 = vector.broadcast %cst_17 : f32 to vector<1x8xf32>
    %40 = arith.mulf %38, %39 : vector<1x8xf32>
    %41 = vector.extract_strided_slice %35 {offsets = [0, 0], sizes = [8, 8], strides = [1, 1]} : vector<8x96xf32> to vector<8x8xf32>
    %42 = arith.truncf %41 : vector<8x8xf32> to vector<8x8xbf16>
    %43 = vector.extract_strided_slice %35 {offsets = [0, 32], sizes = [8, 8], strides = [1, 1]} : vector<8x96xf32> to vector<8x8xf32>
    %44 = arith.truncf %43 : vector<8x8xf32> to vector<8x8xbf16>
    %45 = vector.extract_strided_slice %35 {offsets = [0, 64], sizes = [8, 8], strides = [1, 1]} : vector<8x96xf32> to vector<8x8xf32>
    %46 = arith.truncf %45 : vector<8x8xf32> to vector<8x8xbf16>
    "tpu.trace_start"() <{level = 10 : i32, message = "qd,kd->qk"}> : () -> ()
    %cst_18 = arith.constant dense<0.000000e+00> : vector<8x8xf32>
    %47 = tpu.matmul %42, %44, %cst_18 {dimension_numbers = #tpu.dot_dimension_numbers<[1], [1], [0], [0], [0, 0, 1, 0], [], []>} : vector<8x8xbf16>, vector<8x8xbf16>, vector<8x8xf32> -> vector<8x8xf32>
    "tpu.trace_stop"() : () -> ()
    %cst_19 = arith.constant 0.353553385 : f32
    %48 = vector.broadcast %cst_19 : f32 to vector<8x8xf32>
    %49 = arith.mulf %47, %48 : vector<8x8xf32>
    %50 = vector.broadcast %40 : vector<1x8xf32> to vector<8x8xf32>
    %51 = arith.addf %49, %50 : vector<8x8xf32>
    %cst_20 = arith.constant dense<0xFF800000> : vector<8xf32>
    %52 = vector.multi_reduction <maximumf>, %51, %cst_20 [1] : vector<8x8xf32> to vector<8xf32>
    %53 = vector.shape_cast %52 : vector<8xf32> to vector<8x1xf32>
    %54 = vector.broadcast %53 : vector<8x1xf32> to vector<8x8xf32>
    %55 = arith.subf %51, %54 : vector<8x8xf32>
    %56 = math.exp %55 : vector<8x8xf32>
    %cst_21 = arith.constant dense<0.000000e+00> : vector<8xf32>
    %57 = vector.multi_reduction <add>, %56, %cst_21 [1] : vector<8x8xf32> to vector<8xf32>
    %58 = vector.shape_cast %57 : vector<8xf32> to vector<8x1xf32>
    %59 = tpu.reciprocal %58 {approx = true} : vector<8x1xf32> -> vector<8x1xf32>
    %60 = vector.broadcast %59 : vector<8x1xf32> to vector<8x8xf32>
    %61 = arith.mulf %56, %60 : vector<8x8xf32>
    %62 = arith.truncf %61 : vector<8x8xf32> to vector<8x8xbf16>
    %cst_22 = arith.constant dense<0.000000e+00> : vector<8x8xf32>
    %63 = tpu.matmul %62, %46, %cst_22 {dimension_numbers = #tpu.dot_dimension_numbers<[1], [0], [0], [1], [0, 0, 1, 1], [], []>} : vector<8x8xbf16>, vector<8x8xbf16>, vector<8x8xf32> -> vector<8x8xf32>
    %64 = vector.extract_strided_slice %35 {offsets = [0, 8], sizes = [8, 8], strides = [1, 1]} : vector<8x96xf32> to vector<8x8xf32>
    %65 = arith.truncf %64 : vector<8x8xf32> to vector<8x8xbf16>
    %66 = vector.extract_strided_slice %35 {offsets = [0, 40], sizes = [8, 8], strides = [1, 1]} : vector<8x96xf32> to vector<8x8xf32>
    %67 = arith.truncf %66 : vector<8x8xf32> to vector<8x8xbf16>
    %68 = vector.extract_strided_slice %35 {offsets = [0, 72], sizes = [8, 8], strides = [1, 1]} : vector<8x96xf32> to vector<8x8xf32>
    %69 = arith.truncf %68 : vector<8x8xf32> to vector<8x8xbf16>
    "tpu.trace_start"() <{level = 10 : i32, message = "qd,kd->qk"}> : () -> ()
    %cst_23 = arith.constant dense<0.000000e+00> : vector<8x8xf32>
    %70 = tpu.matmul %65, %67, %cst_23 {dimension_numbers = #tpu.dot_dimension_numbers<[1], [1], [0], [0], [0, 0, 1, 0], [], []>} : vector<8x8xbf16>, vector<8x8xbf16>, vector<8x8xf32> -> vector<8x8xf32>
    "tpu.trace_stop"() : () -> ()
    %cst_24 = arith.constant 0.353553385 : f32
    %71 = vector.broadcast %cst_24 : f32 to vector<8x8xf32>
    %72 = arith.mulf %70, %71 : vector<8x8xf32>
    %73 = vector.broadcast %40 : vector<1x8xf32> to vector<8x8xf32>
    %74 = arith.addf %72, %73 : vector<8x8xf32>
    %cst_25 = arith.constant dense<0xFF800000> : vector<8xf32>
    %75 = vector.multi_reduction <maximumf>, %74, %cst_25 [1] : vector<8x8xf32> to vector<8xf32>
    %76 = vector.shape_cast %75 : vector<8xf32> to vector<8x1xf32>
    %77 = vector.broadcast %76 : vector<8x1xf32> to vector<8x8xf32>
    %78 = arith.subf %74, %77 : vector<8x8xf32>
    %79 = math.exp %78 : vector<8x8xf32>
    %cst_26 = arith.constant dense<0.000000e+00> : vector<8xf32>
    %80 = vector.multi_reduction <add>, %79, %cst_26 [1] : vector<8x8xf32> to vector<8xf32>
    %81 = vector.shape_cast %80 : vector<8xf32> to vector<8x1xf32>
    %82 = tpu.reciprocal %81 {approx = true} : vector<8x1xf32> -> vector<8x1xf32>
    %83 = vector.broadcast %82 : vector<8x1xf32> to vector<8x8xf32>
    %84 = arith.mulf %79, %83 : vector<8x8xf32>
    %85 = arith.truncf %84 : vector<8x8xf32> to vector<8x8xbf16>
    %cst_27 = arith.constant dense<0.000000e+00> : vector<8x8xf32>
    %86 = tpu.matmul %85, %69, %cst_27 {dimension_numbers = #tpu.dot_dimension_numbers<[1], [0], [0], [1], [0, 0, 1, 1], [], []>} : vector<8x8xbf16>, vector<8x8xbf16>, vector<8x8xf32> -> vector<8x8xf32>
    %87 = vector.extract_strided_slice %35 {offsets = [0, 16], sizes = [8, 8], strides = [1, 1]} : vector<8x96xf32> to vector<8x8xf32>
    %88 = arith.truncf %87 : vector<8x8xf32> to vector<8x8xbf16>
    %89 = vector.extract_strided_slice %35 {offsets = [0, 48], sizes = [8, 8], strides = [1, 1]} : vector<8x96xf32> to vector<8x8xf32>
    %90 = arith.truncf %89 : vector<8x8xf32> to vector<8x8xbf16>
    %91 = vector.extract_strided_slice %35 {offsets = [0, 80], sizes = [8, 8], strides = [1, 1]} : vector<8x96xf32> to vector<8x8xf32>
    %92 = arith.truncf %91 : vector<8x8xf32> to vector<8x8xbf16>
    "tpu.trace_start"() <{level = 10 : i32, message = "qd,kd->qk"}> : () -> ()
    %cst_28 = arith.constant dense<0.000000e+00> : vector<8x8xf32>
    %93 = tpu.matmul %88, %90, %cst_28 {dimension_numbers = #tpu.dot_dimension_numbers<[1], [1], [0], [0], [0, 0, 1, 0], [], []>} : vector<8x8xbf16>, vector<8x8xbf16>, vector<8x8xf32> -> vector<8x8xf32>
    "tpu.trace_stop"() : () -> ()
    %cst_29 = arith.constant 0.353553385 : f32
    %94 = vector.broadcast %cst_29 : f32 to vector<8x8xf32>
    %95 = arith.mulf %93, %94 : vector<8x8xf32>
    %96 = vector.broadcast %40 : vector<1x8xf32> to vector<8x8xf32>
    %97 = arith.addf %95, %96 : vector<8x8xf32>
    %cst_30 = arith.constant dense<0xFF800000> : vector<8xf32>
    %98 = vector.multi_reduction <maximumf>, %97, %cst_30 [1] : vector<8x8xf32> to vector<8xf32>
    %99 = vector.shape_cast %98 : vector<8xf32> to vector<8x1xf32>
    %100 = vector.broadcast %99 : vector<8x1xf32> to vector<8x8xf32>
    %101 = arith.subf %97, %100 : vector<8x8xf32>
    %102 = math.exp %101 : vector<8x8xf32>
    %cst_31 = arith.constant dense<0.000000e+00> : vector<8xf32>
    %103 = vector.multi_reduction <add>, %102, %cst_31 [1] : vector<8x8xf32> to vector<8xf32>
    %104 = vector.shape_cast %103 : vector<8xf32> to vector<8x1xf32>
    %105 = tpu.reciprocal %104 {approx = true} : vector<8x1xf32> -> vector<8x1xf32>
    %106 = vector.broadcast %105 : vector<8x1xf32> to vector<8x8xf32>
    %107 = arith.mulf %102, %106 : vector<8x8xf32>
    %108 = arith.truncf %107 : vector<8x8xf32> to vector<8x8xbf16>
    %cst_32 = arith.constant dense<0.000000e+00> : vector<8x8xf32>
    %109 = tpu.matmul %108, %92, %cst_32 {dimension_numbers = #tpu.dot_dimension_numbers<[1], [0], [0], [1], [0, 0, 1, 1], [], []>} : vector<8x8xbf16>, vector<8x8xbf16>, vector<8x8xf32> -> vector<8x8xf32>
    %110 = vector.extract_strided_slice %35 {offsets = [0, 24], sizes = [8, 8], strides = [1, 1]} : vector<8x96xf32> to vector<8x8xf32>
    %111 = arith.truncf %110 : vector<8x8xf32> to vector<8x8xbf16>
    %112 = vector.extract_strided_slice %35 {offsets = [0, 56], sizes = [8, 8], strides = [1, 1]} : vector<8x96xf32> to vector<8x8xf32>
    %113 = arith.truncf %112 : vector<8x8xf32> to vector<8x8xbf16>
    %114 = vector.extract_strided_slice %35 {offsets = [0, 88], sizes = [8, 8], strides = [1, 1]} : vector<8x96xf32> to vector<8x8xf32>
    %115 = arith.truncf %114 : vector<8x8xf32> to vector<8x8xbf16>
    "tpu.trace_start"() <{level = 10 : i32, message = "qd,kd->qk"}> : () -> ()
    %cst_33 = arith.constant dense<0.000000e+00> : vector<8x8xf32>
    %116 = tpu.matmul %111, %113, %cst_33 {dimension_numbers = #tpu.dot_dimension_numbers<[1], [1], [0], [0], [0, 0, 1, 0], [], []>} : vector<8x8xbf16>, vector<8x8xbf16>, vector<8x8xf32> -> vector<8x8xf32>
    "tpu.trace_stop"() : () -> ()
    %cst_34 = arith.constant 0.353553385 : f32
    %117 = vector.broadcast %cst_34 : f32 to vector<8x8xf32>
    %118 = arith.mulf %116, %117 : vector<8x8xf32>
    %119 = vector.broadcast %40 : vector<1x8xf32> to vector<8x8xf32>
    %120 = arith.addf %118, %119 : vector<8x8xf32>
    %cst_35 = arith.constant dense<0xFF800000> : vector<8xf32>
    %121 = vector.multi_reduction <maximumf>, %120, %cst_35 [1] : vector<8x8xf32> to vector<8xf32>
    %122 = vector.shape_cast %121 : vector<8xf32> to vector<8x1xf32>
    %123 = vector.broadcast %122 : vector<8x1xf32> to vector<8x8xf32>
    %124 = arith.subf %120, %123 : vector<8x8xf32>
    %125 = math.exp %124 : vector<8x8xf32>
    %cst_36 = arith.constant dense<0.000000e+00> : vector<8xf32>
    %126 = vector.multi_reduction <add>, %125, %cst_36 [1] : vector<8x8xf32> to vector<8xf32>
    %127 = vector.shape_cast %126 : vector<8xf32> to vector<8x1xf32>
    %128 = tpu.reciprocal %127 {approx = true} : vector<8x1xf32> -> vector<8x1xf32>
    %129 = vector.broadcast %128 : vector<8x1xf32> to vector<8x8xf32>
    %130 = arith.mulf %125, %129 : vector<8x8xf32>
    %131 = arith.truncf %130 : vector<8x8xf32> to vector<8x8xbf16>
    %cst_37 = arith.constant dense<0.000000e+00> : vector<8x8xf32>
    %132 = tpu.matmul %131, %115, %cst_37 {dimension_numbers = #tpu.dot_dimension_numbers<[1], [0], [0], [1], [0, 0, 1, 1], [], []>} : vector<8x8xbf16>, vector<8x8xbf16>, vector<8x8xf32> -> vector<8x8xf32>
    %133 = tpu.concatenate %63, %86, %109, %132 in 1 : vector<8x8xf32>, vector<8x8xf32>, vector<8x8xf32>, vector<8x8xf32> -> vector<8x32xf32>
    %134 = vector.extract_strided_slice %34 {offsets = [8, 0], sizes = [8, 96], strides = [1, 1]} : vector<16x96xf32> to vector<8x96xf32>
    %135 = vector.extract_strided_slice %1 {offsets = [1, 0], sizes = [1, 8], strides = [1, 1]} : vector<2x8xf32> to vector<1x8xf32>
    %cst_38 = arith.constant 1.000000e+00 : f32
    %136 = vector.broadcast %cst_38 : f32 to vector<1x8xf32>
    %137 = arith.subf %136, %135 : vector<1x8xf32>
    %cst_39 = arith.constant -1.000000e+09 : f32
    %138 = vector.broadcast %cst_39 : f32 to vector<1x8xf32>
    %139 = arith.mulf %137, %138 : vector<1x8xf32>
    %140 = vector.extract_strided_slice %134 {offsets = [0, 0], sizes = [8, 8], strides = [1, 1]} : vector<8x96xf32> to vector<8x8xf32>
    %141 = arith.truncf %140 : vector<8x8xf32> to vector<8x8xbf16>
    %142 = vector.extract_strided_slice %134 {offsets = [0, 32], sizes = [8, 8], strides = [1, 1]} : vector<8x96xf32> to vector<8x8xf32>
    %143 = arith.truncf %142 : vector<8x8xf32> to vector<8x8xbf16>
    %144 = vector.extract_strided_slice %134 {offsets = [0, 64], sizes = [8, 8], strides = [1, 1]} : vector<8x96xf32> to vector<8x8xf32>
    %145 = arith.truncf %144 : vector<8x8xf32> to vector<8x8xbf16>
    "tpu.trace_start"() <{level = 10 : i32, message = "qd,kd->qk"}> : () -> ()
    %cst_40 = arith.constant dense<0.000000e+00> : vector<8x8xf32>
    %146 = tpu.matmul %141, %143, %cst_40 {dimension_numbers = #tpu.dot_dimension_numbers<[1], [1], [0], [0], [0, 0, 1, 0], [], []>} : vector<8x8xbf16>, vector<8x8xbf16>, vector<8x8xf32> -> vector<8x8xf32>
    "tpu.trace_stop"() : () -> ()
    %cst_41 = arith.constant 0.353553385 : f32
    %147 = vector.broadcast %cst_41 : f32 to vector<8x8xf32>
    %148 = arith.mulf %146, %147 : vector<8x8xf32>
    %149 = vector.broadcast %139 : vector<1x8xf32> to vector<8x8xf32>
    %150 = arith.addf %148, %149 : vector<8x8xf32>
    %cst_42 = arith.constant dense<0xFF800000> : vector<8xf32>
    %151 = vector.multi_reduction <maximumf>, %150, %cst_42 [1] : vector<8x8xf32> to vector<8xf32>
    %152 = vector.shape_cast %151 : vector<8xf32> to vector<8x1xf32>
    %153 = vector.broadcast %152 : vector<8x1xf32> to vector<8x8xf32>
    %154 = arith.subf %150, %153 : vector<8x8xf32>
    %155 = math.exp %154 : vector<8x8xf32>
    %cst_43 = arith.constant dense<0.000000e+00> : vector<8xf32>
    %156 = vector.multi_reduction <add>, %155, %cst_43 [1] : vector<8x8xf32> to vector<8xf32>
    %157 = vector.shape_cast %156 : vector<8xf32> to vector<8x1xf32>
    %158 = tpu.reciprocal %157 {approx = true} : vector<8x1xf32> -> vector<8x1xf32>
    %159 = vector.broadcast %158 : vector<8x1xf32> to vector<8x8xf32>
    %160 = arith.mulf %155, %159 : vector<8x8xf32>
    %161 = arith.truncf %160 : vector<8x8xf32> to vector<8x8xbf16>
    %cst_44 = arith.constant dense<0.000000e+00> : vector<8x8xf32>
    %162 = tpu.matmul %161, %145, %cst_44 {dimension_numbers = #tpu.dot_dimension_numbers<[1], [0], [0], [1], [0, 0, 1, 1], [], []>} : vector<8x8xbf16>, vector<8x8xbf16>, vector<8x8xf32> -> vector<8x8xf32>
    %163 = vector.extract_strided_slice %134 {offsets = [0, 8], sizes = [8, 8], strides = [1, 1]} : vector<8x96xf32> to vector<8x8xf32>
    %164 = arith.truncf %163 : vector<8x8xf32> to vector<8x8xbf16>
    %165 = vector.extract_strided_slice %134 {offsets = [0, 40], sizes = [8, 8], strides = [1, 1]} : vector<8x96xf32> to vector<8x8xf32>
    %166 = arith.truncf %165 : vector<8x8xf32> to vector<8x8xbf16>
    %167 = vector.extract_strided_slice %134 {offsets = [0, 72], sizes = [8, 8], strides = [1, 1]} : vector<8x96xf32> to vector<8x8xf32>
    %168 = arith.truncf %167 : vector<8x8xf32> to vector<8x8xbf16>
    "tpu.trace_start"() <{level = 10 : i32, message = "qd,kd->qk"}> : () -> ()
    %cst_45 = arith.constant dense<0.000000e+00> : vector<8x8xf32>
    %169 = tpu.matmul %164, %166, %cst_45 {dimension_numbers = #tpu.dot_dimension_numbers<[1], [1], [0], [0], [0, 0, 1, 0], [], []>} : vector<8x8xbf16>, vector<8x8xbf16>, vector<8x8xf32> -> vector<8x8xf32>
    "tpu.trace_stop"() : () -> ()
    %cst_46 = arith.constant 0.353553385 : f32
    %170 = vector.broadcast %cst_46 : f32 to vector<8x8xf32>
    %171 = arith.mulf %169, %170 : vector<8x8xf32>
    %172 = vector.broadcast %139 : vector<1x8xf32> to vector<8x8xf32>
    %173 = arith.addf %171, %172 : vector<8x8xf32>
    %cst_47 = arith.constant dense<0xFF800000> : vector<8xf32>
    %174 = vector.multi_reduction <maximumf>, %173, %cst_47 [1] : vector<8x8xf32> to vector<8xf32>
    %175 = vector.shape_cast %174 : vector<8xf32> to vector<8x1xf32>
    %176 = vector.broadcast %175 : vector<8x1xf32> to vector<8x8xf32>
    %177 = arith.subf %173, %176 : vector<8x8xf32>
    %178 = math.exp %177 : vector<8x8xf32>
    %cst_48 = arith.constant dense<0.000000e+00> : vector<8xf32>
    %179 = vector.multi_reduction <add>, %178, %cst_48 [1] : vector<8x8xf32> to vector<8xf32>
    %180 = vector.shape_cast %179 : vector<8xf32> to vector<8x1xf32>
    %181 = tpu.reciprocal %180 {approx = true} : vector<8x1xf32> -> vector<8x1xf32>
    %182 = vector.broadcast %181 : vector<8x1xf32> to vector<8x8xf32>
    %183 = arith.mulf %178, %182 : vector<8x8xf32>
    %184 = arith.truncf %183 : vector<8x8xf32> to vector<8x8xbf16>
    %cst_49 = arith.constant dense<0.000000e+00> : vector<8x8xf32>
    %185 = tpu.matmul %184, %168, %cst_49 {dimension_numbers = #tpu.dot_dimension_numbers<[1], [0], [0], [1], [0, 0, 1, 1], [], []>} : vector<8x8xbf16>, vector<8x8xbf16>, vector<8x8xf32> -> vector<8x8xf32>
    %186 = vector.extract_strided_slice %134 {offsets = [0, 16], sizes = [8, 8], strides = [1, 1]} : vector<8x96xf32> to vector<8x8xf32>
    %187 = arith.truncf %186 : vector<8x8xf32> to vector<8x8xbf16>
    %188 = vector.extract_strided_slice %134 {offsets = [0, 48], sizes = [8, 8], strides = [1, 1]} : vector<8x96xf32> to vector<8x8xf32>
    %189 = arith.truncf %188 : vector<8x8xf32> to vector<8x8xbf16>
    %190 = vector.extract_strided_slice %134 {offsets = [0, 80], sizes = [8, 8], strides = [1, 1]} : vector<8x96xf32> to vector<8x8xf32>
    %191 = arith.truncf %190 : vector<8x8xf32> to vector<8x8xbf16>
    "tpu.trace_start"() <{level = 10 : i32, message = "qd,kd->qk"}> : () -> ()
    %cst_50 = arith.constant dense<0.000000e+00> : vector<8x8xf32>
    %192 = tpu.matmul %187, %189, %cst_50 {dimension_numbers = #tpu.dot_dimension_numbers<[1], [1], [0], [0], [0, 0, 1, 0], [], []>} : vector<8x8xbf16>, vector<8x8xbf16>, vector<8x8xf32> -> vector<8x8xf32>
    "tpu.trace_stop"() : () -> ()
    %cst_51 = arith.constant 0.353553385 : f32
    %193 = vector.broadcast %cst_51 : f32 to vector<8x8xf32>
    %194 = arith.mulf %192, %193 : vector<8x8xf32>
    %195 = vector.broadcast %139 : vector<1x8xf32> to vector<8x8xf32>
    %196 = arith.addf %194, %195 : vector<8x8xf32>
    %cst_52 = arith.constant dense<0xFF800000> : vector<8xf32>
    %197 = vector.multi_reduction <maximumf>, %196, %cst_52 [1] : vector<8x8xf32> to vector<8xf32>
    %198 = vector.shape_cast %197 : vector<8xf32> to vector<8x1xf32>
    %199 = vector.broadcast %198 : vector<8x1xf32> to vector<8x8xf32>
    %200 = arith.subf %196, %199 : vector<8x8xf32>
    %201 = math.exp %200 : vector<8x8xf32>
    %cst_53 = arith.constant dense<0.000000e+00> : vector<8xf32>
    %202 = vector.multi_reduction <add>, %201, %cst_53 [1] : vector<8x8xf32> to vector<8xf32>
    %203 = vector.shape_cast %202 : vector<8xf32> to vector<8x1xf32>
    %204 = tpu.reciprocal %203 {approx = true} : vector<8x1xf32> -> vector<8x1xf32>
    %205 = vector.broadcast %204 : vector<8x1xf32> to vector<8x8xf32>
    %206 = arith.mulf %201, %205 : vector<8x8xf32>
    %207 = arith.truncf %206 : vector<8x8xf32> to vector<8x8xbf16>
    %cst_54 = arith.constant dense<0.000000e+00> : vector<8x8xf32>
    %208 = tpu.matmul %207, %191, %cst_54 {dimension_numbers = #tpu.dot_dimension_numbers<[1], [0], [0], [1], [0, 0, 1, 1], [], []>} : vector<8x8xbf16>, vector<8x8xbf16>, vector<8x8xf32> -> vector<8x8xf32>
    %209 = vector.extract_strided_slice %134 {offsets = [0, 24], sizes = [8, 8], strides = [1, 1]} : vector<8x96xf32> to vector<8x8xf32>
    %210 = arith.truncf %209 : vector<8x8xf32> to vector<8x8xbf16>
    %211 = vector.extract_strided_slice %134 {offsets = [0, 56], sizes = [8, 8], strides = [1, 1]} : vector<8x96xf32> to vector<8x8xf32>
    %212 = arith.truncf %211 : vector<8x8xf32> to vector<8x8xbf16>
    %213 = vector.extract_strided_slice %134 {offsets = [0, 88], sizes = [8, 8], strides = [1, 1]} : vector<8x96xf32> to vector<8x8xf32>
    %214 = arith.truncf %213 : vector<8x8xf32> to vector<8x8xbf16>
    "tpu.trace_start"() <{level = 10 : i32, message = "qd,kd->qk"}> : () -> ()
    %cst_55 = arith.constant dense<0.000000e+00> : vector<8x8xf32>
    %215 = tpu.matmul %210, %212, %cst_55 {dimension_numbers = #tpu.dot_dimension_numbers<[1], [1], [0], [0], [0, 0, 1, 0], [], []>} : vector<8x8xbf16>, vector<8x8xbf16>, vector<8x8xf32> -> vector<8x8xf32>
    "tpu.trace_stop"() : () -> ()
    %cst_56 = arith.constant 0.353553385 : f32
    %216 = vector.broadcast %cst_56 : f32 to vector<8x8xf32>
    %217 = arith.mulf %215, %216 : vector<8x8xf32>
    %218 = vector.broadcast %139 : vector<1x8xf32> to vector<8x8xf32>
    %219 = arith.addf %217, %218 : vector<8x8xf32>
    %cst_57 = arith.constant dense<0xFF800000> : vector<8xf32>
    %220 = vector.multi_reduction <maximumf>, %219, %cst_57 [1] : vector<8x8xf32> to vector<8xf32>
    %221 = vector.shape_cast %220 : vector<8xf32> to vector<8x1xf32>
    %222 = vector.broadcast %221 : vector<8x1xf32> to vector<8x8xf32>
    %223 = arith.subf %219, %222 : vector<8x8xf32>
    %224 = math.exp %223 : vector<8x8xf32>
    %cst_58 = arith.constant dense<0.000000e+00> : vector<8xf32>
    %225 = vector.multi_reduction <add>, %224, %cst_58 [1] : vector<8x8xf32> to vector<8xf32>
    %226 = vector.shape_cast %225 : vector<8xf32> to vector<8x1xf32>
    %227 = tpu.reciprocal %226 {approx = true} : vector<8x1xf32> -> vector<8x1xf32>
    %228 = vector.broadcast %227 : vector<8x1xf32> to vector<8x8xf32>
    %229 = arith.mulf %224, %228 : vector<8x8xf32>
    %230 = arith.truncf %229 : vector<8x8xf32> to vector<8x8xbf16>
    %cst_59 = arith.constant dense<0.000000e+00> : vector<8x8xf32>
    %231 = tpu.matmul %230, %214, %cst_59 {dimension_numbers = #tpu.dot_dimension_numbers<[1], [0], [0], [1], [0, 0, 1, 1], [], []>} : vector<8x8xbf16>, vector<8x8xbf16>, vector<8x8xf32> -> vector<8x8xf32>
    %232 = tpu.concatenate %162, %185, %208, %231 in 1 : vector<8x8xf32>, vector<8x8xf32>, vector<8x8xf32>, vector<8x8xf32> -> vector<8x32xf32>
    %233 = tpu.concatenate %133, %232 in 0 : vector<8x32xf32>, vector<8x32xf32> -> vector<16x32xf32>
    %234 = arith.truncf %233 : vector<16x32xf32> to vector<16x32xbf16>
    %c0_60 = arith.constant 0 : index
    %c0_61 = arith.constant 0 : index
    %c0_62 = arith.constant 0 : index
    %235 = vector.load %arg6[%c0_60, %c0_61, %c0_62] : memref<2x32x32xbf16, #tpu.memory_space<vmem>>, vector<1x32x32xbf16>
    %236 = vector.shape_cast %235 : vector<1x32x32xbf16> to vector<32x32xbf16>
    %cst_63 = arith.constant dense<0.000000e+00> : vector<16x32xf32>
    %237 = tpu.matmul %234, %236, %cst_63 {dimension_numbers = #tpu.dot_dimension_numbers<[1], [0], [0], [1], [0, 0, 1, 1], [], []>} : vector<16x32xbf16>, vector<32x32xbf16>, vector<16x32xf32> -> vector<16x32xf32>
    %c0_64 = arith.constant 0 : index
    %c0_65 = arith.constant 0 : index
    %c0_66 = arith.constant 0 : index
    %238 = vector.load %arg7[%c0_64, %c0_65, %c0_66] : memref<2x1x32xf32, #tpu.memory_space<vmem>>, vector<1x1x32xf32>
    %239 = vector.shape_cast %238 : vector<1x1x32xf32> to vector<1x32xf32>
    %240 = vector.broadcast %239 : vector<1x32xf32> to vector<16x32xf32>
    %241 = arith.addf %237, %240 : vector<16x32xf32>
    %242 = arith.addf %26, %241 : vector<16x32xf32>
    %c0_67 = arith.constant 0 : index
    %c0_68 = arith.constant 0 : index
    %c0_69 = arith.constant 0 : index
    %243 = vector.load %arg8[%c0_67, %c0_68, %c0_69] : memref<2x2x32xf32, #tpu.memory_space<vmem>>, vector<1x2x32xf32>
    %244 = vector.shape_cast %243 : vector<1x2x32xf32> to vector<2x32xf32>
    %cst_70 = arith.constant dense<0.000000e+00> : vector<16xf32>
    %245 = vector.multi_reduction <add>, %242, %cst_70 [1] : vector<16x32xf32> to vector<16xf32>
    %246 = vector.shape_cast %245 : vector<16xf32> to vector<16x1xf32>
    %cst_71 = arith.constant 3.200000e+01 : f32
    %247 = vector.broadcast %cst_71 : f32 to vector<16x1xf32>
    %248 = arith.divf %246, %247 : vector<16x1xf32>
    %249 = arith.mulf %242, %242 : vector<16x32xf32>
    %cst_72 = arith.constant dense<0.000000e+00> : vector<16xf32>
    %250 = vector.multi_reduction <add>, %249, %cst_72 [1] : vector<16x32xf32> to vector<16xf32>
    %251 = vector.shape_cast %250 : vector<16xf32> to vector<16x1xf32>
    %cst_73 = arith.constant 3.200000e+01 : f32
    %252 = vector.broadcast %cst_73 : f32 to vector<16x1xf32>
    %253 = arith.divf %251, %252 : vector<16x1xf32>
    %254 = arith.mulf %248, %248 : vector<16x1xf32>
    %255 = arith.subf %253, %254 : vector<16x1xf32>
    %256 = vector.broadcast %248 : vector<16x1xf32> to vector<16x32xf32>
    %257 = arith.subf %242, %256 : vector<16x32xf32>
    %cst_74 = arith.constant 9.99999996E-13 : f32
    %258 = vector.broadcast %cst_74 : f32 to vector<16x1xf32>
    %259 = arith.addf %255, %258 : vector<16x1xf32>
    %260 = math.rsqrt %259 : vector<16x1xf32>
    %261 = vector.broadcast %260 : vector<16x1xf32> to vector<16x32xf32>
    %262 = arith.mulf %257, %261 : vector<16x32xf32>
    %263 = vector.extract_strided_slice %244 {offsets = [0, 0], sizes = [1, 32], strides = [1, 1]} : vector<2x32xf32> to vector<1x32xf32>
    %264 = vector.broadcast %263 : vector<1x32xf32> to vector<16x32xf32>
    %265 = arith.mulf %262, %264 : vector<16x32xf32>
    %266 = vector.extract_strided_slice %244 {offsets = [1, 0], sizes = [1, 32], strides = [1, 1]} : vector<2x32xf32> to vector<1x32xf32>
    %267 = vector.broadcast %266 : vector<1x32xf32> to vector<16x32xf32>
    %268 = arith.addf %265, %267 : vector<16x32xf32>
    %269 = arith.truncf %268 : vector<16x32xf32> to vector<16x32xbf16>
    %c0_75 = arith.constant 0 : index
    %c0_76 = arith.constant 0 : index
    %c0_77 = arith.constant 0 : index
    %270 = vector.load %arg9[%c0_75, %c0_76, %c0_77] : memref<2x32x64xbf16, #tpu.memory_space<vmem>>, vector<1x32x64xbf16>
    %271 = vector.shape_cast %270 : vector<1x32x64xbf16> to vector<32x64xbf16>
    %cst_78 = arith.constant dense<0.000000e+00> : vector<16x64xf32>
    %272 = tpu.matmul %269, %271, %cst_78 {dimension_numbers = #tpu.dot_dimension_numbers<[1], [0], [0], [1], [0, 0, 1, 1], [], []>} : vector<16x32xbf16>, vector<32x64xbf16>, vector<16x64xf32> -> vector<16x64xf32>
    %c0_79 = arith.constant 0 : index
    %c0_80 = arith.constant 0 : index
    %c0_81 = arith.constant 0 : index
    %273 = vector.load %arg10[%c0_79, %c0_80, %c0_81] : memref<2x1x64xf32, #tpu.memory_space<vmem>>, vector<1x1x64xf32>
    %274 = vector.shape_cast %273 : vector<1x1x64xf32> to vector<1x64xf32>
    %275 = vector.broadcast %274 : vector<1x64xf32> to vector<16x64xf32>
    %276 = arith.addf %272, %275 : vector<16x64xf32>
    %277 = arith.mulf %276, %276 : vector<16x64xf32>
    %278 = arith.mulf %276, %277 : vector<16x64xf32>
    %cst_82 = arith.constant 4.471500e-02 : f32
    %279 = vector.broadcast %cst_82 : f32 to vector<16x64xf32>
    %280 = arith.mulf %279, %278 : vector<16x64xf32>
    %281 = arith.addf %276, %280 : vector<16x64xf32>
    %cst_83 = arith.constant 0.797884583 : f32
    %282 = vector.broadcast %cst_83 : f32 to vector<16x64xf32>
    %283 = arith.mulf %282, %281 : vector<16x64xf32>
    %284 = math.tanh %283 : vector<16x64xf32>
    %cst_84 = arith.constant 1.000000e+00 : f32
    %285 = vector.broadcast %cst_84 : f32 to vector<16x64xf32>
    %286 = arith.addf %285, %284 : vector<16x64xf32>
    %cst_85 = arith.constant 5.000000e-01 : f32
    %287 = vector.broadcast %cst_85 : f32 to vector<16x64xf32>
    %288 = arith.mulf %287, %286 : vector<16x64xf32>
    %289 = arith.mulf %276, %288 : vector<16x64xf32>
    %290 = arith.truncf %289 : vector<16x64xf32> to vector<16x64xbf16>
    %c0_86 = arith.constant 0 : index
    %c0_87 = arith.constant 0 : index
    %c0_88 = arith.constant 0 : index
    %291 = vector.load %arg11[%c0_86, %c0_87, %c0_88] : memref<2x64x32xbf16, #tpu.memory_space<vmem>>, vector<1x64x32xbf16>
    %292 = vector.shape_cast %291 : vector<1x64x32xbf16> to vector<64x32xbf16>
    %cst_89 = arith.constant dense<0.000000e+00> : vector<16x32xf32>
    %293 = tpu.matmul %290, %292, %cst_89 {dimension_numbers = #tpu.dot_dimension_numbers<[1], [0], [0], [1], [0, 0, 1, 1], [], []>} : vector<16x64xbf16>, vector<64x32xbf16>, vector<16x32xf32> -> vector<16x32xf32>
    %c0_90 = arith.constant 0 : index
    %c0_91 = arith.constant 0 : index
    %c0_92 = arith.constant 0 : index
    %294 = vector.load %arg12[%c0_90, %c0_91, %c0_92] : memref<2x1x32xf32, #tpu.memory_space<vmem>>, vector<1x1x32xf32>
    %295 = vector.shape_cast %294 : vector<1x1x32xf32> to vector<1x32xf32>
    %296 = vector.broadcast %295 : vector<1x32xf32> to vector<16x32xf32>
    %297 = arith.addf %293, %296 : vector<16x32xf32>
    %298 = arith.addf %268, %297 : vector<16x32xf32>
    %c0_93 = arith.constant 0 : index
    %c0_94 = arith.constant 0 : index
    %c0_95 = arith.constant 0 : index
    %299 = vector.load %arg13[%c0_93, %c0_94, %c0_95] : memref<2x2x32xf32, #tpu.memory_space<vmem>>, vector<1x2x32xf32>
    %300 = vector.shape_cast %299 : vector<1x2x32xf32> to vector<2x32xf32>
    %cst_96 = arith.constant dense<0.000000e+00> : vector<16xf32>
    %301 = vector.multi_reduction <add>, %298, %cst_96 [1] : vector<16x32xf32> to vector<16xf32>
    %302 = vector.shape_cast %301 : vector<16xf32> to vector<16x1xf32>
    %cst_97 = arith.constant 3.200000e+01 : f32
    %303 = vector.broadcast %cst_97 : f32 to vector<16x1xf32>
    %304 = arith.divf %302, %303 : vector<16x1xf32>
    %305 = arith.mulf %298, %298 : vector<16x32xf32>
    %cst_98 = arith.constant dense<0.000000e+00> : vector<16xf32>
    %306 = vector.multi_reduction <add>, %305, %cst_98 [1] : vector<16x32xf32> to vector<16xf32>
    %307 = vector.shape_cast %306 : vector<16xf32> to vector<16x1xf32>
    %cst_99 = arith.constant 3.200000e+01 : f32
    %308 = vector.broadcast %cst_99 : f32 to vector<16x1xf32>
    %309 = arith.divf %307, %308 : vector<16x1xf32>
    %310 = arith.mulf %304, %304 : vector<16x1xf32>
    %311 = arith.subf %309, %310 : vector<16x1xf32>
    %312 = vector.broadcast %304 : vector<16x1xf32> to vector<16x32xf32>
    %313 = arith.subf %298, %312 : vector<16x32xf32>
    %cst_100 = arith.constant 9.99999996E-13 : f32
    %314 = vector.broadcast %cst_100 : f32 to vector<16x1xf32>
    %315 = arith.addf %311, %314 : vector<16x1xf32>
    %316 = math.rsqrt %315 : vector<16x1xf32>
    %317 = vector.broadcast %316 : vector<16x1xf32> to vector<16x32xf32>
    %318 = arith.mulf %313, %317 : vector<16x32xf32>
    %319 = vector.extract_strided_slice %300 {offsets = [0, 0], sizes = [1, 32], strides = [1, 1]} : vector<2x32xf32> to vector<1x32xf32>
    %320 = vector.broadcast %319 : vector<1x32xf32> to vector<16x32xf32>
    %321 = arith.mulf %318, %320 : vector<16x32xf32>
    %322 = vector.extract_strided_slice %300 {offsets = [1, 0], sizes = [1, 32], strides = [1, 1]} : vector<2x32xf32> to vector<1x32xf32>
    %323 = vector.broadcast %322 : vector<1x32xf32> to vector<16x32xf32>
    %324 = arith.addf %321, %323 : vector<16x32xf32>
    %325 = arith.truncf %324 : vector<16x32xf32> to vector<16x32xbf16>
    %c1 = arith.constant 1 : index
    %c0_101 = arith.constant 0 : index
    %c0_102 = arith.constant 0 : index
    %326 = vector.load %arg4[%c1, %c0_101, %c0_102] : memref<2x32x96xbf16, #tpu.memory_space<vmem>>, vector<1x32x96xbf16>
    %327 = vector.shape_cast %326 : vector<1x32x96xbf16> to vector<32x96xbf16>
    %cst_103 = arith.constant dense<0.000000e+00> : vector<16x96xf32>
    %328 = tpu.matmul %325, %327, %cst_103 {dimension_numbers = #tpu.dot_dimension_numbers<[1], [0], [0], [1], [0, 0, 1, 1], [], []>} : vector<16x32xbf16>, vector<32x96xbf16>, vector<16x96xf32> -> vector<16x96xf32>
    %c1_104 = arith.constant 1 : index
    %c0_105 = arith.constant 0 : index
    %c0_106 = arith.constant 0 : index
    %329 = vector.load %arg5[%c1_104, %c0_105, %c0_106] : memref<2x1x96xf32, #tpu.memory_space<vmem>>, vector<1x1x96xf32>
    %330 = vector.shape_cast %329 : vector<1x1x96xf32> to vector<1x96xf32>
    %331 = vector.broadcast %330 : vector<1x96xf32> to vector<16x96xf32>
    %332 = arith.addf %328, %331 : vector<16x96xf32>
    %333 = vector.extract_strided_slice %332 {offsets = [0, 0], sizes = [8, 96], strides = [1, 1]} : vector<16x96xf32> to vector<8x96xf32>
    %334 = vector.extract_strided_slice %1 {offsets = [0, 0], sizes = [1, 8], strides = [1, 1]} : vector<2x8xf32> to vector<1x8xf32>
    %cst_107 = arith.constant 1.000000e+00 : f32
    %335 = vector.broadcast %cst_107 : f32 to vector<1x8xf32>
    %336 = arith.subf %335, %334 : vector<1x8xf32>
    %cst_108 = arith.constant -1.000000e+09 : f32
    %337 = vector.broadcast %cst_108 : f32 to vector<1x8xf32>
    %338 = arith.mulf %336, %337 : vector<1x8xf32>
    %339 = vector.extract_strided_slice %333 {offsets = [0, 0], sizes = [8, 8], strides = [1, 1]} : vector<8x96xf32> to vector<8x8xf32>
    %340 = arith.truncf %339 : vector<8x8xf32> to vector<8x8xbf16>
    %341 = vector.extract_strided_slice %333 {offsets = [0, 32], sizes = [8, 8], strides = [1, 1]} : vector<8x96xf32> to vector<8x8xf32>
    %342 = arith.truncf %341 : vector<8x8xf32> to vector<8x8xbf16>
    %343 = vector.extract_strided_slice %333 {offsets = [0, 64], sizes = [8, 8], strides = [1, 1]} : vector<8x96xf32> to vector<8x8xf32>
    %344 = arith.truncf %343 : vector<8x8xf32> to vector<8x8xbf16>
    "tpu.trace_start"() <{level = 10 : i32, message = "qd,kd->qk"}> : () -> ()
    %cst_109 = arith.constant dense<0.000000e+00> : vector<8x8xf32>
    %345 = tpu.matmul %340, %342, %cst_109 {dimension_numbers = #tpu.dot_dimension_numbers<[1], [1], [0], [0], [0, 0, 1, 0], [], []>} : vector<8x8xbf16>, vector<8x8xbf16>, vector<8x8xf32> -> vector<8x8xf32>
    "tpu.trace_stop"() : () -> ()
    %cst_110 = arith.constant 0.353553385 : f32
    %346 = vector.broadcast %cst_110 : f32 to vector<8x8xf32>
    %347 = arith.mulf %345, %346 : vector<8x8xf32>
    %348 = vector.broadcast %338 : vector<1x8xf32> to vector<8x8xf32>
    %349 = arith.addf %347, %348 : vector<8x8xf32>
    %cst_111 = arith.constant dense<0xFF800000> : vector<8xf32>
    %350 = vector.multi_reduction <maximumf>, %349, %cst_111 [1] : vector<8x8xf32> to vector<8xf32>
    %351 = vector.shape_cast %350 : vector<8xf32> to vector<8x1xf32>
    %352 = vector.broadcast %351 : vector<8x1xf32> to vector<8x8xf32>
    %353 = arith.subf %349, %352 : vector<8x8xf32>
    %354 = math.exp %353 : vector<8x8xf32>
    %cst_112 = arith.constant dense<0.000000e+00> : vector<8xf32>
    %355 = vector.multi_reduction <add>, %354, %cst_112 [1] : vector<8x8xf32> to vector<8xf32>
    %356 = vector.shape_cast %355 : vector<8xf32> to vector<8x1xf32>
    %357 = tpu.reciprocal %356 {approx = true} : vector<8x1xf32> -> vector<8x1xf32>
    %358 = vector.broadcast %357 : vector<8x1xf32> to vector<8x8xf32>
    %359 = arith.mulf %354, %358 : vector<8x8xf32>
    %360 = arith.truncf %359 : vector<8x8xf32> to vector<8x8xbf16>
    %cst_113 = arith.constant dense<0.000000e+00> : vector<8x8xf32>
    %361 = tpu.matmul %360, %344, %cst_113 {dimension_numbers = #tpu.dot_dimension_numbers<[1], [0], [0], [1], [0, 0, 1, 1], [], []>} : vector<8x8xbf16>, vector<8x8xbf16>, vector<8x8xf32> -> vector<8x8xf32>
    %362 = vector.extract_strided_slice %333 {offsets = [0, 8], sizes = [8, 8], strides = [1, 1]} : vector<8x96xf32> to vector<8x8xf32>
    %363 = arith.truncf %362 : vector<8x8xf32> to vector<8x8xbf16>
    %364 = vector.extract_strided_slice %333 {offsets = [0, 40], sizes = [8, 8], strides = [1, 1]} : vector<8x96xf32> to vector<8x8xf32>
    %365 = arith.truncf %364 : vector<8x8xf32> to vector<8x8xbf16>
    %366 = vector.extract_strided_slice %333 {offsets = [0, 72], sizes = [8, 8], strides = [1, 1]} : vector<8x96xf32> to vector<8x8xf32>
    %367 = arith.truncf %366 : vector<8x8xf32> to vector<8x8xbf16>
    "tpu.trace_start"() <{level = 10 : i32, message = "qd,kd->qk"}> : () -> ()
    %cst_114 = arith.constant dense<0.000000e+00> : vector<8x8xf32>
    %368 = tpu.matmul %363, %365, %cst_114 {dimension_numbers = #tpu.dot_dimension_numbers<[1], [1], [0], [0], [0, 0, 1, 0], [], []>} : vector<8x8xbf16>, vector<8x8xbf16>, vector<8x8xf32> -> vector<8x8xf32>
    "tpu.trace_stop"() : () -> ()
    %cst_115 = arith.constant 0.353553385 : f32
    %369 = vector.broadcast %cst_115 : f32 to vector<8x8xf32>
    %370 = arith.mulf %368, %369 : vector<8x8xf32>
    %371 = vector.broadcast %338 : vector<1x8xf32> to vector<8x8xf32>
    %372 = arith.addf %370, %371 : vector<8x8xf32>
    %cst_116 = arith.constant dense<0xFF800000> : vector<8xf32>
    %373 = vector.multi_reduction <maximumf>, %372, %cst_116 [1] : vector<8x8xf32> to vector<8xf32>
    %374 = vector.shape_cast %373 : vector<8xf32> to vector<8x1xf32>
    %375 = vector.broadcast %374 : vector<8x1xf32> to vector<8x8xf32>
    %376 = arith.subf %372, %375 : vector<8x8xf32>
    %377 = math.exp %376 : vector<8x8xf32>
    %cst_117 = arith.constant dense<0.000000e+00> : vector<8xf32>
    %378 = vector.multi_reduction <add>, %377, %cst_117 [1] : vector<8x8xf32> to vector<8xf32>
    %379 = vector.shape_cast %378 : vector<8xf32> to vector<8x1xf32>
    %380 = tpu.reciprocal %379 {approx = true} : vector<8x1xf32> -> vector<8x1xf32>
    %381 = vector.broadcast %380 : vector<8x1xf32> to vector<8x8xf32>
    %382 = arith.mulf %377, %381 : vector<8x8xf32>
    %383 = arith.truncf %382 : vector<8x8xf32> to vector<8x8xbf16>
    %cst_118 = arith.constant dense<0.000000e+00> : vector<8x8xf32>
    %384 = tpu.matmul %383, %367, %cst_118 {dimension_numbers = #tpu.dot_dimension_numbers<[1], [0], [0], [1], [0, 0, 1, 1], [], []>} : vector<8x8xbf16>, vector<8x8xbf16>, vector<8x8xf32> -> vector<8x8xf32>
    %385 = vector.extract_strided_slice %333 {offsets = [0, 16], sizes = [8, 8], strides = [1, 1]} : vector<8x96xf32> to vector<8x8xf32>
    %386 = arith.truncf %385 : vector<8x8xf32> to vector<8x8xbf16>
    %387 = vector.extract_strided_slice %333 {offsets = [0, 48], sizes = [8, 8], strides = [1, 1]} : vector<8x96xf32> to vector<8x8xf32>
    %388 = arith.truncf %387 : vector<8x8xf32> to vector<8x8xbf16>
    %389 = vector.extract_strided_slice %333 {offsets = [0, 80], sizes = [8, 8], strides = [1, 1]} : vector<8x96xf32> to vector<8x8xf32>
    %390 = arith.truncf %389 : vector<8x8xf32> to vector<8x8xbf16>
    "tpu.trace_start"() <{level = 10 : i32, message = "qd,kd->qk"}> : () -> ()
    %cst_119 = arith.constant dense<0.000000e+00> : vector<8x8xf32>
    %391 = tpu.matmul %386, %388, %cst_119 {dimension_numbers = #tpu.dot_dimension_numbers<[1], [1], [0], [0], [0, 0, 1, 0], [], []>} : vector<8x8xbf16>, vector<8x8xbf16>, vector<8x8xf32> -> vector<8x8xf32>
    "tpu.trace_stop"() : () -> ()
    %cst_120 = arith.constant 0.353553385 : f32
    %392 = vector.broadcast %cst_120 : f32 to vector<8x8xf32>
    %393 = arith.mulf %391, %392 : vector<8x8xf32>
    %394 = vector.broadcast %338 : vector<1x8xf32> to vector<8x8xf32>
    %395 = arith.addf %393, %394 : vector<8x8xf32>
    %cst_121 = arith.constant dense<0xFF800000> : vector<8xf32>
    %396 = vector.multi_reduction <maximumf>, %395, %cst_121 [1] : vector<8x8xf32> to vector<8xf32>
    %397 = vector.shape_cast %396 : vector<8xf32> to vector<8x1xf32>
    %398 = vector.broadcast %397 : vector<8x1xf32> to vector<8x8xf32>
    %399 = arith.subf %395, %398 : vector<8x8xf32>
    %400 = math.exp %399 : vector<8x8xf32>
    %cst_122 = arith.constant dense<0.000000e+00> : vector<8xf32>
    %401 = vector.multi_reduction <add>, %400, %cst_122 [1] : vector<8x8xf32> to vector<8xf32>
    %402 = vector.shape_cast %401 : vector<8xf32> to vector<8x1xf32>
    %403 = tpu.reciprocal %402 {approx = true} : vector<8x1xf32> -> vector<8x1xf32>
    %404 = vector.broadcast %403 : vector<8x1xf32> to vector<8x8xf32>
    %405 = arith.mulf %400, %404 : vector<8x8xf32>
    %406 = arith.truncf %405 : vector<8x8xf32> to vector<8x8xbf16>
    %cst_123 = arith.constant dense<0.000000e+00> : vector<8x8xf32>
    %407 = tpu.matmul %406, %390, %cst_123 {dimension_numbers = #tpu.dot_dimension_numbers<[1], [0], [0], [1], [0, 0, 1, 1], [], []>} : vector<8x8xbf16>, vector<8x8xbf16>, vector<8x8xf32> -> vector<8x8xf32>
    %408 = vector.extract_strided_slice %333 {offsets = [0, 24], sizes = [8, 8], strides = [1, 1]} : vector<8x96xf32> to vector<8x8xf32>
    %409 = arith.truncf %408 : vector<8x8xf32> to vector<8x8xbf16>
    %410 = vector.extract_strided_slice %333 {offsets = [0, 56], sizes = [8, 8], strides = [1, 1]} : vector<8x96xf32> to vector<8x8xf32>
    %411 = arith.truncf %410 : vector<8x8xf32> to vector<8x8xbf16>
    %412 = vector.extract_strided_slice %333 {offsets = [0, 88], sizes = [8, 8], strides = [1, 1]} : vector<8x96xf32> to vector<8x8xf32>
    %413 = arith.truncf %412 : vector<8x8xf32> to vector<8x8xbf16>
    "tpu.trace_start"() <{level = 10 : i32, message = "qd,kd->qk"}> : () -> ()
    %cst_124 = arith.constant dense<0.000000e+00> : vector<8x8xf32>
    %414 = tpu.matmul %409, %411, %cst_124 {dimension_numbers = #tpu.dot_dimension_numbers<[1], [1], [0], [0], [0, 0, 1, 0], [], []>} : vector<8x8xbf16>, vector<8x8xbf16>, vector<8x8xf32> -> vector<8x8xf32>
    "tpu.trace_stop"() : () -> ()
    %cst_125 = arith.constant 0.353553385 : f32
    %415 = vector.broadcast %cst_125 : f32 to vector<8x8xf32>
    %416 = arith.mulf %414, %415 : vector<8x8xf32>
    %417 = vector.broadcast %338 : vector<1x8xf32> to vector<8x8xf32>
    %418 = arith.addf %416, %417 : vector<8x8xf32>
    %cst_126 = arith.constant dense<0xFF800000> : vector<8xf32>
    %419 = vector.multi_reduction <maximumf>, %418, %cst_126 [1] : vector<8x8xf32> to vector<8xf32>
    %420 = vector.shape_cast %419 : vector<8xf32> to vector<8x1xf32>
    %421 = vector.broadcast %420 : vector<8x1xf32> to vector<8x8xf32>
    %422 = arith.subf %418, %421 : vector<8x8xf32>
    %423 = math.exp %422 : vector<8x8xf32>
    %cst_127 = arith.constant dense<0.000000e+00> : vector<8xf32>
    %424 = vector.multi_reduction <add>, %423, %cst_127 [1] : vector<8x8xf32> to vector<8xf32>
    %425 = vector.shape_cast %424 : vector<8xf32> to vector<8x1xf32>
    %426 = tpu.reciprocal %425 {approx = true} : vector<8x1xf32> -> vector<8x1xf32>
    %427 = vector.broadcast %426 : vector<8x1xf32> to vector<8x8xf32>
    %428 = arith.mulf %423, %427 : vector<8x8xf32>
    %429 = arith.truncf %428 : vector<8x8xf32> to vector<8x8xbf16>
    %cst_128 = arith.constant dense<0.000000e+00> : vector<8x8xf32>
    %430 = tpu.matmul %429, %413, %cst_128 {dimension_numbers = #tpu.dot_dimension_numbers<[1], [0], [0], [1], [0, 0, 1, 1], [], []>} : vector<8x8xbf16>, vector<8x8xbf16>, vector<8x8xf32> -> vector<8x8xf32>
    %431 = tpu.concatenate %361, %384, %407, %430 in 1 : vector<8x8xf32>, vector<8x8xf32>, vector<8x8xf32>, vector<8x8xf32> -> vector<8x32xf32>
    %432 = vector.extract_strided_slice %332 {offsets = [8, 0], sizes = [8, 96], strides = [1, 1]} : vector<16x96xf32> to vector<8x96xf32>
    %433 = vector.extract_strided_slice %1 {offsets = [1, 0], sizes = [1, 8], strides = [1, 1]} : vector<2x8xf32> to vector<1x8xf32>
    %cst_129 = arith.constant 1.000000e+00 : f32
    %434 = vector.broadcast %cst_129 : f32 to vector<1x8xf32>
    %435 = arith.subf %434, %433 : vector<1x8xf32>
    %cst_130 = arith.constant -1.000000e+09 : f32
    %436 = vector.broadcast %cst_130 : f32 to vector<1x8xf32>
    %437 = arith.mulf %435, %436 : vector<1x8xf32>
    %438 = vector.extract_strided_slice %432 {offsets = [0, 0], sizes = [8, 8], strides = [1, 1]} : vector<8x96xf32> to vector<8x8xf32>
    %439 = arith.truncf %438 : vector<8x8xf32> to vector<8x8xbf16>
    %440 = vector.extract_strided_slice %432 {offsets = [0, 32], sizes = [8, 8], strides = [1, 1]} : vector<8x96xf32> to vector<8x8xf32>
    %441 = arith.truncf %440 : vector<8x8xf32> to vector<8x8xbf16>
    %442 = vector.extract_strided_slice %432 {offsets = [0, 64], sizes = [8, 8], strides = [1, 1]} : vector<8x96xf32> to vector<8x8xf32>
    %443 = arith.truncf %442 : vector<8x8xf32> to vector<8x8xbf16>
    "tpu.trace_start"() <{level = 10 : i32, message = "qd,kd->qk"}> : () -> ()
    %cst_131 = arith.constant dense<0.000000e+00> : vector<8x8xf32>
    %444 = tpu.matmul %439, %441, %cst_131 {dimension_numbers = #tpu.dot_dimension_numbers<[1], [1], [0], [0], [0, 0, 1, 0], [], []>} : vector<8x8xbf16>, vector<8x8xbf16>, vector<8x8xf32> -> vector<8x8xf32>
    "tpu.trace_stop"() : () -> ()
    %cst_132 = arith.constant 0.353553385 : f32
    %445 = vector.broadcast %cst_132 : f32 to vector<8x8xf32>
    %446 = arith.mulf %444, %445 : vector<8x8xf32>
    %447 = vector.broadcast %437 : vector<1x8xf32> to vector<8x8xf32>
    %448 = arith.addf %446, %447 : vector<8x8xf32>
    %cst_133 = arith.constant dense<0xFF800000> : vector<8xf32>
    %449 = vector.multi_reduction <maximumf>, %448, %cst_133 [1] : vector<8x8xf32> to vector<8xf32>
    %450 = vector.shape_cast %449 : vector<8xf32> to vector<8x1xf32>
    %451 = vector.broadcast %450 : vector<8x1xf32> to vector<8x8xf32>
    %452 = arith.subf %448, %451 : vector<8x8xf32>
    %453 = math.exp %452 : vector<8x8xf32>
    %cst_134 = arith.constant dense<0.000000e+00> : vector<8xf32>
    %454 = vector.multi_reduction <add>, %453, %cst_134 [1] : vector<8x8xf32> to vector<8xf32>
    %455 = vector.shape_cast %454 : vector<8xf32> to vector<8x1xf32>
    %456 = tpu.reciprocal %455 {approx = true} : vector<8x1xf32> -> vector<8x1xf32>
    %457 = vector.broadcast %456 : vector<8x1xf32> to vector<8x8xf32>
    %458 = arith.mulf %453, %457 : vector<8x8xf32>
    %459 = arith.truncf %458 : vector<8x8xf32> to vector<8x8xbf16>
    %cst_135 = arith.constant dense<0.000000e+00> : vector<8x8xf32>
    %460 = tpu.matmul %459, %443, %cst_135 {dimension_numbers = #tpu.dot_dimension_numbers<[1], [0], [0], [1], [0, 0, 1, 1], [], []>} : vector<8x8xbf16>, vector<8x8xbf16>, vector<8x8xf32> -> vector<8x8xf32>
    %461 = vector.extract_strided_slice %432 {offsets = [0, 8], sizes = [8, 8], strides = [1, 1]} : vector<8x96xf32> to vector<8x8xf32>
    %462 = arith.truncf %461 : vector<8x8xf32> to vector<8x8xbf16>
    %463 = vector.extract_strided_slice %432 {offsets = [0, 40], sizes = [8, 8], strides = [1, 1]} : vector<8x96xf32> to vector<8x8xf32>
    %464 = arith.truncf %463 : vector<8x8xf32> to vector<8x8xbf16>
    %465 = vector.extract_strided_slice %432 {offsets = [0, 72], sizes = [8, 8], strides = [1, 1]} : vector<8x96xf32> to vector<8x8xf32>
    %466 = arith.truncf %465 : vector<8x8xf32> to vector<8x8xbf16>
    "tpu.trace_start"() <{level = 10 : i32, message = "qd,kd->qk"}> : () -> ()
    %cst_136 = arith.constant dense<0.000000e+00> : vector<8x8xf32>
    %467 = tpu.matmul %462, %464, %cst_136 {dimension_numbers = #tpu.dot_dimension_numbers<[1], [1], [0], [0], [0, 0, 1, 0], [], []>} : vector<8x8xbf16>, vector<8x8xbf16>, vector<8x8xf32> -> vector<8x8xf32>
    "tpu.trace_stop"() : () -> ()
    %cst_137 = arith.constant 0.353553385 : f32
    %468 = vector.broadcast %cst_137 : f32 to vector<8x8xf32>
    %469 = arith.mulf %467, %468 : vector<8x8xf32>
    %470 = vector.broadcast %437 : vector<1x8xf32> to vector<8x8xf32>
    %471 = arith.addf %469, %470 : vector<8x8xf32>
    %cst_138 = arith.constant dense<0xFF800000> : vector<8xf32>
    %472 = vector.multi_reduction <maximumf>, %471, %cst_138 [1] : vector<8x8xf32> to vector<8xf32>
    %473 = vector.shape_cast %472 : vector<8xf32> to vector<8x1xf32>
    %474 = vector.broadcast %473 : vector<8x1xf32> to vector<8x8xf32>
    %475 = arith.subf %471, %474 : vector<8x8xf32>
    %476 = math.exp %475 : vector<8x8xf32>
    %cst_139 = arith.constant dense<0.000000e+00> : vector<8xf32>
    %477 = vector.multi_reduction <add>, %476, %cst_139 [1] : vector<8x8xf32> to vector<8xf32>
    %478 = vector.shape_cast %477 : vector<8xf32> to vector<8x1xf32>
    %479 = tpu.reciprocal %478 {approx = true} : vector<8x1xf32> -> vector<8x1xf32>
    %480 = vector.broadcast %479 : vector<8x1xf32> to vector<8x8xf32>
    %481 = arith.mulf %476, %480 : vector<8x8xf32>
    %482 = arith.truncf %481 : vector<8x8xf32> to vector<8x8xbf16>
    %cst_140 = arith.constant dense<0.000000e+00> : vector<8x8xf32>
    %483 = tpu.matmul %482, %466, %cst_140 {dimension_numbers = #tpu.dot_dimension_numbers<[1], [0], [0], [1], [0, 0, 1, 1], [], []>} : vector<8x8xbf16>, vector<8x8xbf16>, vector<8x8xf32> -> vector<8x8xf32>
    %484 = vector.extract_strided_slice %432 {offsets = [0, 16], sizes = [8, 8], strides = [1, 1]} : vector<8x96xf32> to vector<8x8xf32>
    %485 = arith.truncf %484 : vector<8x8xf32> to vector<8x8xbf16>
    %486 = vector.extract_strided_slice %432 {offsets = [0, 48], sizes = [8, 8], strides = [1, 1]} : vector<8x96xf32> to vector<8x8xf32>
    %487 = arith.truncf %486 : vector<8x8xf32> to vector<8x8xbf16>
    %488 = vector.extract_strided_slice %432 {offsets = [0, 80], sizes = [8, 8], strides = [1, 1]} : vector<8x96xf32> to vector<8x8xf32>
    %489 = arith.truncf %488 : vector<8x8xf32> to vector<8x8xbf16>
    "tpu.trace_start"() <{level = 10 : i32, message = "qd,kd->qk"}> : () -> ()
    %cst_141 = arith.constant dense<0.000000e+00> : vector<8x8xf32>
    %490 = tpu.matmul %485, %487, %cst_141 {dimension_numbers = #tpu.dot_dimension_numbers<[1], [1], [0], [0], [0, 0, 1, 0], [], []>} : vector<8x8xbf16>, vector<8x8xbf16>, vector<8x8xf32> -> vector<8x8xf32>
    "tpu.trace_stop"() : () -> ()
    %cst_142 = arith.constant 0.353553385 : f32
    %491 = vector.broadcast %cst_142 : f32 to vector<8x8xf32>
    %492 = arith.mulf %490, %491 : vector<8x8xf32>
    %493 = vector.broadcast %437 : vector<1x8xf32> to vector<8x8xf32>
    %494 = arith.addf %492, %493 : vector<8x8xf32>
    %cst_143 = arith.constant dense<0xFF800000> : vector<8xf32>
    %495 = vector.multi_reduction <maximumf>, %494, %cst_143 [1] : vector<8x8xf32> to vector<8xf32>
    %496 = vector.shape_cast %495 : vector<8xf32> to vector<8x1xf32>
    %497 = vector.broadcast %496 : vector<8x1xf32> to vector<8x8xf32>
    %498 = arith.subf %494, %497 : vector<8x8xf32>
    %499 = math.exp %498 : vector<8x8xf32>
    %cst_144 = arith.constant dense<0.000000e+00> : vector<8xf32>
    %500 = vector.multi_reduction <add>, %499, %cst_144 [1] : vector<8x8xf32> to vector<8xf32>
    %501 = vector.shape_cast %500 : vector<8xf32> to vector<8x1xf32>
    %502 = tpu.reciprocal %501 {approx = true} : vector<8x1xf32> -> vector<8x1xf32>
    %503 = vector.broadcast %502 : vector<8x1xf32> to vector<8x8xf32>
    %504 = arith.mulf %499, %503 : vector<8x8xf32>
    %505 = arith.truncf %504 : vector<8x8xf32> to vector<8x8xbf16>
    %cst_145 = arith.constant dense<0.000000e+00> : vector<8x8xf32>
    %506 = tpu.matmul %505, %489, %cst_145 {dimension_numbers = #tpu.dot_dimension_numbers<[1], [0], [0], [1], [0, 0, 1, 1], [], []>} : vector<8x8xbf16>, vector<8x8xbf16>, vector<8x8xf32> -> vector<8x8xf32>
    %507 = vector.extract_strided_slice %432 {offsets = [0, 24], sizes = [8, 8], strides = [1, 1]} : vector<8x96xf32> to vector<8x8xf32>
    %508 = arith.truncf %507 : vector<8x8xf32> to vector<8x8xbf16>
    %509 = vector.extract_strided_slice %432 {offsets = [0, 56], sizes = [8, 8], strides = [1, 1]} : vector<8x96xf32> to vector<8x8xf32>
    %510 = arith.truncf %509 : vector<8x8xf32> to vector<8x8xbf16>
    %511 = vector.extract_strided_slice %432 {offsets = [0, 88], sizes = [8, 8], strides = [1, 1]} : vector<8x96xf32> to vector<8x8xf32>
    %512 = arith.truncf %511 : vector<8x8xf32> to vector<8x8xbf16>
    "tpu.trace_start"() <{level = 10 : i32, message = "qd,kd->qk"}> : () -> ()
    %cst_146 = arith.constant dense<0.000000e+00> : vector<8x8xf32>
    %513 = tpu.matmul %508, %510, %cst_146 {dimension_numbers = #tpu.dot_dimension_numbers<[1], [1], [0], [0], [0, 0, 1, 0], [], []>} : vector<8x8xbf16>, vector<8x8xbf16>, vector<8x8xf32> -> vector<8x8xf32>
    "tpu.trace_stop"() : () -> ()
    %cst_147 = arith.constant 0.353553385 : f32
    %514 = vector.broadcast %cst_147 : f32 to vector<8x8xf32>
    %515 = arith.mulf %513, %514 : vector<8x8xf32>
    %516 = vector.broadcast %437 : vector<1x8xf32> to vector<8x8xf32>
    %517 = arith.addf %515, %516 : vector<8x8xf32>
    %cst_148 = arith.constant dense<0xFF800000> : vector<8xf32>
    %518 = vector.multi_reduction <maximumf>, %517, %cst_148 [1] : vector<8x8xf32> to vector<8xf32>
    %519 = vector.shape_cast %518 : vector<8xf32> to vector<8x1xf32>
    %520 = vector.broadcast %519 : vector<8x1xf32> to vector<8x8xf32>
    %521 = arith.subf %517, %520 : vector<8x8xf32>
    %522 = math.exp %521 : vector<8x8xf32>
    %cst_149 = arith.constant dense<0.000000e+00> : vector<8xf32>
    %523 = vector.multi_reduction <add>, %522, %cst_149 [1] : vector<8x8xf32> to vector<8xf32>
    %524 = vector.shape_cast %523 : vector<8xf32> to vector<8x1xf32>
    %525 = tpu.reciprocal %524 {approx = true} : vector<8x1xf32> -> vector<8x1xf32>
    %526 = vector.broadcast %525 : vector<8x1xf32> to vector<8x8xf32>
    %527 = arith.mulf %522, %526 : vector<8x8xf32>
    %528 = arith.truncf %527 : vector<8x8xf32> to vector<8x8xbf16>
    %cst_150 = arith.constant dense<0.000000e+00> : vector<8x8xf32>
    %529 = tpu.matmul %528, %512, %cst_150 {dimension_numbers = #tpu.dot_dimension_numbers<[1], [0], [0], [1], [0, 0, 1, 1], [], []>} : vector<8x8xbf16>, vector<8x8xbf16>, vector<8x8xf32> -> vector<8x8xf32>
    %530 = tpu.concatenate %460, %483, %506, %529 in 1 : vector<8x8xf32>, vector<8x8xf32>, vector<8x8xf32>, vector<8x8xf32> -> vector<8x32xf32>
    %531 = tpu.concatenate %431, %530 in 0 : vector<8x32xf32>, vector<8x32xf32> -> vector<16x32xf32>
    %532 = arith.truncf %531 : vector<16x32xf32> to vector<16x32xbf16>
    %c1_151 = arith.constant 1 : index
    %c0_152 = arith.constant 0 : index
    %c0_153 = arith.constant 0 : index
    %533 = vector.load %arg6[%c1_151, %c0_152, %c0_153] : memref<2x32x32xbf16, #tpu.memory_space<vmem>>, vector<1x32x32xbf16>
    %534 = vector.shape_cast %533 : vector<1x32x32xbf16> to vector<32x32xbf16>
    %cst_154 = arith.constant dense<0.000000e+00> : vector<16x32xf32>
    %535 = tpu.matmul %532, %534, %cst_154 {dimension_numbers = #tpu.dot_dimension_numbers<[1], [0], [0], [1], [0, 0, 1, 1], [], []>} : vector<16x32xbf16>, vector<32x32xbf16>, vector<16x32xf32> -> vector<16x32xf32>
    %c1_155 = arith.constant 1 : index
    %c0_156 = arith.constant 0 : index
    %c0_157 = arith.constant 0 : index
    %536 = vector.load %arg7[%c1_155, %c0_156, %c0_157] : memref<2x1x32xf32, #tpu.memory_space<vmem>>, vector<1x1x32xf32>
    %537 = vector.shape_cast %536 : vector<1x1x32xf32> to vector<1x32xf32>
    %538 = vector.broadcast %537 : vector<1x32xf32> to vector<16x32xf32>
    %539 = arith.addf %535, %538 : vector<16x32xf32>
    %540 = arith.addf %324, %539 : vector<16x32xf32>
    %c1_158 = arith.constant 1 : index
    %c0_159 = arith.constant 0 : index
    %c0_160 = arith.constant 0 : index
    %541 = vector.load %arg8[%c1_158, %c0_159, %c0_160] : memref<2x2x32xf32, #tpu.memory_space<vmem>>, vector<1x2x32xf32>
    %542 = vector.shape_cast %541 : vector<1x2x32xf32> to vector<2x32xf32>
    %cst_161 = arith.constant dense<0.000000e+00> : vector<16xf32>
    %543 = vector.multi_reduction <add>, %540, %cst_161 [1] : vector<16x32xf32> to vector<16xf32>
    %544 = vector.shape_cast %543 : vector<16xf32> to vector<16x1xf32>
    %cst_162 = arith.constant 3.200000e+01 : f32
    %545 = vector.broadcast %cst_162 : f32 to vector<16x1xf32>
    %546 = arith.divf %544, %545 : vector<16x1xf32>
    %547 = arith.mulf %540, %540 : vector<16x32xf32>
    %cst_163 = arith.constant dense<0.000000e+00> : vector<16xf32>
    %548 = vector.multi_reduction <add>, %547, %cst_163 [1] : vector<16x32xf32> to vector<16xf32>
    %549 = vector.shape_cast %548 : vector<16xf32> to vector<16x1xf32>
    %cst_164 = arith.constant 3.200000e+01 : f32
    %550 = vector.broadcast %cst_164 : f32 to vector<16x1xf32>
    %551 = arith.divf %549, %550 : vector<16x1xf32>
    %552 = arith.mulf %546, %546 : vector<16x1xf32>
    %553 = arith.subf %551, %552 : vector<16x1xf32>
    %554 = vector.broadcast %546 : vector<16x1xf32> to vector<16x32xf32>
    %555 = arith.subf %540, %554 : vector<16x32xf32>
    %cst_165 = arith.constant 9.99999996E-13 : f32
    %556 = vector.broadcast %cst_165 : f32 to vector<16x1xf32>
    %557 = arith.addf %553, %556 : vector<16x1xf32>
    %558 = math.rsqrt %557 : vector<16x1xf32>
    %559 = vector.broadcast %558 : vector<16x1xf32> to vector<16x32xf32>
    %560 = arith.mulf %555, %559 : vector<16x32xf32>
    %561 = vector.extract_strided_slice %542 {offsets = [0, 0], sizes = [1, 32], strides = [1, 1]} : vector<2x32xf32> to vector<1x32xf32>
    %562 = vector.broadcast %561 : vector<1x32xf32> to vector<16x32xf32>
    %563 = arith.mulf %560, %562 : vector<16x32xf32>
    %564 = vector.extract_strided_slice %542 {offsets = [1, 0], sizes = [1, 32], strides = [1, 1]} : vector<2x32xf32> to vector<1x32xf32>
    %565 = vector.broadcast %564 : vector<1x32xf32> to vector<16x32xf32>
    %566 = arith.addf %563, %565 : vector<16x32xf32>
    %567 = arith.truncf %566 : vector<16x32xf32> to vector<16x32xbf16>
    %c1_166 = arith.constant 1 : index
    %c0_167 = arith.constant 0 : index
    %c0_168 = arith.constant 0 : index
    %568 = vector.load %arg9[%c1_166, %c0_167, %c0_168] : memref<2x32x64xbf16, #tpu.memory_space<vmem>>, vector<1x32x64xbf16>
    %569 = vector.shape_cast %568 : vector<1x32x64xbf16> to vector<32x64xbf16>
    %cst_169 = arith.constant dense<0.000000e+00> : vector<16x64xf32>
    %570 = tpu.matmul %567, %569, %cst_169 {dimension_numbers = #tpu.dot_dimension_numbers<[1], [0], [0], [1], [0, 0, 1, 1], [], []>} : vector<16x32xbf16>, vector<32x64xbf16>, vector<16x64xf32> -> vector<16x64xf32>
    %c1_170 = arith.constant 1 : index
    %c0_171 = arith.constant 0 : index
    %c0_172 = arith.constant 0 : index
    %571 = vector.load %arg10[%c1_170, %c0_171, %c0_172] : memref<2x1x64xf32, #tpu.memory_space<vmem>>, vector<1x1x64xf32>
    %572 = vector.shape_cast %571 : vector<1x1x64xf32> to vector<1x64xf32>
    %573 = vector.broadcast %572 : vector<1x64xf32> to vector<16x64xf32>
    %574 = arith.addf %570, %573 : vector<16x64xf32>
    %575 = arith.mulf %574, %574 : vector<16x64xf32>
    %576 = arith.mulf %574, %575 : vector<16x64xf32>
    %cst_173 = arith.constant 4.471500e-02 : f32
    %577 = vector.broadcast %cst_173 : f32 to vector<16x64xf32>
    %578 = arith.mulf %577, %576 : vector<16x64xf32>
    %579 = arith.addf %574, %578 : vector<16x64xf32>
    %cst_174 = arith.constant 0.797884583 : f32
    %580 = vector.broadcast %cst_174 : f32 to vector<16x64xf32>
    %581 = arith.mulf %580, %579 : vector<16x64xf32>
    %582 = math.tanh %581 : vector<16x64xf32>
    %cst_175 = arith.constant 1.000000e+00 : f32
    %583 = vector.broadcast %cst_175 : f32 to vector<16x64xf32>
    %584 = arith.addf %583, %582 : vector<16x64xf32>
    %cst_176 = arith.constant 5.000000e-01 : f32
    %585 = vector.broadcast %cst_176 : f32 to vector<16x64xf32>
    %586 = arith.mulf %585, %584 : vector<16x64xf32>
    %587 = arith.mulf %574, %586 : vector<16x64xf32>
    %588 = arith.truncf %587 : vector<16x64xf32> to vector<16x64xbf16>
    %c1_177 = arith.constant 1 : index
    %c0_178 = arith.constant 0 : index
    %c0_179 = arith.constant 0 : index
    %589 = vector.load %arg11[%c1_177, %c0_178, %c0_179] : memref<2x64x32xbf16, #tpu.memory_space<vmem>>, vector<1x64x32xbf16>
    %590 = vector.shape_cast %589 : vector<1x64x32xbf16> to vector<64x32xbf16>
    %cst_180 = arith.constant dense<0.000000e+00> : vector<16x32xf32>
    %591 = tpu.matmul %588, %590, %cst_180 {dimension_numbers = #tpu.dot_dimension_numbers<[1], [0], [0], [1], [0, 0, 1, 1], [], []>} : vector<16x64xbf16>, vector<64x32xbf16>, vector<16x32xf32> -> vector<16x32xf32>
    %c1_181 = arith.constant 1 : index
    %c0_182 = arith.constant 0 : index
    %c0_183 = arith.constant 0 : index
    %592 = vector.load %arg12[%c1_181, %c0_182, %c0_183] : memref<2x1x32xf32, #tpu.memory_space<vmem>>, vector<1x1x32xf32>
    %593 = vector.shape_cast %592 : vector<1x1x32xf32> to vector<1x32xf32>
    %594 = vector.broadcast %593 : vector<1x32xf32> to vector<16x32xf32>
    %595 = arith.addf %591, %594 : vector<16x32xf32>
    %596 = arith.addf %566, %595 : vector<16x32xf32>
    %c1_184 = arith.constant 1 : index
    %c0_185 = arith.constant 0 : index
    %c0_186 = arith.constant 0 : index
    %597 = vector.load %arg13[%c1_184, %c0_185, %c0_186] : memref<2x2x32xf32, #tpu.memory_space<vmem>>, vector<1x2x32xf32>
    %598 = vector.shape_cast %597 : vector<1x2x32xf32> to vector<2x32xf32>
    %cst_187 = arith.constant dense<0.000000e+00> : vector<16xf32>
    %599 = vector.multi_reduction <add>, %596, %cst_187 [1] : vector<16x32xf32> to vector<16xf32>
    %600 = vector.shape_cast %599 : vector<16xf32> to vector<16x1xf32>
    %cst_188 = arith.constant 3.200000e+01 : f32
    %601 = vector.broadcast %cst_188 : f32 to vector<16x1xf32>
    %602 = arith.divf %600, %601 : vector<16x1xf32>
    %603 = arith.mulf %596, %596 : vector<16x32xf32>
    %cst_189 = arith.constant dense<0.000000e+00> : vector<16xf32>
    %604 = vector.multi_reduction <add>, %603, %cst_189 [1] : vector<16x32xf32> to vector<16xf32>
    %605 = vector.shape_cast %604 : vector<16xf32> to vector<16x1xf32>
    %cst_190 = arith.constant 3.200000e+01 : f32
    %606 = vector.broadcast %cst_190 : f32 to vector<16x1xf32>
    %607 = arith.divf %605, %606 : vector<16x1xf32>
    %608 = arith.mulf %602, %602 : vector<16x1xf32>
    %609 = arith.subf %607, %608 : vector<16x1xf32>
    %610 = vector.broadcast %602 : vector<16x1xf32> to vector<16x32xf32>
    %611 = arith.subf %596, %610 : vector<16x32xf32>
    %cst_191 = arith.constant 9.99999996E-13 : f32
    %612 = vector.broadcast %cst_191 : f32 to vector<16x1xf32>
    %613 = arith.addf %609, %612 : vector<16x1xf32>
    %614 = math.rsqrt %613 : vector<16x1xf32>
    %615 = vector.broadcast %614 : vector<16x1xf32> to vector<16x32xf32>
    %616 = arith.mulf %611, %615 : vector<16x32xf32>
    %617 = vector.extract_strided_slice %598 {offsets = [0, 0], sizes = [1, 32], strides = [1, 1]} : vector<2x32xf32> to vector<1x32xf32>
    %618 = vector.broadcast %617 : vector<1x32xf32> to vector<16x32xf32>
    %619 = arith.mulf %616, %618 : vector<16x32xf32>
    %620 = vector.extract_strided_slice %598 {offsets = [1, 0], sizes = [1, 32], strides = [1, 1]} : vector<2x32xf32> to vector<1x32xf32>
    %621 = vector.broadcast %620 : vector<1x32xf32> to vector<16x32xf32>
    %622 = arith.addf %619, %621 : vector<16x32xf32>
    %623 = vector.extract_strided_slice %1 {offsets = [0, 0], sizes = [1, 8], strides = [1, 1]} : vector<2x8xf32> to vector<1x8xf32>
    %624 = vector.extract_strided_slice %622 {offsets = [0, 0], sizes = [8, 32], strides = [1, 1]} : vector<16x32xf32> to vector<8x32xf32>
    %cst_192 = arith.constant dense<0.000000e+00> : vector<1x32xf32>
    %625 = tpu.matmul %623, %624, %cst_192 {dimension_numbers = #tpu.dot_dimension_numbers<[1], [0], [0], [1], [0, 0, 1, 1], [], []>} : vector<1x8xf32>, vector<8x32xf32>, vector<1x32xf32> -> vector<1x32xf32>
    %626 = vector.extract_strided_slice %1 {offsets = [1, 0], sizes = [1, 8], strides = [1, 1]} : vector<2x8xf32> to vector<1x8xf32>
    %627 = vector.extract_strided_slice %622 {offsets = [8, 0], sizes = [8, 32], strides = [1, 1]} : vector<16x32xf32> to vector<8x32xf32>
    %cst_193 = arith.constant dense<0.000000e+00> : vector<1x32xf32>
    %628 = tpu.matmul %626, %627, %cst_193 {dimension_numbers = #tpu.dot_dimension_numbers<[1], [0], [0], [1], [0, 0, 1, 1], [], []>} : vector<1x8xf32>, vector<8x32xf32>, vector<1x32xf32> -> vector<1x32xf32>
    %629 = tpu.concatenate %625, %628 in 0 : vector<1x32xf32>, vector<1x32xf32> -> vector<2x32xf32>
    %cst_194 = arith.constant dense<0.000000e+00> : vector<2xf32>
    %630 = vector.multi_reduction <add>, %1, %cst_194 [1] : vector<2x8xf32> to vector<2xf32>
    %631 = vector.shape_cast %630 : vector<2xf32> to vector<2x1xf32>
    %cst_195 = arith.constant 9.99999971E-10 : f32
    %632 = vector.broadcast %cst_195 : f32 to vector<2x1xf32>
    %633 = arith.maximumf %631, %632 : vector<2x1xf32>
    %634 = vector.broadcast %633 : vector<2x1xf32> to vector<2x32xf32>
    %635 = arith.divf %629, %634 : vector<2x32xf32>
    %c0_196 = arith.constant 0 : index
    %c0_197 = arith.constant 0 : index
    %636 = vector.load %arg14[%c0_196, %c0_197] : memref<2x32xf32, #tpu.memory_space<vmem>>, vector<2x32xf32>
    tpu.vector_store %arg14[%c0_196, %c0_197], %635 {strides = array<i32>} : memref<2x32xf32, #tpu.memory_space<vmem>>, vector<2x32xf32>,
    return
  }
  func.func @transform_0(%arg0: i32) -> (i32, i32) {
    %c0_i32 = arith.constant 0 : i32
    %c0_i32_0 = arith.constant 0 : i32
    %c0_i32_1 = arith.constant 0 : i32
    return %c0_i32, %c0_i32_0 : i32, i32
  }
  func.func @transform_1(%arg0: i32) -> (i32, i32) {
    %c0_i32 = arith.constant 0 : i32
    %c0_i32_0 = arith.constant 0 : i32
    %c0_i32_1 = arith.constant 0 : i32
    return %c0_i32, %c0_i32_0 : i32, i32
  }
  func.func @transform_2(%arg0: i32) -> (i32, i32) {
    %c0_i32 = arith.constant 0 : i32
    %c0_i32_0 = arith.constant 0 : i32
    %c0_i32_1 = arith.constant 0 : i32
    return %c0_i32, %c0_i32_0 : i32, i32
  }
  func.func @transform_3(%arg0: i32) -> (i32, i32, i32) {
    %c0_i32 = arith.constant 0 : i32
    %c0_i32_0 = arith.constant 0 : i32
    %c0_i32_1 = arith.constant 0 : i32
    %c0_i32_2 = arith.constant 0 : i32
    return %c0_i32, %c0_i32_0, %c0_i32_1 : i32, i32, i32
  }
  func.func @transform_4(%arg0: i32) -> (i32, i32, i32) {
    %c0_i32 = arith.constant 0 : i32
    %c0_i32_0 = arith.constant 0 : i32
    %c0_i32_1 = arith.constant 0 : i32
    %c0_i32_2 = arith.constant 0 : i32
    return %c0_i32, %c0_i32_0, %c0_i32_1 : i32, i32, i32
  }
  func.func @transform_5(%arg0: i32) -> (i32, i32, i32) {
    %c0_i32 = arith.constant 0 : i32
    %c0_i32_0 = arith.constant 0 : i32
    %c0_i32_1 = arith.constant 0 : i32
    %c0_i32_2 = arith.constant 0 : i32
    return %c0_i32, %c0_i32_0, %c0_i32_1 : i32, i32, i32
  }
  func.func @transform_6(%arg0: i32) -> (i32, i32, i32) {
    %c0_i32 = arith.constant 0 : i32
    %c0_i32_0 = arith.constant 0 : i32
    %c0_i32_1 = arith.constant 0 : i32
    %c0_i32_2 = arith.constant 0 : i32
    return %c0_i32, %c0_i32_0, %c0_i32_1 : i32, i32, i32
  }
  func.func @transform_7(%arg0: i32) -> (i32, i32, i32) {
    %c0_i32 = arith.constant 0 : i32
    %c0_i32_0 = arith.constant 0 : i32
    %c0_i32_1 = arith.constant 0 : i32
    %c0_i32_2 = arith.constant 0 : i32
    return %c0_i32, %c0_i32_0, %c0_i32_1 : i32, i32, i32
  }
  func.func @transform_8(%arg0: i32) -> (i32, i32, i32) {
    %c0_i32 = arith.constant 0 : i32
    %c0_i32_0 = arith.constant 0 : i32
    %c0_i32_1 = arith.constant 0 : i32
    %c0_i32_2 = arith.constant 0 : i32
    return %c0_i32, %c0_i32_0, %c0_i32_1 : i32, i32, i32
  }
  func.func @transform_9(%arg0: i32) -> (i32, i32, i32) {
    %c0_i32 = arith.constant 0 : i32
    %c0_i32_0 = arith.constant 0 : i32
    %c0_i32_1 = arith.constant 0 : i32
    %c0_i32_2 = arith.constant 0 : i32
    return %c0_i32, %c0_i32_0, %c0_i32_1 : i32, i32, i32
  }
  func.func @transform_10(%arg0: i32) -> (i32, i32, i32) {
    %c0_i32 = arith.constant 0 : i32
    %c0_i32_0 = arith.constant 0 : i32
    %c0_i32_1 = arith.constant 0 : i32
    %c0_i32_2 = arith.constant 0 : i32
    return %c0_i32, %c0_i32_0, %c0_i32_1 : i32, i32, i32
  }
  func.func @transform_11(%arg0: i32) -> (i32, i32, i32) {
    %c0_i32 = arith.constant 0 : i32
    %c0_i32_0 = arith.constant 0 : i32
    %c0_i32_1 = arith.constant 0 : i32
    %c0_i32_2 = arith.constant 0 : i32
    return %c0_i32, %c0_i32_0, %c0_i32_1 : i32, i32, i32
  }
  func.func @transform_12(%arg0: i32) -> (i32, i32, i32) {
    %c0_i32 = arith.constant 0 : i32
    %c0_i32_0 = arith.constant 0 : i32
    %c0_i32_1 = arith.constant 0 : i32
    %c0_i32_2 = arith.constant 0 : i32
    return %c0_i32, %c0_i32_0, %c0_i32_1 : i32, i32, i32
  }
  func.func @transform_13(%arg0: i32) -> (i32, i32) {
    %c0_i32 = arith.constant 0 : i32
    %c0_i32_0 = arith.constant 0 : i32
    %c0_i32_1 = arith.constant 0 : i32
    return %c0_i32, %c0_i32_0 : i32, i32
  }
}

</mosaic_0001>

<llo_original>
// kernel: encode.1
$region0: #{encode.1}
  #allocation0 [shape = 'u32[]', space=smem, size = 0x4, offset = 0x4, fixed_abs, tag = 'smem constant byte address 0x4 - core index']
  #allocation1 [shape = 'u32[144,128]{1,0:T(1,128)}', space=vmem, size = 0x12000, scoped, tag = 'internal scratch']
  %s0 = inlined_call_operand.vmem [shape: f32[16,32], index: 0, kind: input, shape index: {}]
  %s1 = inlined_call_operand.vmem [shape: f32[2,8], index: 1, kind: input, shape index: {}]
  %s2 = inlined_call_operand.vmem [shape: f32[2,32], index: 2, kind: input, shape index: {}]
  %s3 = inlined_call_operand.vmem [shape: bf16[2,32,96], index: 3, kind: input, shape index: {}]
  %s4 = inlined_call_operand.vmem [shape: f32[2,1,96], index: 4, kind: input, shape index: {}]
  %s5 = inlined_call_operand.vmem [shape: bf16[2,32,32], index: 5, kind: input, shape index: {}]
  %s6 = inlined_call_operand.vmem [shape: f32[2,1,32], index: 6, kind: input, shape index: {}]
  %s7 = inlined_call_operand.vmem [shape: f32[2,2,32], index: 7, kind: input, shape index: {}]
  %s8 = inlined_call_operand.vmem [shape: bf16[2,32,64], index: 8, kind: input, shape index: {}]
  %s9 = inlined_call_operand.vmem [shape: f32[2,1,64], index: 9, kind: input, shape index: {}]
  %s10 = inlined_call_operand.vmem [shape: bf16[2,64,32], index: 10, kind: input, shape index: {}]
  %s11 = inlined_call_operand.vmem [shape: f32[2,1,32], index: 11, kind: input, shape index: {}]
  %s12 = inlined_call_operand.vmem [shape: f32[2,2,32], index: 12, kind: input, shape index: {}]
  %s13 = inlined_call_operand.hbm [shape: f32[2,32], index: 13, kind: output, shape index: {}]
  %s14 = sld [smem:[#allocation0]]
  $region62: #{encode.1} parent=0
    _
  %s16 = ssub.s32 1, %s14
  %s17 = scalar_select 0, %s16, %s14
  $region1: #{encode.1} parent=0
    #allocation2 [shape = 'u8[1024]{0}', space=vmem, size = 0x400, scoped, tag = 'output window, operand 0, single buffered']
    #allocation3 [shape = 's32[1]{0}', space=sflag, size = 0x4, scoped, tag = 'scoped memory for encode.1']
    %18 = vsyncpa [#allocation3], 0
    // Predicated region
    $region2: #{encode.1} parent=1 // pred_check
      _
    $region3: #{encode.1} parent=1 // pred_check_branch
      %20 = sbr.rel (0) target = $region5
    $region4: #{encode.1} parent=1 // pred_region
      _
    $region5: #{encode.1} parent=1 // pred_fallthru
      _
    // Predicated region
    $region6: #{encode.1} parent=1 // pred_check
      _
    $region7: #{encode.1} parent=1 // pred_check_branch
      %22 = sbr.rel (0) target = $region9
    $region8: #{encode.1} parent=1 // pred_region
      _
    $region9: #{encode.1} parent=1 // pred_fallthru
      _
    // Predicated region
    $region10: #{encode.1} parent=1 // pred_check
      _
    $region11: #{encode.1} parent=1 // pred_check_branch
      %24 = sbr.rel (0) target = $region13
    $region12: #{encode.1} parent=1 // pred_region
      _
    $region13: #{encode.1} parent=1 // pred_fallthru
      _
    // Predicated region
    $region14: #{encode.1} parent=1 // pred_check
      _
    $region15: #{encode.1} parent=1 // pred_check_branch
      %26 = sbr.rel (0) target = $region17
    $region16: #{encode.1} parent=1 // pred_region
      _
    $region17: #{encode.1} parent=1 // pred_fallthru
      _
    // Predicated region
    $region18: #{encode.1} parent=1 // pred_check
      _
    $region19: #{encode.1} parent=1 // pred_check_branch
      %28 = sbr.rel (0) target = $region21
    $region20: #{encode.1} parent=1 // pred_region
      _
    $region21: #{encode.1} parent=1 // pred_fallthru
      _
    // Predicated region
    $region22: #{encode.1} parent=1 // pred_check
      _
    $region23: #{encode.1} parent=1 // pred_check_branch
      %30 = sbr.rel (0) target = $region25
    $region24: #{encode.1} parent=1 // pred_region
      _
    $region25: #{encode.1} parent=1 // pred_fallthru
      _
    // Predicated region
    $region26: #{encode.1} parent=1 // pred_check
      _
    $region27: #{encode.1} parent=1 // pred_check_branch
      %32 = sbr.rel (0) target = $region29
    $region28: #{encode.1} parent=1 // pred_region
      _
    $region29: #{encode.1} parent=1 // pred_fallthru
      _
    // Predicated region
    $region30: #{encode.1} parent=1 // pred_check
      _
    $region31: #{encode.1} parent=1 // pred_check_branch
      %34 = sbr.rel (0) target = $region33
    $region32: #{encode.1} parent=1 // pred_region
      _
    $region33: #{encode.1} parent=1 // pred_fallthru
      _
    // Predicated region
    $region34: #{encode.1} parent=1 // pred_check
      _
    $region35: #{encode.1} parent=1 // pred_check_branch
      %36 = sbr.rel (0) target = $region37
    $region36: #{encode.1} parent=1 // pred_region
      _
    $region37: #{encode.1} parent=1 // pred_fallthru
      _
    // Predicated region
    $region38: #{encode.1} parent=1 // pred_check
      _
    $region39: #{encode.1} parent=1 // pred_check_branch
      %38 = sbr.rel (0) target = $region41
    $region40: #{encode.1} parent=1 // pred_region
      _
    $region41: #{encode.1} parent=1 // pred_fallthru
      _
    // Predicated region
    $region42: #{encode.1} parent=1 // pred_check
      _
    $region43: #{encode.1} parent=1 // pred_check_branch
      %40 = sbr.rel (0) target = $region45
    $region44: #{encode.1} parent=1 // pred_region
      _
    $region45: #{encode.1} parent=1 // pred_fallthru
      _
    // Predicated region
    $region46: #{encode.1} parent=1 // pred_check
      _
    $region47: #{encode.1} parent=1 // pred_check_branch
      %42 = sbr.rel (0) target = $region49
    $region48: #{encode.1} parent=1 // pred_region
      _
    $region49: #{encode.1} parent=1 // pred_fallthru
      _
    // Predicated region
    $region50: #{encode.1} parent=1 // pred_check
      _
    $region51: #{encode.1} parent=1 // pred_check_branch
      %44 = sbr.rel (0) target = $region53
    $region52: #{encode.1} parent=1 // pred_region
      _
    $region53: #{encode.1} parent=1 // pred_fallthru
      _
    %v46 = vld [vmem:[%s0] sm:$0xff]
    %v47 = vld [vmem:[%s0 + $0x8] sm:$0xff]
    %v48 = vld [vmem:[%s1] sm:$0x3]
    %v49 = vld [vmem:[%s2] sm:$0x3]
    %vm50 = vcmask 261120
    %v51 = vsel %vm50, %v46, 0.0
    %52 = vadd.xlane.f32.xlu0 %v51
    %v53 = vpop.xlane.xlu0 %52
    %v54 = vsel %vm50, %v47, 0.0
    %55 = vadd.xlane.f32.xlu0 %v54
    %v56 = vpop.xlane.xlu0 %55
    %v57 = vrcp.pop 32.0
    %v58 = vmul.f32 %v53, %v57
    %v59 = vmul.f32 %v56, %v57
    %v60 = vmul.f32 %v46, %v46
    %v61 = vmul.f32 %v47, %v47
    %v62 = vsel %vm50, %v60, 0.0
    %63 = vadd.xlane.f32.xlu0 %v62
    %v64 = vpop.xlane.xlu0 %63
    %v65 = vsel %vm50, %v61, 0.0
    %66 = vadd.xlane.f32.xlu0 %v65
    %v67 = vpop.xlane.xlu0 %66
    %v68 = vmul.f32 %v64, %v57
    %v69 = vmul.f32 %v67, %v57
    %v70 = vmul.f32 %v58, %v58
    %v71 = vmul.f32 %v59, %v59
    %v72 = vsub.f32 %v68, %v70
    %v73 = vsub.f32 %v69, %v71
    %v74 = vsub.f32 %v46, %v58
    %v75 = vsub.f32 %v47, %v59
    %v76 = vadd.f32 %v72, 1e-12
    %v77 = vadd.f32 %v73, 1e-12
    %v78 = vrsqrt.pop %v76
    %v79 = vrsqrt.pop %v77
    %v80 = vmul.f32 %v74, %v78
    %v81 = vmul.f32 %v75, %v79
    %v82 = vlaneseq
    %v83 = vshrl.u32 %v82, 7
    %v84 = vsub.s32 0, %v83
    %v85 = vrot.slane %v49, %v84
    %v86 = vmul.f32 %v80, %v85
    %v87 = vmul.f32 %v81, %v85
    %v88 = vlaneseq
    %v89 = vshrl.u32 %v88, 7
    %v90 = vsub.s32 1, %v89
    %v91 = vrot.slane %v49, %v90
    %v92 = vadd.f32 %v86, %v91
    %v93 = vadd.f32 %v87, %v91
    %v94 = vpack.c.bf16 %v93, %v92
    %v95 = vld [vmem:[%s3] sm:$0xf]
    %v96 = vld [vmem:[%s3 + $0x4] sm:$0xf]
    %v97 = vld [vmem:[%s3 + $0x8] sm:$0xf]
    %v98 = vld [vmem:[%s3 + $0xc] sm:$0xf]
    %v99 = vld [vmem:[%s4] sm:$0x1]
    %v101 = vlaneseq
    %v102 = vshrl.u32 %v101, 7
    %v103 = vsub.s32 0, %v102
    %v104 = vrot.slane %v99, %v103
    %v110 = vunpack.c.l.b16 %v95
    %v111 = vunpack.c.l.b16 %v96
    %v112 = vunpack.c.l.b16 %v97
    %v113 = vunpack.c.l.b16 %v98
    %v114 = vpack.c.b16 %v111, %v110
    %v115 = vpack.c.b16 %v113, %v112
    %v119 = vsel %vm50, %v94, 0
    %121 = vmatprep.subr.bf16.mxu0 0
    %122 = vmatpush1.bf16.msra.mxu0 %v114
    %123 = vmatprep.subr.bf16.mxu0 0
    %124 = vmatpush1.bf16.msra.mxu0 %v115
    %125 = vmatprep.subr.bf16.mxu0 0
    %126 = vmatpush1.bf16.msra.mxu0 0
    %127 = vmatprep.subr.bf16.mxu0 0
    %128 = vmatpush1.bf16.msra.mxu0 0
    %129 = vmatprep.subr.bf16.mxu0 0
    %130 = vmatpush1.bf16.msra.mxu0 0
    %131 = vmatprep.subr.bf16.mxu0 0
    %132 = vmatpush1.bf16.msra.mxu0 0
    %133 = vmatprep.subr.bf16.mxu0 0
    %134 = vmatpush1.bf16.msra.mxu0 0
    %135 = vmatprep.subr.bf16.mxu0 0
    %136 = vmatpush1.bf16.msra.mxu0 0
    %137 = vmatprep.subr.bf16.mxu0 0
    %138 = vmatpush1.bf16.msra.mxu0 0
    %139 = vmatprep.subr.bf16.mxu0 0
    %140 = vmatpush1.bf16.msra.mxu0 0
    %141 = vmatprep.subr.bf16.mxu0 0
    %142 = vmatpush1.bf16.msra.mxu0 0
    %143 = vmatprep.subr.bf16.mxu0 0
    %144 = vmatpush1.bf16.msra.mxu0 0
    %145 = vmatprep.subr.bf16.mxu0 0
    %146 = vmatpush1.bf16.msra.mxu0 0
    %147 = vmatprep.subr.bf16.mxu0 0
    %148 = vmatpush1.bf16.msra.mxu0 0
    %149 = vmatprep.subr.bf16.mxu0 0
    %150 = vmatpush1.bf16.msra.mxu0 0
    %151 = vmatprep.subr.bf16.mxu0 0
    %152 = vmatpush1.bf16.msra.mxu0 0
    %153 = vmatprep.mubr.bf16.mxu0 0
    %154 = vmatmul.mubr.bf16.gmra.mrb[0].mxu0 %v119
    %v155 = vpop.f32.mrb[0].mxu0
    %v156 = vadd.f32 %v104, %v155
    %v157 = vpop.f32.mrb[0].mxu0
    %v158 = vpop.f32.mrb[0].mxu0
    %v159 = vadd.f32 %v104, %v158
    %v160 = vpop.f32.mrb[0].mxu0
    %161 = vdwg.mxu0
    %v162 = vsub.f32 1.0, %v48
    %v163 = vmul.f32 %v162, -1e+09
    %v164 = vpack.c.bf16 %v156, %v156
    %166 = vrot.lane.b32.xlu0 %v164, 96
    %v167 = vpop.permute.xlu0 %166
    %vm168 = vcmask 64512
    %v170 = vsel %vm168, %v164, 0
    %v173 = vsel %vm168, %v167, 0
    %175 = vmatprep.subr.bf16.mxu0 0
    %176 = vmatpush1.bf16.xpose.msra.mxu0 %v173
    %177 = vmatprep.subr.bf16.mxu0 0
    %178 = vmatpush1.bf16.xpose.msra.mxu0 0
    %179 = vmatprep.subr.bf16.mxu0 0
    %180 = vmatpush1.bf16.xpose.msra.mxu0 0
    %181 = vmatprep.subr.bf16.mxu0 0
    %182 = vmatpush1.bf16.xpose.msra.mxu0 0
    %183 = vmatprep.subr.bf16.mxu0 0
    %184 = vmatpush1.bf16.xpose.msra.mxu0 0
    %185 = vmatprep.subr.bf16.mxu0 0
    %186 = vmatpush1.bf16.xpose.msra.mxu0 0
    %187 = vmatprep.subr.bf16.mxu0 0
    %188 = vmatpush1.bf16.xpose.msra.mxu0 0
    %189 = vmatprep.subr.bf16.mxu0 0
    %190 = vmatpush1.bf16.xpose.msra.mxu0 0
    %191 = vmatprep.subr.bf16.mxu0 0
    %192 = vmatpush1.bf16.xpose.msra.mxu0 0
    %193 = vmatprep.subr.bf16.mxu0 0
    %194 = vmatpush1.bf16.xpose.msra.mxu0 0
    %195 = vmatprep.subr.bf16.mxu0 0
    %196 = vmatpush1.bf16.xpose.msra.mxu0 0
    %197 = vmatprep.subr.bf16.mxu0 0
    %198 = vmatpush1.bf16.xpose.msra.mxu0 0
    %199 = vmatprep.subr.bf16.mxu0 0
    %200 = vmatpush1.bf16.xpose.msra.mxu0 0
    %201 = vmatprep.subr.bf16.mxu0 0
    %202 = vmatpush1.bf16.xpose.msra.mxu0 0
    %203 = vmatprep.subr.bf16.mxu0 0
    %204 = vmatpush1.bf16.xpose.msra.mxu0 0
    %205 = vmatprep.subr.bf16.mxu0 0
    %206 = vmatpush1.bf16.xpose.msra.mxu0 0
    %207 = vmatprep.mubr.bf16.mxu0 0
    %208 = vmatmul.mubr.bf16.gmra.mrb[0].mxu0 %v170
    %v209 = vpop.f32.mrb[0].mxu0
    %v210 = vadd.f32 0.0, %v209
    %v211 = vpop.f32.mrb[0].mxu0
    %v212 = vpop.f32.mrb[0].mxu0
    %v213 = vpop.f32.mrb[0].mxu0
    %214 = vdwg.mxu0
    %v215 = vmul.f32 %v210, 0.35355338
    %v216 = vlaneseq
    %v217 = vshrl.u32 %v216, 7
    %v218 = vsub.s32 0, %v217
    %v219 = vrot.slane %v163, %v218
    %v220 = vadd.f32 %v215, %v219
    %v221 = vsel %vm168, %v220, -inf
    %222 = vmax.xlane.f32.xlu0 %v221
    %v223 = vpop.xlane.xlu0 %222
    %v224 = vsub.f32 %v220, %v223
    %v225 = vmul.f32 %v224, 1.442695
    %v226 = vpow.pop %v225
    %v227 = vsel %vm168, %v226, 0.0
    %228 = vadd.xlane.f32.xlu0 %v227
    %v229 = vpop.xlane.xlu0 %228
    %v230 = vrcp.pop %v229
    %v231 = vmul.f32 %v226, %v230
    %v232 = vpack.c.bf16 %v231, %v231
    %233 = vrot.lane.b32.xlu0 %v164, 64
    %v234 = vpop.permute.xlu0 %233
    %v236 = vsel %vm168, %v232, 0
    %vm238 = vcmask 1043456
    %v240 = vsel %vm238, %v234, 0
    %242 = vmatprep.subr.bf16.mxu0 0
    %243 = vmatpush1.bf16.msra.mxu0 %v240
    %244 = vmatprep.subr.bf16.mxu0 0
    %245 = vmatpush1.bf16.msra.mxu0 0
    %246 = vmatprep.subr.bf16.mxu0 0
    %247 = vmatpush1.bf16.msra.mxu0 0
    %248 = vmatprep.subr.bf16.mxu0 0
    %249 = vmatpush1.bf16.msra.mxu0 0
    %250 = vmatprep.subr.bf16.mxu0 0
    %251 = vmatpush1.bf16.msra.mxu0 0
    %252 = vmatprep.subr.bf16.mxu0 0
    %253 = vmatpush1.bf16.msra.mxu0 0
    %254 = vmatprep.subr.bf16.mxu0 0
    %255 = vmatpush1.bf16.msra.mxu0 0
    %256 = vmatprep.subr.bf16.mxu0 0
    %257 = vmatpush1.bf16.msra.mxu0 0
    %258 = vmatprep.subr.bf16.mxu0 0
    %259 = vmatpush1.bf16.msra.mxu0 0
    %260 = vmatprep.subr.bf16.mxu0 0
    %261 = vmatpush1.bf16.msra.mxu0 0
    %262 = vmatprep.subr.bf16.mxu0 0
    %263 = vmatpush1.bf16.msra.mxu0 0
    %264 = vmatprep.subr.bf16.mxu0 0
    %265 = vmatpush1.bf16.msra.mxu0 0
    %266 = vmatprep.subr.bf16.mxu0 0
    %267 = vmatpush1.bf16.msra.mxu0 0
    %268 = vmatprep.subr.bf16.mxu0 0
    %269 = vmatpush1.bf16.msra.mxu0 0
    %270 = vmatprep.subr.bf16.mxu0 0
    %271 = vmatpush1.bf16.msra.mxu0 0
    %272 = vmatprep.subr.bf16.mxu0 0
    %273 = vmatpush1.bf16.msra.mxu0 0
    %274 = vmatprep.mubr.bf16.mxu0 0
    %275 = vmatmul.mubr.bf16.gmra.mrb[0].mxu0 %v236
    %v276 = vpop.f32.mrb[0].mxu0
    %v277 = vadd.f32 0.0, %v276
    %v278 = vpop.f32.mrb[0].mxu0
    %v279 = vpop.f32.mrb[0].mxu0
    %v280 = vpop.f32.mrb[0].mxu0
    %281 = vdwg.mxu0
    %282 = vrot.lane.b32.xlu0 %v164, 120
    %v283 = vpop.permute.xlu0 %282
    %284 = vrot.lane.b32.xlu0 %v164, 88
    %v285 = vpop.permute.xlu0 %284
    %v287 = vsel %vm168, %v283, 0
    %v290 = vsel %vm168, %v285, 0
    %292 = vmatprep.subr.bf16.mxu0 0
    %293 = vmatpush1.bf16.xpose.msra.mxu0 %v290
    %294 = vmatprep.subr.bf16.mxu0 0
    %295 = vmatpush1.bf16.xpose.msra.mxu0 0
    %296 = vmatprep.subr.bf16.mxu0 0
    %297 = vmatpush1.bf16.xpose.msra.mxu0 0
    %298 = vmatprep.subr.bf16.mxu0 0
    %299 = vmatpush1.bf16.xpose.msra.mxu0 0
    %300 = vmatprep.subr.bf16.mxu0 0
    %301 = vmatpush1.bf16.xpose.msra.mxu0 0
    %302 = vmatprep.subr.bf16.mxu0 0
    %303 = vmatpush1.bf16.xpose.msra.mxu0 0
    %304 = vmatprep.subr.bf16.mxu0 0
    %305 = vmatpush1.bf16.xpose.msra.mxu0 0
    %306 = vmatprep.subr.bf16.mxu0 0
    %307 = vmatpush1.bf16.xpose.msra.mxu0 0
    %308 = vmatprep.subr.bf16.mxu0 0
    %309 = vmatpush1.bf16.xpose.msra.mxu0 0
    %310 = vmatprep.subr.bf16.mxu0 0
    %311 = vmatpush1.bf16.xpose.msra.mxu0 0
    %312 = vmatprep.subr.bf16.mxu0 0
    %313 = vmatpush1.bf16.xpose.msra.mxu0 0
    %314 = vmatprep.subr.bf16.mxu0 0
    %315 = vmatpush1.bf16.xpose.msra.mxu0 0
    %316 = vmatprep.subr.bf16.mxu0 0
    %317 = vmatpush1.bf16.xpose.msra.mxu0 0
    %318 = vmatprep.subr.bf16.mxu0 0
    %319 = vmatpush1.bf16.xpose.msra.mxu0 0
    %320 = vmatprep.subr.bf16.mxu0 0
    %321 = vmatpush1.bf16.xpose.msra.mxu0 0
    %322 = vmatprep.subr.bf16.mxu0 0
    %323 = vmatpush1.bf16.xpose.msra.mxu0 0
    %324 = vmatprep.mubr.bf16.mxu0 0
    %325 = vmatmul.mubr.bf16.gmra.mrb[0].mxu0 %v287
    %v326 = vpop.f32.mrb[0].mxu0
    %v327 = vadd.f32 0.0, %v326
    %v328 = vpop.f32.mrb[0].mxu0
    %v329 = vpop.f32.mrb[0].mxu0
    %v330 = vpop.f32.mrb[0].mxu0
    %331 = vdwg.mxu0
    %v332 = vmul.f32 %v327, 0.35355338
    %v333 = vadd.f32 %v332, %v219
    %v334 = vsel %vm168, %v333, -inf
    %335 = vmax.xlane.f32.xlu0 %v334
    %v336 = vpop.xlane.xlu0 %335
    %v337 = vsub.f32 %v333, %v336
    %v338 = vmul.f32 %v337, 1.442695
    %v339 = vpow.pop %v338
    %v340 = vsel %vm168, %v339, 0.0
    %341 = vadd.xlane.f32.xlu0 %v340
    %v342 = vpop.xlane.xlu0 %341
    %v343 = vrcp.pop %v342
    %v344 = vmul.f32 %v339, %v343
    %v345 = vpack.c.bf16 %v344, %v344
    %346 = vrot.lane.b32.xlu0 %v164, 56
    %v347 = vpop.permute.xlu0 %346
    %v349 = vsel %vm168, %v345, 0
    %v352 = vsel %vm238, %v347, 0
    %354 = vmatprep.subr.bf16.mxu0 0
    %355 = vmatpush1.bf16.msra.mxu0 %v352
    %356 = vmatprep.subr.bf16.mxu0 0
    %357 = vmatpush1.bf16.msra.mxu0 0
    %358 = vmatprep.subr.bf16.mxu0 0
    %359 = vmatpush1.bf16.msra.mxu0 0
    %360 = vmatprep.subr.bf16.mxu0 0
    %361 = vmatpush1.bf16.msra.mxu0 0
    %362 = vmatprep.subr.bf16.mxu0 0
    %363 = vmatpush1.bf16.msra.mxu0 0
    %364 = vmatprep.subr.bf16.mxu0 0
    %365 = vmatpush1.bf16.msra.mxu0 0
    %366 = vmatprep.subr.bf16.mxu0 0
    %367 = vmatpush1.bf16.msra.mxu0 0
    %368 = vmatprep.subr.bf16.mxu0 0
    %369 = vmatpush1.bf16.msra.mxu0 0
    %370 = vmatprep.subr.bf16.mxu0 0
    %371 = vmatpush1.bf16.msra.mxu0 0
    %372 = vmatprep.subr.bf16.mxu0 0
    %373 = vmatpush1.bf16.msra.mxu0 0
    %374 = vmatprep.subr.bf16.mxu0 0
    %375 = vmatpush1.bf16.msra.mxu0 0
    %376 = vmatprep.subr.bf16.mxu0 0
    %377 = vmatpush1.bf16.msra.mxu0 0
    %378 = vmatprep.subr.bf16.mxu0 0
    %379 = vmatpush1.bf16.msra.mxu0 0
    %380 = vmatprep.subr.bf16.mxu0 0
    %381 = vmatpush1.bf16.msra.mxu0 0
    %382 = vmatprep.subr.bf16.mxu0 0
    %383 = vmatpush1.bf16.msra.mxu0 0
    %384 = vmatprep.subr.bf16.mxu0 0
    %385 = vmatpush1.bf16.msra.mxu0 0
    %386 = vmatprep.mubr.bf16.mxu0 0
    %387 = vmatmul.mubr.bf16.gmra.mrb[0].mxu0 %v349
    %v388 = vpop.f32.mrb[0].mxu0
    %v389 = vadd.f32 0.0, %v388
    %v390 = vpop.f32.mrb[0].mxu0
    %v391 = vpop.f32.mrb[0].mxu0
    %v392 = vpop.f32.mrb[0].mxu0
    %393 = vdwg.mxu0
    %394 = vrot.lane.b32.xlu0 %v164, 112
    %v395 = vpop.permute.xlu0 %394
    %396 = vrot.lane.b32.xlu0 %v164, 80
    %v397 = vpop.permute.xlu0 %396
    %v399 = vsel %vm168, %v395, 0
    %v402 = vsel %vm168, %v397, 0
    %404 = vmatprep.subr.bf16.mxu0 0
    %405 = vmatpush1.bf16.xpose.msra.mxu0 %v402
    %406 = vmatprep.subr.bf16.mxu0 0
    %407 = vmatpush1.bf16.xpose.msra.mxu0 0
    %408 = vmatprep.subr.bf16.mxu0 0
    %409 = vmatpush1.bf16.xpose.msra.mxu0 0
    %410 = vmatprep.subr.bf16.mxu0 0
    %411 = vmatpush1.bf16.xpose.msra.mxu0 0
    %412 = vmatprep.subr.bf16.mxu0 0
    %413 = vmatpush1.bf16.xpose.msra.mxu0 0
    %414 = vmatprep.subr.bf16.mxu0 0
    %415 = vmatpush1.bf16.xpose.msra.mxu0 0
    %416 = vmatprep.subr.bf16.mxu0 0
    %417 = vmatpush1.bf16.xpose.msra.mxu0 0
    %418 = vmatprep.subr.bf16.mxu0 0
    %419 = vmatpush1.bf16.xpose.msra.mxu0 0
    %420 = vmatprep.subr.bf16.mxu0 0
    %421 = vmatpush1.bf16.xpose.msra.mxu0 0
    %422 = vmatprep.subr.bf16.mxu0 0
    %423 = vmatpush1.bf16.xpose.msra.mxu0 0
    %424 = vmatprep.subr.bf16.mxu0 0
    %425 = vmatpush1.bf16.xpose.msra.mxu0 0
    %426 = vmatprep.subr.bf16.mxu0 0
    %427 = vmatpush1.bf16.xpose.msra.mxu0 0
    %428 = vmatprep.subr.bf16.mxu0 0
    %429 = vmatpush1.bf16.xpose.msra.mxu0 0
    %430 = vmatprep.subr.bf16.mxu0 0
    %431 = vmatpush1.bf16.xpose.msra.mxu0 0
    %432 = vmatprep.subr.bf16.mxu0 0
    %433 = vmatpush1.bf16.xpose.msra.mxu0 0
    %434 = vmatprep.subr.bf16.mxu0 0
    %435 = vmatpush1.bf16.xpose.msra.mxu0 0
    %436 = vmatprep.mubr.bf16.mxu0 0
    %437 = vmatmul.mubr.bf16.gmra.mrb[0].mxu0 %v399
    %v438 = vpop.f32.mrb[0].mxu0
    %v439 = vadd.f32 0.0, %v438
    %v440 = vpop.f32.mrb[0].mxu0
    %v441 = vpop.f32.mrb[0].mxu0
    %v442 = vpop.f32.mrb[0].mxu0
    %443 = vdwg.mxu0
    %v444 = vmul.f32 %v439, 0.35355338
    %v445 = vadd.f32 %v444, %v219
    %v446 = vsel %vm168, %v445, -inf
    %447 = vmax.xlane.f32.xlu0 %v446
    %v448 = vpop.xlane.xlu0 %447
    %v449 = vsub.f32 %v445, %v448
    %v450 = vmul.f32 %v449, 1.442695
    %v451 = vpow.pop %v450
    %v452 = vsel %vm168, %v451, 0.0
    %453 = vadd.xlane.f32.xlu0 %v452
    %v454 = vpop.xlane.xlu0 %453
    %v455 = vrcp.pop %v454
    %v456 = vmul.f32 %v451, %v455
    %v457 = vpack.c.bf16 %v456, %v456
    %458 = vrot.lane.b32.xlu0 %v164, 48
    %v459 = vpop.permute.xlu0 %458
    %v461 = vsel %vm168, %v457, 0
    %v464 = vsel %vm238, %v459, 0
    %466 = vmatprep.subr.bf16.mxu0 0
    %467 = vmatpush1.bf16.msra.mxu0 %v464
    %468 = vmatprep.subr.bf16.mxu0 0
    %469 = vmatpush1.bf16.msra.mxu0 0
    %470 = vmatprep.subr.bf16.mxu0 0
    %471 = vmatpush1.bf16.msra.mxu0 0
    %472 = vmatprep.subr.bf16.mxu0 0
    %473 = vmatpush1.bf16.msra.mxu0 0
    %474 = vmatprep.subr.bf16.mxu0 0
    %475 = vmatpush1.bf16.msra.mxu0 0
    %476 = vmatprep.subr.bf16.mxu0 0
    %477 = vmatpush1.bf16.msra.mxu0 0
    %478 = vmatprep.subr.bf16.mxu0 0
    %479 = vmatpush1.bf16.msra.mxu0 0
    %480 = vmatprep.subr.bf16.mxu0 0
    %481 = vmatpush1.bf16.msra.mxu0 0
    %482 = vmatprep.subr.bf16.mxu0 0
    %483 = vmatpush1.bf16.msra.mxu0 0
    %484 = vmatprep.subr.bf16.mxu0 0
    %485 = vmatpush1.bf16.msra.mxu0 0
    %486 = vmatprep.subr.bf16.mxu0 0
    %487 = vmatpush1.bf16.msra.mxu0 0
    %488 = vmatprep.subr.bf16.mxu0 0
    %489 = vmatpush1.bf16.msra.mxu0 0
    %490 = vmatprep.subr.bf16.mxu0 0
    %491 = vmatpush1.bf16.msra.mxu0 0
    %492 = vmatprep.subr.bf16.mxu0 0
    %493 = vmatpush1.bf16.msra.mxu0 0
    %494 = vmatprep.subr.bf16.mxu0 0
    %495 = vmatpush1.bf16.msra.mxu0 0
    %496 = vmatprep.subr.bf16.mxu0 0
    %497 = vmatpush1.bf16.msra.mxu0 0
    %498 = vmatprep.mubr.bf16.mxu0 0
    %499 = vmatmul.mubr.bf16.gmra.mrb[0].mxu0 %v461
    %v500 = vpop.f32.mrb[0].mxu0
    %v501 = vadd.f32 0.0, %v500
    %v502 = vpop.f32.mrb[0].mxu0
    %v503 = vpop.f32.mrb[0].mxu0
    %v504 = vpop.f32.mrb[0].mxu0
    %505 = vdwg.mxu0
    %506 = vrot.lane.b32.xlu0 %v164, 104
    %v507 = vpop.permute.xlu0 %506
    %508 = vrot.lane.b32.xlu0 %v164, 72
    %v509 = vpop.permute.xlu0 %508
    %v511 = vsel %vm168, %v507, 0
    %v514 = vsel %vm168, %v509, 0
    %516 = vmatprep.subr.bf16.mxu0 0
    %517 = vmatpush1.bf16.xpose.msra.mxu0 %v514
    %518 = vmatprep.subr.bf16.mxu0 0
    %519 = vmatpush1.bf16.xpose.msra.mxu0 0
    %520 = vmatprep.subr.bf16.mxu0 0
    %521 = vmatpush1.bf16.xpose.msra.mxu0 0
    %522 = vmatprep.subr.bf16.mxu0 0
    %523 = vmatpush1.bf16.xpose.msra.mxu0 0
    %524 = vmatprep.subr.bf16.mxu0 0
    %525 = vmatpush1.bf16.xpose.msra.mxu0 0
    %526 = vmatprep.subr.bf16.mxu0 0
    %527 = vmatpush1.bf16.xpose.msra.mxu0 0
    %528 = vmatprep.subr.bf16.mxu0 0
    %529 = vmatpush1.bf16.xpose.msra.mxu0 0
    %530 = vmatprep.subr.bf16.mxu0 0
    %531 = vmatpush1.bf16.xpose.msra.mxu0 0
    %532 = vmatprep.subr.bf16.mxu0 0
    %533 = vmatpush1.bf16.xpose.msra.mxu0 0
    %534 = vmatprep.subr.bf16.mxu0 0
    %535 = vmatpush1.bf16.xpose.msra.mxu0 0
    %536 = vmatprep.subr.bf16.mxu0 0
    %537 = vmatpush1.bf16.xpose.msra.mxu0 0
    %538 = vmatprep.subr.bf16.mxu0 0
    %539 = vmatpush1.bf16.xpose.msra.mxu0 0
    %540 = vmatprep.subr.bf16.mxu0 0
    %541 = vmatpush1.bf16.xpose.msra.mxu0 0
    %542 = vmatprep.subr.bf16.mxu0 0
    %543 = vmatpush1.bf16.xpose.msra.mxu0 0
    %544 = vmatprep.subr.bf16.mxu0 0
    %545 = vmatpush1.bf16.xpose.msra.mxu0 0
    %546 = vmatprep.subr.bf16.mxu0 0
    %547 = vmatpush1.bf16.xpose.msra.mxu0 0
    %548 = vmatprep.mubr.bf16.mxu0 0
    %549 = vmatmul.mubr.bf16.gmra.mrb[0].mxu0 %v511
    %v550 = vpop.f32.mrb[0].mxu0
    %v551 = vadd.f32 0.0, %v550
    %v552 = vpop.f32.mrb[0].mxu0
    %v553 = vpop.f32.mrb[0].mxu0
    %v554 = vpop.f32.mrb[0].mxu0
    %555 = vdwg.mxu0
    %v556 = vmul.f32 %v551, 0.35355338
    %v557 = vadd.f32 %v556, %v219
    %v558 = vsel %vm168, %v557, -inf
    %559 = vmax.xlane.f32.xlu0 %v558
    %v560 = vpop.xlane.xlu0 %559
    %v561 = vsub.f32 %v557, %v560
    %v562 = vmul.f32 %v561, 1.442695
    %v563 = vpow.pop %v562
    %v564 = vsel %vm168, %v563, 0.0
    %565 = vadd.xlane.f32.xlu0 %v564
    %v566 = vpop.xlane.xlu0 %565
    %v567 = vrcp.pop %v566
    %v568 = vmul.f32 %v563, %v567
    %v569 = vpack.c.bf16 %v568, %v568
    %570 = vrot.lane.b32.xlu0 %v164, 40
    %v571 = vpop.permute.xlu0 %570
    %v573 = vsel %vm168, %v569, 0
    %v576 = vsel %vm238, %v571, 0
    %578 = vmatprep.subr.bf16.mxu0 0
    %579 = vmatpush1.bf16.msra.mxu0 %v576
    %580 = vmatprep.subr.bf16.mxu0 0
    %581 = vmatpush1.bf16.msra.mxu0 0
    %582 = vmatprep.subr.bf16.mxu0 0
    %583 = vmatpush1.bf16.msra.mxu0 0
    %584 = vmatprep.subr.bf16.mxu0 0
    %585 = vmatpush1.bf16.msra.mxu0 0
    %586 = vmatprep.subr.bf16.mxu0 0
    %587 = vmatpush1.bf16.msra.mxu0 0
    %588 = vmatprep.subr.bf16.mxu0 0
    %589 = vmatpush1.bf16.msra.mxu0 0
    %590 = vmatprep.subr.bf16.mxu0 0
    %591 = vmatpush1.bf16.msra.mxu0 0
    %592 = vmatprep.subr.bf16.mxu0 0
    %593 = vmatpush1.bf16.msra.mxu0 0
    %594 = vmatprep.subr.bf16.mxu0 0
    %595 = vmatpush1.bf16.msra.mxu0 0
    %596 = vmatprep.subr.bf16.mxu0 0
    %597 = vmatpush1.bf16.msra.mxu0 0
    %598 = vmatprep.subr.bf16.mxu0 0
    %599 = vmatpush1.bf16.msra.mxu0 0
    %600 = vmatprep.subr.bf16.mxu0 0
    %601 = vmatpush1.bf16.msra.mxu0 0
    %602 = vmatprep.subr.bf16.mxu0 0
    %603 = vmatpush1.bf16.msra.mxu0 0
    %604 = vmatprep.subr.bf16.mxu0 0
    %605 = vmatpush1.bf16.msra.mxu0 0
    %606 = vmatprep.subr.bf16.mxu0 0
    %607 = vmatpush1.bf16.msra.mxu0 0
    %608 = vmatprep.subr.bf16.mxu0 0
    %609 = vmatpush1.bf16.msra.mxu0 0
    %610 = vmatprep.mubr.bf16.mxu0 0
    %611 = vmatmul.mubr.bf16.gmra.mrb[0].mxu0 %v573
    %v612 = vpop.f32.mrb[0].mxu0
    %v613 = vadd.f32 0.0, %v612
    %v614 = vpop.f32.mrb[0].mxu0
    %v615 = vpop.f32.mrb[0].mxu0
    %v616 = vpop.f32.mrb[0].mxu0
    %617 = vdwg.mxu0
    %619 = vrot.lane.b32.xlu0 %v389, 8
    %v620 = vpop.permute.xlu0 %619
    %623 = vrot.lane.b32.xlu0 %v501, 16
    %v624 = vpop.permute.xlu0 %623
    %627 = vrot.lane.b32.xlu0 %v613, 24
    %v628 = vpop.permute.xlu0 %627
    %v630 = vsel %vm168, %v277, %v620
    %vm631 = vcmask 130048
    %v632 = vsel %vm631, %v630, %v624
    %vm633 = vcmask 195584
    %v634 = vsel %vm633, %v632, %v628
    %v635 = vpack.c.bf16 %v159, %v159
    %637 = vrot.lane.b32.xlu0 %v635, 96
    %v638 = vpop.permute.xlu0 %637
    %v640 = vsel %vm168, %v635, 0
    %v643 = vsel %vm168, %v638, 0
    %645 = vmatprep.subr.bf16.mxu0 0
    %646 = vmatpush1.bf16.xpose.msra.mxu0 %v643
    %647 = vmatprep.subr.bf16.mxu0 0
    %648 = vmatpush1.bf16.xpose.msra.mxu0 0
    %649 = vmatprep.subr.bf16.mxu0 0
    %650 = vmatpush1.bf16.xpose.msra.mxu0 0
    %651 = vmatprep.subr.bf16.mxu0 0
    %652 = vmatpush1.bf16.xpose.msra.mxu0 0
    %653 = vmatprep.subr.bf16.mxu0 0
    %654 = vmatpush1.bf16.xpose.msra.mxu0 0
    %655 = vmatprep.subr.bf16.mxu0 0
    %656 = vmatpush1.bf16.xpose.msra.mxu0 0
    %657 = vmatprep.subr.bf16.mxu0 0
    %658 = vmatpush1.bf16.xpose.msra.mxu0 0
    %659 = vmatprep.subr.bf16.mxu0 0
    %660 = vmatpush1.bf16.xpose.msra.mxu0 0
    %661 = vmatprep.subr.bf16.mxu0 0
    %662 = vmatpush1.bf16.xpose.msra.mxu0 0
    %663 = vmatprep.subr.bf16.mxu0 0
    %664 = vmatpush1.bf16.xpose.msra.mxu0 0
    %665 = vmatprep.subr.bf16.mxu0 0
    %666 = vmatpush1.bf16.xpose.msra.mxu0 0
    %667 = vmatprep.subr.bf16.mxu0 0
    %668 = vmatpush1.bf16.xpose.msra.mxu0 0
    %669 = vmatprep.subr.bf16.mxu0 0
    %670 = vmatpush1.bf16.xpose.msra.mxu0 0
    %671 = vmatprep.subr.bf16.mxu0 0
    %672 = vmatpush1.bf16.xpose.msra.mxu0 0
    %673 = vmatprep.subr.bf16.mxu0 0
    %674 = vmatpush1.bf16.xpose.msra.mxu0 0
    %675 = vmatprep.subr.bf16.mxu0 0
    %676 = vmatpush1.bf16.xpose.msra.mxu0 0
    %677 = vmatprep.mubr.bf16.mxu0 0
    %678 = vmatmul.mubr.bf16.gmra.mrb[0].mxu0 %v640
    %v679 = vpop.f32.mrb[0].mxu0
    %v680 = vadd.f32 0.0, %v679
    %v681 = vpop.f32.mrb[0].mxu0
    %v682 = vpop.f32.mrb[0].mxu0
    %v683 = vpop.f32.mrb[0].mxu0
    %684 = vdwg.mxu0
    %v685 = vmul.f32 %v680, 0.35355338
    %v686 = vlaneseq
    %v687 = vshrl.u32 %v686, 7
    %v688 = vsub.s32 1, %v687
    %v689 = vrot.slane %v163, %v688
    %v690 = vadd.f32 %v685, %v689
    %v691 = vsel %vm168, %v690, -inf
    %692 = vmax.xlane.f32.xlu0 %v691
    %v693 = vpop.xlane.xlu0 %692
    %v694 = vsub.f32 %v690, %v693
    %v695 = vmul.f32 %v694, 1.442695
    %v696 = vpow.pop %v695
    %v697 = vsel %vm168, %v696, 0.0
    %698 = vadd.xlane.f32.xlu0 %v697
    %v699 = vpop.xlane.xlu0 %698
    %v700 = vrcp.pop %v699
    %v701 = vmul.f32 %v696, %v700
    %v702 = vpack.c.bf16 %v701, %v701
    %703 = vrot.lane.b32.xlu0 %v635, 64
    %v704 = vpop.permute.xlu0 %703
    %v706 = vsel %vm168, %v702, 0
    %v709 = vsel %vm238, %v704, 0
    %711 = vmatprep.subr.bf16.mxu0 0
    %712 = vmatpush1.bf16.msra.mxu0 %v709
    %713 = vmatprep.subr.bf16.mxu0 0
    %714 = vmatpush1.bf16.msra.mxu0 0
    %715 = vmatprep.subr.bf16.mxu0 0
    %716 = vmatpush1.bf16.msra.mxu0 0
    %717 = vmatprep.subr.bf16.mxu0 0
    %718 = vmatpush1.bf16.msra.mxu0 0
    %719 = vmatprep.subr.bf16.mxu0 0
    %720 = vmatpush1.bf16.msra.mxu0 0
    %721 = vmatprep.subr.bf16.mxu0 0
    %722 = vmatpush1.bf16.msra.mxu0 0
    %723 = vmatprep.subr.bf16.mxu0 0
    %724 = vmatpush1.bf16.msra.mxu0 0
    %725 = vmatprep.subr.bf16.mxu0 0
    %726 = vmatpush1.bf16.msra.mxu0 0
    %727 = vmatprep.subr.bf16.mxu0 0
    %728 = vmatpush1.bf16.msra.mxu0 0
    %729 = vmatprep.subr.bf16.mxu0 0
    %730 = vmatpush1.bf16.msra.mxu0 0
    %731 = vmatprep.subr.bf16.mxu0 0
    %732 = vmatpush1.bf16.msra.mxu0 0
    %733 = vmatprep.subr.bf16.mxu0 0
    %734 = vmatpush1.bf16.msra.mxu0 0
    %735 = vmatprep.subr.bf16.mxu0 0
    %736 = vmatpush1.bf16.msra.mxu0 0
    %737 = vmatprep.subr.bf16.mxu0 0
    %738 = vmatpush1.bf16.msra.mxu0 0
    %739 = vmatprep.subr.bf16.mxu0 0
    %740 = vmatpush1.bf16.msra.mxu0 0
    %741 = vmatprep.subr.bf16.mxu0 0
    %742 = vmatpush1.bf16.msra.mxu0 0
    %743 = vmatprep.mubr.bf16.mxu0 0
    %744 = vmatmul.mubr.bf16.gmra.mrb[0].mxu0 %v706
    %v745 = vpop.f32.mrb[0].mxu0
    %v746 = vadd.f32 0.0, %v745
    %v747 = vpop.f32.mrb[0].mxu0
    %v748 = vpop.f32.mrb[0].mxu0
    %v749 = vpop.f32.mrb[0].mxu0
    %750 = vdwg.mxu0
    %751 = vrot.lane.b32.xlu0 %v635, 120
    %v752 = vpop.permute.xlu0 %751
    %753 = vrot.lane.b32.xlu0 %v635, 88
    %v754 = vpop.permute.xlu0 %753
    %v756 = vsel %vm168, %v752, 0
    %v759 = vsel %vm168, %v754, 0
    %761 = vmatprep.subr.bf16.mxu0 0
    %762 = vmatpush1.bf16.xpose.msra.mxu0 %v759
    %763 = vmatprep.subr.bf16.mxu0 0
    %764 = vmatpush1.bf16.xpose.msra.mxu0 0
    %765 = vmatprep.subr.bf16.mxu0 0
    %766 = vmatpush1.bf16.xpose.msra.mxu0 0
    %767 = vmatprep.subr.bf16.mxu0 0
    %768 = vmatpush1.bf16.xpose.msra.mxu0 0
    %769 = vmatprep.subr.bf16.mxu0 0
    %770 = vmatpush1.bf16.xpose.msra.mxu0 0
    %771 = vmatprep.subr.bf16.mxu0 0
    %772 = vmatpush1.bf16.xpose.msra.mxu0 0
    %773 = vmatprep.subr.bf16.mxu0 0
    %774 = vmatpush1.bf16.xpose.msra.mxu0 0
    %775 = vmatprep.subr.bf16.mxu0 0
    %776 = vmatpush1.bf16.xpose.msra.mxu0 0
    %777 = vmatprep.subr.bf16.mxu0 0
    %778 = vmatpush1.bf16.xpose.msra.mxu0 0
    %779 = vmatprep.subr.bf16.mxu0 0
    %780 = vmatpush1.bf16.xpose.msra.mxu0 0
    %781 = vmatprep.subr.bf16.mxu0 0
    %782 = vmatpush1.bf16.xpose.msra.mxu0 0
    %783 = vmatprep.subr.bf16.mxu0 0
    %784 = vmatpush1.bf16.xpose.msra.mxu0 0
    %785 = vmatprep.subr.bf16.mxu0 0
    %786 = vmatpush1.bf16.xpose.msra.mxu0 0
    %787 = vmatprep.subr.bf16.mxu0 0
    %788 = vmatpush1.bf16.xpose.msra.mxu0 0
    %789 = vmatprep.subr.bf16.mxu0 0
    %790 = vmatpush1.bf16.xpose.msra.mxu0 0
    %791 = vmatprep.subr.bf16.mxu0 0
    %792 = vmatpush1.bf16.xpose.msra.mxu0 0
    %793 = vmatprep.mubr.bf16.mxu0 0
    %794 = vmatmul.mubr.bf16.gmra.mrb[0].mxu0 %v756
    %v795 = vpop.f32.mrb[0].mxu0
    %v796 = vadd.f32 0.0, %v795
    %v797 = vpop.f32.mrb[0].mxu0
    %v798 = vpop.f32.mrb[0].mxu0
    %v799 = vpop.f32.mrb[0].mxu0
    %800 = vdwg.mxu0
    %v801 = vmul.f32 %v796, 0.35355338
    %v802 = vadd.f32 %v801, %v689
    %v803 = vsel %vm168, %v802, -inf
    %804 = vmax.xlane.f32.xlu0 %v803
    %v805 = vpop.xlane.xlu0 %804
    %v806 = vsub.f32 %v802, %v805
    %v807 = vmul.f32 %v806, 1.442695
    %v808 = vpow.pop %v807
    %v809 = vsel %vm168, %v808, 0.0
    %810 = vadd.xlane.f32.xlu0 %v809
    %v811 = vpop.xlane.xlu0 %810
    %v812 = vrcp.pop %v811
    %v813 = vmul.f32 %v808, %v812
    %v814 = vpack.c.bf16 %v813, %v813
    %815 = vrot.lane.b32.xlu0 %v635, 56
    %v816 = vpop.permute.xlu0 %815
    %v818 = vsel %vm168, %v814, 0
    %v821 = vsel %vm238, %v816, 0
    %823 = vmatprep.subr.bf16.mxu0 0
    %824 = vmatpush1.bf16.msra.mxu0 %v821
    %825 = vmatprep.subr.bf16.mxu0 0
    %826 = vmatpush1.bf16.msra.mxu0 0
    %827 = vmatprep.subr.bf16.mxu0 0
    %828 = vmatpush1.bf16.msra.mxu0 0
    %829 = vmatprep.subr.bf16.mxu0 0
    %830 = vmatpush1.bf16.msra.mxu0 0
    %831 = vmatprep.subr.bf16.mxu0 0
    %832 = vmatpush1.bf16.msra.mxu0 0
    %833 = vmatprep.subr.bf16.mxu0 0
    %834 = vmatpush1.bf16.msra.mxu0 0
    %835 = vmatprep.subr.bf16.mxu0 0
    %836 = vmatpush1.bf16.msra.mxu0 0
    %837 = vmatprep.subr.bf16.mxu0 0
    %838 = vmatpush1.bf16.msra.mxu0 0
    %839 = vmatprep.subr.bf16.mxu0 0
    %840 = vmatpush1.bf16.msra.mxu0 0
    %841 = vmatprep.subr.bf16.mxu0 0
    %842 = vmatpush1.bf16.msra.mxu0 0
    %843 = vmatprep.subr.bf16.mxu0 0
    %844 = vmatpush1.bf16.msra.mxu0 0
    %845 = vmatprep.subr.bf16.mxu0 0
    %846 = vmatpush1.bf16.msra.mxu0 0
    %847 = vmatprep.subr.bf16.mxu0 0
    %848 = vmatpush1.bf16.msra.mxu0 0
    %849 = vmatprep.subr.bf16.mxu0 0
    %850 = vmatpush1.bf16.msra.mxu0 0
    %851 = vmatprep.subr.bf16.mxu0 0
    %852 = vmatpush1.bf16.msra.mxu0 0
    %853 = vmatprep.subr.bf16.mxu0 0
    %854 = vmatpush1.bf16.msra.mxu0 0
    %855 = vmatprep.mubr.bf16.mxu0 0
    %856 = vmatmul.mubr.bf16.gmra.mrb[0].mxu0 %v818
    %v857 = vpop.f32.mrb[0].mxu0
    %v858 = vadd.f32 0.0, %v857
    %v859 = vpop.f32.mrb[0].mxu0
    %v860 = vpop.f32.mrb[0].mxu0
    %v861 = vpop.f32.mrb[0].mxu0
    %862 = vdwg.mxu0
    %863 = vrot.lane.b32.xlu0 %v635, 112
    %v864 = vpop.permute.xlu0 %863
    %865 = vrot.lane.b32.xlu0 %v635, 80
    %v866 = vpop.permute.xlu0 %865
    %v868 = vsel %vm168, %v864, 0
    %v871 = vsel %vm168, %v866, 0
    %873 = vmatprep.subr.bf16.mxu0 0
    %874 = vmatpush1.bf16.xpose.msra.mxu0 %v871
    %875 = vmatprep.subr.bf16.mxu0 0
    %876 = vmatpush1.bf16.xpose.msra.mxu0 0
    %877 = vmatprep.subr.bf16.mxu0 0
    %878 = vmatpush1.bf16.xpose.msra.mxu0 0
    %879 = vmatprep.subr.bf16.mxu0 0
    %880 = vmatpush1.bf16.xpose.msra.mxu0 0
    %881 = vmatprep.subr.bf16.mxu0 0
    %882 = vmatpush1.bf16.xpose.msra.mxu0 0
    %883 = vmatprep.subr.bf16.mxu0 0
    %884 = vmatpush1.bf16.xpose.msra.mxu0 0
    %885 = vmatprep.subr.bf16.mxu0 0
    %886 = vmatpush1.bf16.xpose.msra.mxu0 0
    %887 = vmatprep.subr.bf16.mxu0 0
    %888 = vmatpush1.bf16.xpose.msra.mxu0 0
    %889 = vmatprep.subr.bf16.mxu0 0
    %890 = vmatpush1.bf16.xpose.msra.mxu0 0
    %891 = vmatprep.subr.bf16.mxu0 0
    %892 = vmatpush1.bf16.xpose.msra.mxu0 0
    %893 = vmatprep.subr.bf16.mxu0 0
    %894 = vmatpush1.bf16.xpose.msra.mxu0 0
    %895 = vmatprep.subr.bf16.mxu0 0
    %896 = vmatpush1.bf16.xpose.msra.mxu0 0
    %897 = vmatprep.subr.bf16.mxu0 0
    %898 = vmatpush1.bf16.xpose.msra.mxu0 0
    %899 = vmatprep.subr.bf16.mxu0 0
    %900 = vmatpush1.bf16.xpose.msra.mxu0 0
    %901 = vmatprep.subr.bf16.mxu0 0
    %902 = vmatpush1.bf16.xpose.msra.mxu0 0
    %903 = vmatprep.subr.bf16.mxu0 0
    %904 = vmatpush1.bf16.xpose.msra.mxu0 0
    %905 = vmatprep.mubr.bf16.mxu0 0
    %906 = vmatmul.mubr.bf16.gmra.mrb[0].mxu0 %v868
    %v907 = vpop.f32.mrb[0].mxu0
    %v908 = vadd.f32 0.0, %v907
    %v909 = vpop.f32.mrb[0].mxu0
    %v910 = vpop.f32.mrb[0].mxu0
    %v911 = vpop.f32.mrb[0].mxu0
    %912 = vdwg.mxu0
    %v913 = vmul.f32 %v908, 0.35355338
    %v914 = vadd.f32 %v913, %v689
    %v915 = vsel %vm168, %v914, -inf
    %916 = vmax.xlane.f32.xlu0 %v915
    %v917 = vpop.xlane.xlu0 %916
    %v918 = vsub.f32 %v914, %v917
    %v919 = vmul.f32 %v918, 1.442695
    %v920 = vpow.pop %v919
    %v921 = vsel %vm168, %v920, 0.0
    %922 = vadd.xlane.f32.xlu0 %v921
    %v923 = vpop.xlane.xlu0 %922
    %v924 = vrcp.pop %v923
    %v925 = vmul.f32 %v920, %v924
    %v926 = vpack.c.bf16 %v925, %v925
    %927 = vrot.lane.b32.xlu0 %v635, 48
    %v928 = vpop.permute.xlu0 %927
    %v930 = vsel %vm168, %v926, 0
    %v933 = vsel %vm238, %v928, 0
    %935 = vmatprep.subr.bf16.mxu0 0
    %936 = vmatpush1.bf16.msra.mxu0 %v933
    %937 = vmatprep.subr.bf16.mxu0 0
    %938 = vmatpush1.bf16.msra.mxu0 0
    %939 = vmatprep.subr.bf16.mxu0 0
    %940 = vmatpush1.bf16.msra.mxu0 0
    %941 = vmatprep.subr.bf16.mxu0 0
    %942 = vmatpush1.bf16.msra.mxu0 0
    %943 = vmatprep.subr.bf16.mxu0 0
    %944 = vmatpush1.bf16.msra.mxu0 0
    %945 = vmatprep.subr.bf16.mxu0 0
    %946 = vmatpush1.bf16.msra.mxu0 0
    %947 = vmatprep.subr.bf16.mxu0 0
    %948 = vmatpush1.bf16.msra.mxu0 0
    %949 = vmatprep.subr.bf16.mxu0 0
    %950 = vmatpush1.bf16.msra.mxu0 0
    %951 = vmatprep.subr.bf16.mxu0 0
    %952 = vmatpush1.bf16.msra.mxu0 0
    %953 = vmatprep.subr.bf16.mxu0 0
    %954 = vmatpush1.bf16.msra.mxu0 0
    %955 = vmatprep.subr.bf16.mxu0 0
    %956 = vmatpush1.bf16.msra.mxu0 0
    %957 = vmatprep.subr.bf16.mxu0 0
    %958 = vmatpush1.bf16.msra.mxu0 0
    %959 = vmatprep.subr.bf16.mxu0 0
    %960 = vmatpush1.bf16.msra.mxu0 0
    %961 = vmatprep.subr.bf16.mxu0 0
    %962 = vmatpush1.bf16.msra.mxu0 0
    %963 = vmatprep.subr.bf16.mxu0 0
    %964 = vmatpush1.bf16.msra.mxu0 0
    %965 = vmatprep.subr.bf16.mxu0 0
    %966 = vmatpush1.bf16.msra.mxu0 0
    %967 = vmatprep.mubr.bf16.mxu0 0
    %968 = vmatmul.mubr.bf16.gmra.mrb[0].mxu0 %v930
    %v969 = vpop.f32.mrb[0].mxu0
    %v970 = vadd.f32 0.0, %v969
    %v971 = vpop.f32.mrb[0].mxu0
    %v972 = vpop.f32.mrb[0].mxu0
    %v973 = vpop.f32.mrb[0].mxu0
    %974 = vdwg.mxu0
    %975 = vrot.lane.b32.xlu0 %v635, 104
    %v976 = vpop.permute.xlu0 %975
    %977 = vrot.lane.b32.xlu0 %v635, 72
    %v978 = vpop.permute.xlu0 %977
    %v980 = vsel %vm168, %v976, 0
    %v983 = vsel %vm168, %v978, 0
    %985 = vmatprep.subr.bf16.mxu0 0
    %986 = vmatpush1.bf16.xpose.msra.mxu0 %v983
    %987 = vmatprep.subr.bf16.mxu0 0
    %988 = vmatpush1.bf16.xpose.msra.mxu0 0
    %989 = vmatprep.subr.bf16.mxu0 0
    %990 = vmatpush1.bf16.xpose.msra.mxu0 0
    %991 = vmatprep.subr.bf16.mxu0 0
    %992 = vmatpush1.bf16.xpose.msra.mxu0 0
    %993 = vmatprep.subr.bf16.mxu0 0
    %994 = vmatpush1.bf16.xpose.msra.mxu0 0
    %995 = vmatprep.subr.bf16.mxu0 0
    %996 = vmatpush1.bf16.xpose.msra.mxu0 0
    %997 = vmatprep.subr.bf16.mxu0 0
    %998 = vmatpush1.bf16.xpose.msra.mxu0 0
    %999 = vmatprep.subr.bf16.mxu0 0
    %1000 = vmatpush1.bf16.xpose.msra.mxu0 0
    %1001 = vmatprep.subr.bf16.mxu0 0
    %1002 = vmatpush1.bf16.xpose.msra.mxu0 0
    %1003 = vmatprep.subr.bf16.mxu0 0
    %1004 = vmatpush1.bf16.xpose.msra.mxu0 0
    %1005 = vmatprep.subr.bf16.mxu0 0
    %1006 = vmatpush1.bf16.xpose.msra.mxu0 0
    %1007 = vmatprep.subr.bf16.mxu0 0
    %1008 = vmatpush1.bf16.xpose.msra.mxu0 0
    %1009 = vmatprep.subr.bf16.mxu0 0
    %1010 = vmatpush1.bf16.xpose.msra.mxu0 0
    %1011 = vmatprep.subr.bf16.mxu0 0
    %1012 = vmatpush1.bf16.xpose.msra.mxu0 0
    %1013 = vmatprep.subr.bf16.mxu0 0
    %1014 = vmatpush1.bf16.xpose.msra.mxu0 0
    %1015 = vmatprep.subr.bf16.mxu0 0
    %1016 = vmatpush1.bf16.xpose.msra.mxu0 0
    %1017 = vmatprep.mubr.bf16.mxu0 0
    %1018 = vmatmul.mubr.bf16.gmra.mrb[0].mxu0 %v980
    %v1019 = vpop.f32.mrb[0].mxu0
    %v1020 = vadd.f32 0.0, %v1019
    %v1021 = vpop.f32.mrb[0].mxu0
    %v1022 = vpop.f32.mrb[0].mxu0
    %v1023 = vpop.f32.mrb[0].mxu0
    %1024 = vdwg.mxu0
    %v1025 = vmul.f32 %v1020, 0.35355338
    %v1026 = vadd.f32 %v1025, %v689
    %v1027 = vsel %vm168, %v1026, -inf
    %1028 = vmax.xlane.f32.xlu0 %v1027
    %v1029 = vpop.xlane.xlu0 %1028
    %v1030 = vsub.f32 %v1026, %v1029
    %v1031 = vmul.f32 %v1030, 1.442695
    %v1032 = vpow.pop %v1031
    %v1033 = vsel %vm168, %v1032, 0.0
    %1034 = vadd.xlane.f32.xlu0 %v1033
    %v1035 = vpop.xlane.xlu0 %1034
    %v1036 = vrcp.pop %v1035
    %v1037 = vmul.f32 %v1032, %v1036
    %v1038 = vpack.c.bf16 %v1037, %v1037
    %1039 = vrot.lane.b32.xlu0 %v635, 40
    %v1040 = vpop.permute.xlu0 %1039
    %v1042 = vsel %vm168, %v1038, 0
    %v1045 = vsel %vm238, %v1040, 0
    %1047 = vmatprep.subr.bf16.mxu0 0
    %1048 = vmatpush1.bf16.msra.mxu0 %v1045
    %1049 = vmatprep.subr.bf16.mxu0 0
    %1050 = vmatpush1.bf16.msra.mxu0 0
    %1051 = vmatprep.subr.bf16.mxu0 0
    %1052 = vmatpush1.bf16.msra.mxu0 0
    %1053 = vmatprep.subr.bf16.mxu0 0
    %1054 = vmatpush1.bf16.msra.mxu0 0
    %1055 = vmatprep.subr.bf16.mxu0 0
    %1056 = vmatpush1.bf16.msra.mxu0 0
    %1057 = vmatprep.subr.bf16.mxu0 0
    %1058 = vmatpush1.bf16.msra.mxu0 0
    %1059 = vmatprep.subr.bf16.mxu0 0
    %1060 = vmatpush1.bf16.msra.mxu0 0
    %1061 = vmatprep.subr.bf16.mxu0 0
    %1062 = vmatpush1.bf16.msra.mxu0 0
    %1063 = vmatprep.subr.bf16.mxu0 0
    %1064 = vmatpush1.bf16.msra.mxu0 0
    %1065 = vmatprep.subr.bf16.mxu0 0
    %1066 = vmatpush1.bf16.msra.mxu0 0
    %1067 = vmatprep.subr.bf16.mxu0 0
    %1068 = vmatpush1.bf16.msra.mxu0 0
    %1069 = vmatprep.subr.bf16.mxu0 0
    %1070 = vmatpush1.bf16.msra.mxu0 0
    %1071 = vmatprep.subr.bf16.mxu0 0
    %1072 = vmatpush1.bf16.msra.mxu0 0
    %1073 = vmatprep.subr.bf16.mxu0 0
    %1074 = vmatpush1.bf16.msra.mxu0 0
    %1075 = vmatprep.subr.bf16.mxu0 0
    %1076 = vmatpush1.bf16.msra.mxu0 0
    %1077 = vmatprep.subr.bf16.mxu0 0
    %1078 = vmatpush1.bf16.msra.mxu0 0
    %1079 = vmatprep.mubr.bf16.mxu0 0
    %1080 = vmatmul.mubr.bf16.gmra.mrb[0].mxu0 %v1042
    %v1081 = vpop.f32.mrb[0].mxu0
    %v1082 = vadd.f32 0.0, %v1081
    %v1083 = vpop.f32.mrb[0].mxu0
    %v1084 = vpop.f32.mrb[0].mxu0
    %v1085 = vpop.f32.mrb[0].mxu0
    %1086 = vdwg.mxu0
    %1088 = vrot.lane.b32.xlu0 %v858, 8
    %v1089 = vpop.permute.xlu0 %1088
    %1092 = vrot.lane.b32.xlu0 %v970, 16
    %v1093 = vpop.permute.xlu0 %1092
    %1096 = vrot.lane.b32.xlu0 %v1082, 24
    %v1097 = vpop.permute.xlu0 %1096
    %v1099 = vsel %vm168, %v746, %v1089
    %v1100 = vsel %vm631, %v1099, %v1093
    %v1101 = vsel %vm633, %v1100, %v1097
    %v1102 = vpack.c.bf16 %v1101, %v634
    %v1103 = vld [vmem:[%s5] sm:$0xf]
    %v1104 = vld [vmem:[%s5 + $0x4] sm:$0xf]
    %v1105 = vld [vmem:[%s5 + $0x8] sm:$0xf]
    %v1106 = vld [vmem:[%s5 + $0xc] sm:$0xf]
    %v1107 = vld [vmem:[%s6] sm:$0x1]
    %v1109 = vlaneseq
    %v1110 = vshrl.u32 %v1109, 7
    %v1111 = vsub.s32 0, %v1110
    %v1112 = vrot.slane %v1107, %v1111
    %v1118 = vunpack.c.l.b16 %v1103
    %v1119 = vunpack.c.l.b16 %v1104
    %v1120 = vunpack.c.l.b16 %v1105
    %v1121 = vunpack.c.l.b16 %v1106
    %v1122 = vpack.c.b16 %v1119, %v1118
    %v1123 = vpack.c.b16 %v1121, %v1120
    %v1127 = vsel %vm50, %v1102, 0
    %1129 = vmatprep.subr.bf16.mxu0 0
    %1130 = vmatpush1.bf16.msra.mxu0 %v1122
    %1131 = vmatprep.subr.bf16.mxu0 0
    %1132 = vmatpush1.bf16.msra.mxu0 %v1123
    %1133 = vmatprep.subr.bf16.mxu0 0
    %1134 = vmatpush1.bf16.msra.mxu0 0
    %1135 = vmatprep.subr.bf16.mxu0 0
    %1136 = vmatpush1.bf16.msra.mxu0 0
    %1137 = vmatprep.subr.bf16.mxu0 0
    %1138 = vmatpush1.bf16.msra.mxu0 0
    %1139 = vmatprep.subr.bf16.mxu0 0
    %1140 = vmatpush1.bf16.msra.mxu0 0
    %1141 = vmatprep.subr.bf16.mxu0 0
    %1142 = vmatpush1.bf16.msra.mxu0 0
    %1143 = vmatprep.subr.bf16.mxu0 0
    %1144 = vmatpush1.bf16.msra.mxu0 0
    %1145 = vmatprep.subr.bf16.mxu0 0
    %1146 = vmatpush1.bf16.msra.mxu0 0
    %1147 = vmatprep.subr.bf16.mxu0 0
    %1148 = vmatpush1.bf16.msra.mxu0 0
    %1149 = vmatprep.subr.bf16.mxu0 0
    %1150 = vmatpush1.bf16.msra.mxu0 0
    %1151 = vmatprep.subr.bf16.mxu0 0
    %1152 = vmatpush1.bf16.msra.mxu0 0
    %1153 = vmatprep.subr.bf16.mxu0 0
    %1154 = vmatpush1.bf16.msra.mxu0 0
    %1155 = vmatprep.subr.bf16.mxu0 0
    %1156 = vmatpush1.bf16.msra.mxu0 0
    %1157 = vmatprep.subr.bf16.mxu0 0
    %1158 = vmatpush1.bf16.msra.mxu0 0
    %1159 = vmatprep.subr.bf16.mxu0 0
    %1160 = vmatpush1.bf16.msra.mxu0 0
    %1161 = vmatprep.mubr.bf16.mxu0 0
    %1162 = vmatmul.mubr.bf16.gmra.mrb[0].mxu0 %v1127
    %v1163 = vpop.f32.mrb[0].mxu0
    %v1164 = vadd.f32 %v1112, %v1163
    %v1165 = vpop.f32.mrb[0].mxu0
    %v1166 = vpop.f32.mrb[0].mxu0
    %v1167 = vadd.f32 %v1112, %v1166
    %v1168 = vpop.f32.mrb[0].mxu0
    %1169 = vdwg.mxu0
    %v1170 = vadd.f32 %v92, %v1164
    %v1171 = vadd.f32 %v93, %v1167
    %v1172 = vld [vmem:[%s7] sm:$0x3]
    %v1173 = vsel %vm50, %v1170, 0.0
    %1174 = vadd.xlane.f32.xlu0 %v1173
    %v1175 = vpop.xlane.xlu0 %1174
    %v1176 = vsel %vm50, %v1171, 0.0
    %1177 = vadd.xlane.f32.xlu0 %v1176
    %v1178 = vpop.xlane.xlu0 %1177
    %v1179 = vmul.f32 %v1175, %v57
    %v1180 = vmul.f32 %v1178, %v57
    %v1181 = vmul.f32 %v1170, %v1170
    %v1182 = vmul.f32 %v1171, %v1171
    %v1183 = vsel %vm50, %v1181, 0.0
    %1184 = vadd.xlane.f32.xlu0 %v1183
    %v1185 = vpop.xlane.xlu0 %1184
    %v1186 = vsel %vm50, %v1182, 0.0
    %1187 = vadd.xlane.f32.xlu0 %v1186
    %v1188 = vpop.xlane.xlu0 %1187
    %v1189 = vmul.f32 %v1185, %v57
    %v1190 = vmul.f32 %v1188, %v57
    %v1191 = vmul.f32 %v1179, %v1179
    %v1192 = vmul.f32 %v1180, %v1180
    %v1193 = vsub.f32 %v1189, %v1191
    %v1194 = vsub.f32 %v1190, %v1192
    %v1195 = vsub.f32 %v1170, %v1179
    %v1196 = vsub.f32 %v1171, %v1180
    %v1197 = vadd.f32 %v1193, 1e-12
    %v1198 = vadd.f32 %v1194, 1e-12
    %v1199 = vrsqrt.pop %v1197
    %v1200 = vrsqrt.pop %v1198
    %v1201 = vmul.f32 %v1195, %v1199
    %v1202 = vmul.f32 %v1196, %v1200
    %v1203 = vlaneseq
    %v1204 = vshrl.u32 %v1203, 7
    %v1205 = vsub.s32 0, %v1204
    %v1206 = vrot.slane %v1172, %v1205
    %v1207 = vmul.f32 %v1201, %v1206
    %v1208 = vmul.f32 %v1202, %v1206
    %v1209 = vlaneseq
    %v1210 = vshrl.u32 %v1209, 7
    %v1211 = vsub.s32 1, %v1210
    %v1212 = vrot.slane %v1172, %v1211
    %v1213 = vadd.f32 %v1207, %v1212
    %v1214 = vadd.f32 %v1208, %v1212
    %v1215 = vpack.c.bf16 %v1214, %v1213
    %v1216 = vld [vmem:[%s8] sm:$0xf]
    %v1217 = vld [vmem:[%s8 + $0x4] sm:$0xf]
    %v1218 = vld [vmem:[%s8 + $0x8] sm:$0xf]
    %v1219 = vld [vmem:[%s8 + $0xc] sm:$0xf]
    %v1220 = vld [vmem:[%s9] sm:$0x1]
    %v1222 = vlaneseq
    %v1223 = vshrl.u32 %v1222, 7
    %v1224 = vsub.s32 0, %v1223
    %v1225 = vrot.slane %v1220, %v1224
    %v1231 = vunpack.c.l.b16 %v1216
    %v1232 = vunpack.c.l.b16 %v1217
    %v1233 = vunpack.c.l.b16 %v1218
    %v1234 = vunpack.c.l.b16 %v1219
    %v1235 = vpack.c.b16 %v1232, %v1231
    %v1236 = vpack.c.b16 %v1234, %v1233
    %v1240 = vsel %vm50, %v1215, 0
    %1242 = vmatprep.subr.bf16.mxu0 0
    %1243 = vmatpush1.bf16.msra.mxu0 %v1235
    %1244 = vmatprep.subr.bf16.mxu0 0
    %1245 = vmatpush1.bf16.msra.mxu0 %v1236
    %1246 = vmatprep.subr.bf16.mxu0 0
    %1247 = vmatpush1.bf16.msra.mxu0 0
    %1248 = vmatprep.subr.bf16.mxu0 0
    %1249 = vmatpush1.bf16.msra.mxu0 0
    %1250 = vmatprep.subr.bf16.mxu0 0
    %1251 = vmatpush1.bf16.msra.mxu0 0
    %1252 = vmatprep.subr.bf16.mxu0 0
    %1253 = vmatpush1.bf16.msra.mxu0 0
    %1254 = vmatprep.subr.bf16.mxu0 0
    %1255 = vmatpush1.bf16.msra.mxu0 0
    %1256 = vmatprep.subr.bf16.mxu0 0
    %1257 = vmatpush1.bf16.msra.mxu0 0
    %1258 = vmatprep.subr.bf16.mxu0 0
    %1259 = vmatpush1.bf16.msra.mxu0 0
    %1260 = vmatprep.subr.bf16.mxu0 0
    %1261 = vmatpush1.bf16.msra.mxu0 0
    %1262 = vmatprep.subr.bf16.mxu0 0
    %1263 = vmatpush1.bf16.msra.mxu0 0
    %1264 = vmatprep.subr.bf16.mxu0 0
    %1265 = vmatpush1.bf16.msra.mxu0 0
    %1266 = vmatprep.subr.bf16.mxu0 0
    %1267 = vmatpush1.bf16.msra.mxu0 0
    %1268 = vmatprep.subr.bf16.mxu0 0
    %1269 = vmatpush1.bf16.msra.mxu0 0
    %1270 = vmatprep.subr.bf16.mxu0 0
    %1271 = vmatpush1.bf16.msra.mxu0 0
    %1272 = vmatprep.subr.bf16.mxu0 0
    %1273 = vmatpush1.bf16.msra.mxu0 0
    %1274 = vmatprep.mubr.bf16.mxu0 0
    %1275 = vmatmul.mubr.bf16.gmra.mrb[0].mxu0 %v1240
    %v1276 = vpop.f32.mrb[0].mxu0
    %v1277 = vadd.f32 %v1225, %v1276
    %v1278 = vpop.f32.mrb[0].mxu0
    %v1279 = vpop.f32.mrb[0].mxu0
    %v1280 = vadd.f32 %v1225, %v1279
    %v1281 = vpop.f32.mrb[0].mxu0
    %1282 = vdwg.mxu0
    %v1283 = vmul.f32 %v1277, %v1277
    %v1284 = vmul.f32 %v1280, %v1280
    %v1285 = vmul.f32 %v1277, %v1283
    %v1286 = vmul.f32 %v1280, %v1284
    %v1287 = vmul.f32 %v1285, 0.044715
    %v1288 = vmul.f32 %v1286, 0.044715
    %v1289 = vadd.f32 %v1277, %v1287
    %v1290 = vadd.f32 %v1280, %v1288
    %v1291 = vmul.f32 %v1289, 0.7978846
    %v1292 = vmul.f32 %v1290, 0.7978846
    %v1293 = vtanh.pop %v1291
    %v1294 = vtanh.pop %v1292
    %v1295 = vadd.f32 %v1293, 1.0
    %v1296 = vadd.f32 %v1294, 1.0
    %v1297 = vmul.f32 %v1295, 0.5
    %v1298 = vmul.f32 %v1296, 0.5
    %v1299 = vmul.f32 %v1277, %v1297
    %v1300 = vmul.f32 %v1280, %v1298
    %v1301 = vpack.c.bf16 %v1300, %v1299
    %v1302 = vld [vmem:[%s10] sm:$0xf]
    %v1303 = vld [vmem:[%s10 + $0x4] sm:$0xf]
    %v1304 = vld [vmem:[%s10 + $0x8] sm:$0xf]
    %v1305 = vld [vmem:[%s10 + $0xc] sm:$0xf]
    %v1306 = vld [vmem:[%s10 + $0x10] sm:$0xf]
    %v1307 = vld [vmem:[%s10 + $0x14] sm:$0xf]
    %v1308 = vld [vmem:[%s10 + $0x18] sm:$0xf]
    %v1309 = vld [vmem:[%s10 + $0x1c] sm:$0xf]
    %v1310 = vld [vmem:[%s11] sm:$0x1]
    %v1312 = vlaneseq
    %v1313 = vshrl.u32 %v1312, 7
    %v1314 = vsub.s32 0, %v1313
    %v1315 = vrot.slane %v1310, %v1314
    %v1325 = vunpack.c.l.b16 %v1302
    %v1326 = vunpack.c.l.b16 %v1303
    %v1327 = vunpack.c.l.b16 %v1304
    %v1328 = vunpack.c.l.b16 %v1305
    %v1329 = vunpack.c.l.b16 %v1306
    %v1330 = vunpack.c.l.b16 %v1307
    %v1331 = vunpack.c.l.b16 %v1308
    %v1332 = vunpack.c.l.b16 %v1309
    %v1333 = vpack.c.b16 %v1326, %v1325
    %v1334 = vpack.c.b16 %v1328, %v1327
    %v1335 = vpack.c.b16 %v1330, %v1329
    %v1336 = vpack.c.b16 %v1332, %v1331
    %vm1341 = vcmask 523264
    %v1343 = vsel %vm1341, %v1301, 0
    %1345 = vmatprep.subr.bf16.mxu0 0
    %1346 = vmatpush1.bf16.msra.mxu0 %v1333
    %1347 = vmatprep.subr.bf16.mxu0 0
    %1348 = vmatpush1.bf16.msra.mxu0 %v1334
    %1349 = vmatprep.subr.bf16.mxu0 0
    %1350 = vmatpush1.bf16.msra.mxu0 %v1335
    %1351 = vmatprep.subr.bf16.mxu0 0
    %1352 = vmatpush1.bf16.msra.mxu0 %v1336
    %1353 = vmatprep.subr.bf16.mxu0 0
    %1354 = vmatpush1.bf16.msra.mxu0 0
    %1355 = vmatprep.subr.bf16.mxu0 0
    %1356 = vmatpush1.bf16.msra.mxu0 0
    %1357 = vmatprep.subr.bf16.mxu0 0
    %1358 = vmatpush1.bf16.msra.mxu0 0
    %1359 = vmatprep.subr.bf16.mxu0 0
    %1360 = vmatpush1.bf16.msra.mxu0 0
    %1361 = vmatprep.subr.bf16.mxu0 0
    %1362 = vmatpush1.bf16.msra.mxu0 0
    %1363 = vmatprep.subr.bf16.mxu0 0
    %1364 = vmatpush1.bf16.msra.mxu0 0
    %1365 = vmatprep.subr.bf16.mxu0 0
    %1366 = vmatpush1.bf16.msra.mxu0 0
    %1367 = vmatprep.subr.bf16.mxu0 0
    %1368 = vmatpush1.bf16.msra.mxu0 0
    %1369 = vmatprep.subr.bf16.mxu0 0
    %1370 = vmatpush1.bf16.msra.mxu0 0
    %1371 = vmatprep.subr.bf16.mxu0 0
    %1372 = vmatpush1.bf16.msra.mxu0 0
    %1373 = vmatprep.subr.bf16.mxu0 0
    %1374 = vmatpush1.bf16.msra.mxu0 0
    %1375 = vmatprep.subr.bf16.mxu0 0
    %1376 = vmatpush1.bf16.msra.mxu0 0
    %1377 = vmatprep.mubr.bf16.mxu0 0
    %1378 = vmatmul.mubr.bf16.gmra.mrb[0].mxu0 %v1343
    %v1379 = vpop.f32.mrb[0].mxu0
    %v1380 = vadd.f32 %v1315, %v1379
    %v1381 = vpop.f32.mrb[0].mxu0
    %v1382 = vpop.f32.mrb[0].mxu0
    %v1383 = vadd.f32 %v1315, %v1382
    %v1384 = vpop.f32.mrb[0].mxu0
    %1385 = vdwg.mxu0
    %v1386 = vadd.f32 %v1213, %v1380
    %v1387 = vadd.f32 %v1214, %v1383
    %v1388 = vld [vmem:[%s12] sm:$0x3]
    %v1389 = vsel %vm50, %v1386, 0.0
    %1390 = vadd.xlane.f32.xlu0 %v1389
    %v1391 = vpop.xlane.xlu0 %1390
    %v1392 = vsel %vm50, %v1387, 0.0
    %1393 = vadd.xlane.f32.xlu0 %v1392
    %v1394 = vpop.xlane.xlu0 %1393
    %v1395 = vmul.f32 %v1391, %v57
    %v1396 = vmul.f32 %v1394, %v57
    %v1397 = vmul.f32 %v1386, %v1386
    %v1398 = vmul.f32 %v1387, %v1387
    %v1399 = vsel %vm50, %v1397, 0.0
    %1400 = vadd.xlane.f32.xlu0 %v1399
    %v1401 = vpop.xlane.xlu0 %1400
    %v1402 = vsel %vm50, %v1398, 0.0
    %1403 = vadd.xlane.f32.xlu0 %v1402
    %v1404 = vpop.xlane.xlu0 %1403
    %v1405 = vmul.f32 %v1401, %v57
    %v1406 = vmul.f32 %v1404, %v57
    %v1407 = vmul.f32 %v1395, %v1395
    %v1408 = vmul.f32 %v1396, %v1396
    %v1409 = vsub.f32 %v1405, %v1407
    %v1410 = vsub.f32 %v1406, %v1408
    %v1411 = vsub.f32 %v1386, %v1395
    %v1412 = vsub.f32 %v1387, %v1396
    %v1413 = vadd.f32 %v1409, 1e-12
    %v1414 = vadd.f32 %v1410, 1e-12
    %v1415 = vrsqrt.pop %v1413
    %v1416 = vrsqrt.pop %v1414
    %v1417 = vmul.f32 %v1411, %v1415
    %v1418 = vmul.f32 %v1412, %v1416
    %v1419 = vlaneseq
    %v1420 = vshrl.u32 %v1419, 7
    %v1421 = vsub.s32 0, %v1420
    %v1422 = vrot.slane %v1388, %v1421
    %v1423 = vmul.f32 %v1417, %v1422
    %v1424 = vmul.f32 %v1418, %v1422
    %v1425 = vlaneseq
    %v1426 = vshrl.u32 %v1425, 7
    %v1427 = vsub.s32 1, %v1426
    %v1428 = vrot.slane %v1388, %v1427
    %v1429 = vadd.f32 %v1423, %v1428
    %v1430 = vadd.f32 %v1424, %v1428
    %v1431 = vpack.c.bf16 %v1430, %v1429
    %s1432 = scalar_lea.vmem %s3, 16
    %v1433 = vld [vmem:[%s1432] sm:$0xf]
    %v1434 = vld [vmem:[%s1432 + $0x4] sm:$0xf]
    %v1435 = vld [vmem:[%s1432 + $0x8] sm:$0xf]
    %v1436 = vld [vmem:[%s1432 + $0xc] sm:$0xf]
    %s1437 = scalar_lea.vmem %s4, 1
    %v1438 = vld [vmem:[%s1437] sm:$0x1]
    %v1440 = vlaneseq
    %v1441 = vshrl.u32 %v1440, 7
    %v1442 = vsub.s32 0, %v1441
    %v1443 = vrot.slane %v1438, %v1442
    %v1449 = vunpack.c.l.b16 %v1433
    %v1450 = vunpack.c.l.b16 %v1434
    %v1451 = vunpack.c.l.b16 %v1435
    %v1452 = vunpack.c.l.b16 %v1436
    %v1453 = vpack.c.b16 %v1450, %v1449
    %v1454 = vpack.c.b16 %v1452, %v1451
    %v1458 = vsel %vm50, %v1431, 0
    %1460 = vmatprep.subr.bf16.mxu0 0
    %1461 = vmatpush1.bf16.msra.mxu0 %v1453
    %1462 = vmatprep.subr.bf16.mxu0 0
    %1463 = vmatpush1.bf16.msra.mxu0 %v1454
    %1464 = vmatprep.subr.bf16.mxu0 0
    %1465 = vmatpush1.bf16.msra.mxu0 0
    %1466 = vmatprep.subr.bf16.mxu0 0
    %1467 = vmatpush1.bf16.msra.mxu0 0
    %1468 = vmatprep.subr.bf16.mxu0 0
    %1469 = vmatpush1.bf16.msra.mxu0 0
    %1470 = vmatprep.subr.bf16.mxu0 0
    %1471 = vmatpush1.bf16.msra.mxu0 0
    %1472 = vmatprep.subr.bf16.mxu0 0
    %1473 = vmatpush1.bf16.msra.mxu0 0
    %1474 = vmatprep.subr.bf16.mxu0 0
    %1475 = vmatpush1.bf16.msra.mxu0 0
    %1476 = vmatprep.subr.bf16.mxu0 0
    %1477 = vmatpush1.bf16.msra.mxu0 0
    %1478 = vmatprep.subr.bf16.mxu0 0
    %1479 = vmatpush1.bf16.msra.mxu0 0
    %1480 = vmatprep.subr.bf16.mxu0 0
    %1481 = vmatpush1.bf16.msra.mxu0 0
    %1482 = vmatprep.subr.bf16.mxu0 0
    %1483 = vmatpush1.bf16.msra.mxu0 0
    %1484 = vmatprep.subr.bf16.mxu0 0
    %1485 = vmatpush1.bf16.msra.mxu0 0
    %1486 = vmatprep.subr.bf16.mxu0 0
    %1487 = vmatpush1.bf16.msra.mxu0 0
    %1488 = vmatprep.subr.bf16.mxu0 0
    %1489 = vmatpush1.bf16.msra.mxu0 0
    %1490 = vmatprep.subr.bf16.mxu0 0
    %1491 = vmatpush1.bf16.msra.mxu0 0
    %1492 = vmatprep.mubr.bf16.mxu0 0
    %1493 = vmatmul.mubr.bf16.gmra.mrb[0].mxu0 %v1458
    %v1494 = vpop.f32.mrb[0].mxu0
    %v1495 = vadd.f32 %v1443, %v1494
    %v1496 = vpop.f32.mrb[0].mxu0
    %v1497 = vpop.f32.mrb[0].mxu0
    %v1498 = vadd.f32 %v1443, %v1497
    %v1499 = vpop.f32.mrb[0].mxu0
    %1500 = vdwg.mxu0
    %v1501 = vpack.c.bf16 %v1495, %v1495
    %1503 = vrot.lane.b32.xlu0 %v1501, 96
    %v1504 = vpop.permute.xlu0 %1503
    %v1506 = vsel %vm168, %v1501, 0
    %v1509 = vsel %vm168, %v1504, 0
    %1511 = vmatprep.subr.bf16.mxu0 0
    %1512 = vmatpush1.bf16.xpose.msra.mxu0 %v1509
    %1513 = vmatprep.subr.bf16.mxu0 0
    %1514 = vmatpush1.bf16.xpose.msra.mxu0 0
    %1515 = vmatprep.subr.bf16.mxu0 0
    %1516 = vmatpush1.bf16.xpose.msra.mxu0 0
    %1517 = vmatprep.subr.bf16.mxu0 0
    %1518 = vmatpush1.bf16.xpose.msra.mxu0 0
    %1519 = vmatprep.subr.bf16.mxu0 0
    %1520 = vmatpush1.bf16.xpose.msra.mxu0 0
    %1521 = vmatprep.subr.bf16.mxu0 0
    %1522 = vmatpush1.bf16.xpose.msra.mxu0 0
    %1523 = vmatprep.subr.bf16.mxu0 0
    %1524 = vmatpush1.bf16.xpose.msra.mxu0 0
    %1525 = vmatprep.subr.bf16.mxu0 0
    %1526 = vmatpush1.bf16.xpose.msra.mxu0 0
    %1527 = vmatprep.subr.bf16.mxu0 0
    %1528 = vmatpush1.bf16.xpose.msra.mxu0 0
    %1529 = vmatprep.subr.bf16.mxu0 0
    %1530 = vmatpush1.bf16.xpose.msra.mxu0 0
    %1531 = vmatprep.subr.bf16.mxu0 0
    %1532 = vmatpush1.bf16.xpose.msra.mxu0 0
    %1533 = vmatprep.subr.bf16.mxu0 0
    %1534 = vmatpush1.bf16.xpose.msra.mxu0 0
    %1535 = vmatprep.subr.bf16.mxu0 0
    %1536 = vmatpush1.bf16.xpose.msra.mxu0 0
    %1537 = vmatprep.subr.bf16.mxu0 0
    %1538 = vmatpush1.bf16.xpose.msra.mxu0 0
    %1539 = vmatprep.subr.bf16.mxu0 0
    %1540 = vmatpush1.bf16.xpose.msra.mxu0 0
    %1541 = vmatprep.subr.bf16.mxu0 0
    %1542 = vmatpush1.bf16.xpose.msra.mxu0 0
    %1543 = vmatprep.mubr.bf16.mxu0 0
    %1544 = vmatmul.mubr.bf16.gmra.mrb[0].mxu0 %v1506
    %v1545 = vpop.f32.mrb[0].mxu0
    %v1546 = vadd.f32 0.0, %v1545
    %v1547 = vpop.f32.mrb[0].mxu0
    %v1548 = vpop.f32.mrb[0].mxu0
    %v1549 = vpop.f32.mrb[0].mxu0
    %1550 = vdwg.mxu0
    %v1551 = vmul.f32 %v1546, 0.35355338
    %v1552 = vadd.f32 %v1551, %v219
    %v1553 = vsel %vm168, %v1552, -inf
    %1554 = vmax.xlane.f32.xlu0 %v1553
    %v1555 = vpop.xlane.xlu0 %1554
    %v1556 = vsub.f32 %v1552, %v1555
    %v1557 = vmul.f32 %v1556, 1.442695
    %v1558 = vpow.pop %v1557
    %v1559 = vsel %vm168, %v1558, 0.0
    %1560 = vadd.xlane.f32.xlu0 %v1559
    %v1561 = vpop.xlane.xlu0 %1560
    %v1562 = vrcp.pop %v1561
    %v1563 = vmul.f32 %v1558, %v1562
    %v1564 = vpack.c.bf16 %v1563, %v1563
    %1565 = vrot.lane.b32.xlu0 %v1501, 64
    %v1566 = vpop.permute.xlu0 %1565
    %v1568 = vsel %vm168, %v1564, 0
    %v1571 = vsel %vm238, %v1566, 0
    %1573 = vmatprep.subr.bf16.mxu0 0
    %1574 = vmatpush1.bf16.msra.mxu0 %v1571
    %1575 = vmatprep.subr.bf16.mxu0 0
    %1576 = vmatpush1.bf16.msra.mxu0 0
    %1577 = vmatprep.subr.bf16.mxu0 0
    %1578 = vmatpush1.bf16.msra.mxu0 0
    %1579 = vmatprep.subr.bf16.mxu0 0
    %1580 = vmatpush1.bf16.msra.mxu0 0
    %1581 = vmatprep.subr.bf16.mxu0 0
    %1582 = vmatpush1.bf16.msra.mxu0 0
    %1583 = vmatprep.subr.bf16.mxu0 0
    %1584 = vmatpush1.bf16.msra.mxu0 0
    %1585 = vmatprep.subr.bf16.mxu0 0
    %1586 = vmatpush1.bf16.msra.mxu0 0
    %1587 = vmatprep.subr.bf16.mxu0 0
    %1588 = vmatpush1.bf16.msra.mxu0 0
    %1589 = vmatprep.subr.bf16.mxu0 0
    %1590 = vmatpush1.bf16.msra.mxu0 0
    %1591 = vmatprep.subr.bf16.mxu0 0
    %1592 = vmatpush1.bf16.msra.mxu0 0
    %1593 = vmatprep.subr.bf16.mxu0 0
    %1594 = vmatpush1.bf16.msra.mxu0 0
    %1595 = vmatprep.subr.bf16.mxu0 0
    %1596 = vmatpush1.bf16.msra.mxu0 0
    %1597 = vmatprep.subr.bf16.mxu0 0
    %1598 = vmatpush1.bf16.msra.mxu0 0
    %1599 = vmatprep.subr.bf16.mxu0 0
    %1600 = vmatpush1.bf16.msra.mxu0 0
    %1601 = vmatprep.subr.bf16.mxu0 0
    %1602 = vmatpush1.bf16.msra.mxu0 0
    %1603 = vmatprep.subr.bf16.mxu0 0
    %1604 = vmatpush1.bf16.msra.mxu0 0
    %1605 = vmatprep.mubr.bf16.mxu0 0
    %1606 = vmatmul.mubr.bf16.gmra.mrb[0].mxu0 %v1568
    %v1607 = vpop.f32.mrb[0].mxu0
    %v1608 = vadd.f32 0.0, %v1607
    %v1609 = vpop.f32.mrb[0].mxu0
    %v1610 = vpop.f32.mrb[0].mxu0
    %v1611 = vpop.f32.mrb[0].mxu0
    %1612 = vdwg.mxu0
    %1613 = vrot.lane.b32.xlu0 %v1501, 120
    %v1614 = vpop.permute.xlu0 %1613
    %1615 = vrot.lane.b32.xlu0 %v1501, 88
    %v1616 = vpop.permute.xlu0 %1615
    %v1618 = vsel %vm168, %v1614, 0
    %v1621 = vsel %vm168, %v1616, 0
    %1623 = vmatprep.subr.bf16.mxu0 0
    %1624 = vmatpush1.bf16.xpose.msra.mxu0 %v1621
    %1625 = vmatprep.subr.bf16.mxu0 0
    %1626 = vmatpush1.bf16.xpose.msra.mxu0 0
    %1627 = vmatprep.subr.bf16.mxu0 0
    %1628 = vmatpush1.bf16.xpose.msra.mxu0 0
    %1629 = vmatprep.subr.bf16.mxu0 0
    %1630 = vmatpush1.bf16.xpose.msra.mxu0 0
    %1631 = vmatprep.subr.bf16.mxu0 0
    %1632 = vmatpush1.bf16.xpose.msra.mxu0 0
    %1633 = vmatprep.subr.bf16.mxu0 0
    %1634 = vmatpush1.bf16.xpose.msra.mxu0 0
    %1635 = vmatprep.subr.bf16.mxu0 0
    %1636 = vmatpush1.bf16.xpose.msra.mxu0 0
    %1637 = vmatprep.subr.bf16.mxu0 0
    %1638 = vmatpush1.bf16.xpose.msra.mxu0 0
    %1639 = vmatprep.subr.bf16.mxu0 0
    %1640 = vmatpush1.bf16.xpose.msra.mxu0 0
    %1641 = vmatprep.subr.bf16.mxu0 0
    %1642 = vmatpush1.bf16.xpose.msra.mxu0 0
    %1643 = vmatprep.subr.bf16.mxu0 0
    %1644 = vmatpush1.bf16.xpose.msra.mxu0 0
    %1645 = vmatprep.subr.bf16.mxu0 0
    %1646 = vmatpush1.bf16.xpose.msra.mxu0 0
    %1647 = vmatprep.subr.bf16.mxu0 0
    %1648 = vmatpush1.bf16.xpose.msra.mxu0 0
    %1649 = vmatprep.subr.bf16.mxu0 0
    %1650 = vmatpush1.bf16.xpose.msra.mxu0 0
    %1651 = vmatprep.subr.bf16.mxu0 0
    %1652 = vmatpush1.bf16.xpose.msra.mxu0 0
    %1653 = vmatprep.subr.bf16.mxu0 0
    %1654 = vmatpush1.bf16.xpose.msra.mxu0 0
    %1655 = vmatprep.mubr.bf16.mxu0 0
    %1656 = vmatmul.mubr.bf16.gmra.mrb[0].mxu0 %v1618
    %v1657 = vpop.f32.mrb[0].mxu0
    %v1658 = vadd.f32 0.0, %v1657
    %v1659 = vpop.f32.mrb[0].mxu0
    %v1660 = vpop.f32.mrb[0].mxu0
    %v1661 = vpop.f32.mrb[0].mxu0
    %1662 = vdwg.mxu0
    %v1663 = vmul.f32 %v1658, 0.35355338
    %v1664 = vadd.f32 %v1663, %v219
    %v1665 = vsel %vm168, %v1664, -inf
    %1666 = vmax.xlane.f32.xlu0 %v1665
    %v1667 = vpop.xlane.xlu0 %1666
    %v1668 = vsub.f32 %v1664, %v1667
    %v1669 = vmul.f32 %v1668, 1.442695
    %v1670 = vpow.pop %v1669
    %v1671 = vsel %vm168, %v1670, 0.0
    %1672 = vadd.xlane.f32.xlu0 %v1671
    %v1673 = vpop.xlane.xlu0 %1672
    %v1674 = vrcp.pop %v1673
    %v1675 = vmul.f32 %v1670, %v1674
    %v1676 = vpack.c.bf16 %v1675, %v1675
    %1677 = vrot.lane.b32.xlu0 %v1501, 56
    %v1678 = vpop.permute.xlu0 %1677
    %v1680 = vsel %vm168, %v1676, 0
    %v1683 = vsel %vm238, %v1678, 0
    %1685 = vmatprep.subr.bf16.mxu0 0
    %1686 = vmatpush1.bf16.msra.mxu0 %v1683
    %1687 = vmatprep.subr.bf16.mxu0 0
    %1688 = vmatpush1.bf16.msra.mxu0 0
    %1689 = vmatprep.subr.bf16.mxu0 0
    %1690 = vmatpush1.bf16.msra.mxu0 0
    %1691 = vmatprep.subr.bf16.mxu0 0
    %1692 = vmatpush1.bf16.msra.mxu0 0
    %1693 = vmatprep.subr.bf16.mxu0 0
    %1694 = vmatpush1.bf16.msra.mxu0 0
    %1695 = vmatprep.subr.bf16.mxu0 0
    %1696 = vmatpush1.bf16.msra.mxu0 0
    %1697 = vmatprep.subr.bf16.mxu0 0
    %1698 = vmatpush1.bf16.msra.mxu0 0
    %1699 = vmatprep.subr.bf16.mxu0 0
    %1700 = vmatpush1.bf16.msra.mxu0 0
    %1701 = vmatprep.subr.bf16.mxu0 0
    %1702 = vmatpush1.bf16.msra.mxu0 0
    %1703 = vmatprep.subr.bf16.mxu0 0
    %1704 = vmatpush1.bf16.msra.mxu0 0
    %1705 = vmatprep.subr.bf16.mxu0 0
    %1706 = vmatpush1.bf16.msra.mxu0 0
    %1707 = vmatprep.subr.bf16.mxu0 0
    %1708 = vmatpush1.bf16.msra.mxu0 0
    %1709 = vmatprep.subr.bf16.mxu0 0
    %1710 = vmatpush1.bf16.msra.mxu0 0
    %1711 = vmatprep.subr.bf16.mxu0 0
    %1712 = vmatpush1.bf16.msra.mxu0 0
    %1713 = vmatprep.subr.bf16.mxu0 0
    %1714 = vmatpush1.bf16.msra.mxu0 0
    %1715 = vmatprep.subr.bf16.mxu0 0
    %1716 = vmatpush1.bf16.msra.mxu0 0
    %1717 = vmatprep.mubr.bf16.mxu0 0
    %1718 = vmatmul.mubr.bf16.gmra.mrb[0].mxu0 %v1680
    %v1719 = vpop.f32.mrb[0].mxu0
    %v1720 = vadd.f32 0.0, %v1719
    %v1721 = vpop.f32.mrb[0].mxu0
    %v1722 = vpop.f32.mrb[0].mxu0
    %v1723 = vpop.f32.mrb[0].mxu0
    %1724 = vdwg.mxu0
    %1725 = vrot.lane.b32.xlu0 %v1501, 112
    %v1726 = vpop.permute.xlu0 %1725
    %1727 = vrot.lane.b32.xlu0 %v1501, 80
    %v1728 = vpop.permute.xlu0 %1727
    %v1730 = vsel %vm168, %v1726, 0
    %v1733 = vsel %vm168, %v1728, 0
    %1735 = vmatprep.subr.bf16.mxu0 0
    %1736 = vmatpush1.bf16.xpose.msra.mxu0 %v1733
    %1737 = vmatprep.subr.bf16.mxu0 0
    %1738 = vmatpush1.bf16.xpose.msra.mxu0 0
    %1739 = vmatprep.subr.bf16.mxu0 0
    %1740 = vmatpush1.bf16.xpose.msra.mxu0 0
    %1741 = vmatprep.subr.bf16.mxu0 0
    %1742 = vmatpush1.bf16.xpose.msra.mxu0 0
    %1743 = vmatprep.subr.bf16.mxu0 0
    %1744 = vmatpush1.bf16.xpose.msra.mxu0 0
    %1745 = vmatprep.subr.bf16.mxu0 0
    %1746 = vmatpush1.bf16.xpose.msra.mxu0 0
    %1747 = vmatprep.subr.bf16.mxu0 0
    %1748 = vmatpush1.bf16.xpose.msra.mxu0 0
    %1749 = vmatprep.subr.bf16.mxu0 0
    %1750 = vmatpush1.bf16.xpose.msra.mxu0 0
    %1751 = vmatprep.subr.bf16.mxu0 0
    %1752 = vmatpush1.bf16.xpose.msra.mxu0 0
    %1753 = vmatprep.subr.bf16.mxu0 0
    %1754 = vmatpush1.bf16.xpose.msra.mxu0 0
    %1755 = vmatprep.subr.bf16.mxu0 0
    %1756 = vmatpush1.bf16.xpose.msra.mxu0 0
    %1757 = vmatprep.subr.bf16.mxu0 0
    %1758 = vmatpush1.bf16.xpose.msra.mxu0 0
    %1759 = vmatprep.subr.bf16.mxu0 0
    %1760 = vmatpush1.bf16.xpose.msra.mxu0 0
    %1761 = vmatprep.subr.bf16.mxu0 0
    %1762 = vmatpush1.bf16.xpose.msra.mxu0 0
    %1763 = vmatprep.subr.bf16.mxu0 0
    %1764 = vmatpush1.bf16.xpose.msra.mxu0 0
    %1765 = vmatprep.subr.bf16.mxu0 0
    %1766 = vmatpush1.bf16.xpose.msra.mxu0 0
    %1767 = vmatprep.mubr.bf16.mxu0 0
    %1768 = vmatmul.mubr.bf16.gmra.mrb[0].mxu0 %v1730
    %v1769 = vpop.f32.mrb[0].mxu0
    %v1770 = vadd.f32 0.0, %v1769
    %v1771 = vpop.f32.mrb[0].mxu0
    %v1772 = vpop.f32.mrb[0].mxu0
    %v1773 = vpop.f32.mrb[0].mxu0
    %1774 = vdwg.mxu0
    %v1775 = vmul.f32 %v1770, 0.35355338
    %v1776 = vadd.f32 %v1775, %v219
    %v1777 = vsel %vm168, %v1776, -inf
    %1778 = vmax.xlane.f32.xlu0 %v1777
    %v1779 = vpop.xlane.xlu0 %1778
    %v1780 = vsub.f32 %v1776, %v1779
    %v1781 = vmul.f32 %v1780, 1.442695
    %v1782 = vpow.pop %v1781
    %v1783 = vsel %vm168, %v1782, 0.0
    %1784 = vadd.xlane.f32.xlu0 %v1783
    %v1785 = vpop.xlane.xlu0 %1784
    %v1786 = vrcp.pop %v1785
    %v1787 = vmul.f32 %v1782, %v1786
    %v1788 = vpack.c.bf16 %v1787, %v1787
    %1789 = vrot.lane.b32.xlu0 %v1501, 48
    %v1790 = vpop.permute.xlu0 %1789
    %v1792 = vsel %vm168, %v1788, 0
    %v1795 = vsel %vm238, %v1790, 0
    %1797 = vmatprep.subr.bf16.mxu0 0
    %1798 = vmatpush1.bf16.msra.mxu0 %v1795
    %1799 = vmatprep.subr.bf16.mxu0 0
    %1800 = vmatpush1.bf16.msra.mxu0 0
    %1801 = vmatprep.subr.bf16.mxu0 0
    %1802 = vmatpush1.bf16.msra.mxu0 0
    %1803 = vmatprep.subr.bf16.mxu0 0
    %1804 = vmatpush1.bf16.msra.mxu0 0
    %1805 = vmatprep.subr.bf16.mxu0 0
    %1806 = vmatpush1.bf16.msra.mxu0 0
    %1807 = vmatprep.subr.bf16.mxu0 0
    %1808 = vmatpush1.bf16.msra.mxu0 0
    %1809 = vmatprep.subr.bf16.mxu0 0
    %1810 = vmatpush1.bf16.msra.mxu0 0
    %1811 = vmatprep.subr.bf16.mxu0 0
    %1812 = vmatpush1.bf16.msra.mxu0 0
    %1813 = vmatprep.subr.bf16.mxu0 0
    %1814 = vmatpush1.bf16.msra.mxu0 0
    %1815 = vmatprep.subr.bf16.mxu0 0
    %1816 = vmatpush1.bf16.msra.mxu0 0
    %1817 = vmatprep.subr.bf16.mxu0 0
    %1818 = vmatpush1.bf16.msra.mxu0 0
    %1819 = vmatprep.subr.bf16.mxu0 0
    %1820 = vmatpush1.bf16.msra.mxu0 0
    %1821 = vmatprep.subr.bf16.mxu0 0
    %1822 = vmatpush1.bf16.msra.mxu0 0
    %1823 = vmatprep.subr.bf16.mxu0 0
    %1824 = vmatpush1.bf16.msra.mxu0 0
    %1825 = vmatprep.subr.bf16.mxu0 0
    %1826 = vmatpush1.bf16.msra.mxu0 0
    %1827 = vmatprep.subr.bf16.mxu0 0
    %1828 = vmatpush1.bf16.msra.mxu0 0
    %1829 = vmatprep.mubr.bf16.mxu0 0
    %1830 = vmatmul.mubr.bf16.gmra.mrb[0].mxu0 %v1792
    %v1831 = vpop.f32.mrb[0].mxu0
    %v1832 = vadd.f32 0.0, %v1831
    %v1833 = vpop.f32.mrb[0].mxu0
    %v1834 = vpop.f32.mrb[0].mxu0
    %v1835 = vpop.f32.mrb[0].mxu0
    %1836 = vdwg.mxu0
    %1837 = vrot.lane.b32.xlu0 %v1501, 104
    %v1838 = vpop.permute.xlu0 %1837
    %1839 = vrot.lane.b32.xlu0 %v1501, 72
    %v1840 = vpop.permute.xlu0 %1839
    %v1842 = vsel %vm168, %v1838, 0
    %v1845 = vsel %vm168, %v1840, 0
    %1847 = vmatprep.subr.bf16.mxu0 0
    %1848 = vmatpush1.bf16.xpose.msra.mxu0 %v1845
    %1849 = vmatprep.subr.bf16.mxu0 0
    %1850 = vmatpush1.bf16.xpose.msra.mxu0 0
    %1851 = vmatprep.subr.bf16.mxu0 0
    %1852 = vmatpush1.bf16.xpose.msra.mxu0 0
    %1853 = vmatprep.subr.bf16.mxu0 0
    %1854 = vmatpush1.bf16.xpose.msra.mxu0 0
    %1855 = vmatprep.subr.bf16.mxu0 0
    %1856 = vmatpush1.bf16.xpose.msra.mxu0 0
    %1857 = vmatprep.subr.bf16.mxu0 0
    %1858 = vmatpush1.bf16.xpose.msra.mxu0 0
    %1859 = vmatprep.subr.bf16.mxu0 0
    %1860 = vmatpush1.bf16.xpose.msra.mxu0 0
    %1861 = vmatprep.subr.bf16.mxu0 0
    %1862 = vmatpush1.bf16.xpose.msra.mxu0 0
    %1863 = vmatprep.subr.bf16.mxu0 0
    %1864 = vmatpush1.bf16.xpose.msra.mxu0 0
    %1865 = vmatprep.subr.bf16.mxu0 0
    %1866 = vmatpush1.bf16.xpose.msra.mxu0 0
    %1867 = vmatprep.subr.bf16.mxu0 0
    %1868 = vmatpush1.bf16.xpose.msra.mxu0 0
    %1869 = vmatprep.subr.bf16.mxu0 0
    %1870 = vmatpush1.bf16.xpose.msra.mxu0 0
    %1871 = vmatprep.subr.bf16.mxu0 0
    %1872 = vmatpush1.bf16.xpose.msra.mxu0 0
    %1873 = vmatprep.subr.bf16.mxu0 0
    %1874 = vmatpush1.bf16.xpose.msra.mxu0 0
    %1875 = vmatprep.subr.bf16.mxu0 0
    %1876 = vmatpush1.bf16.xpose.msra.mxu0 0
    %1877 = vmatprep.subr.bf16.mxu0 0
    %1878 = vmatpush1.bf16.xpose.msra.mxu0 0
    %1879 = vmatprep.mubr.bf16.mxu0 0
    %1880 = vmatmul.mubr.bf16.gmra.mrb[0].mxu0 %v1842
    %v1881 = vpop.f32.mrb[0].mxu0
    %v1882 = vadd.f32 0.0, %v1881
    %v1883 = vpop.f32.mrb[0].mxu0
    %v1884 = vpop.f32.mrb[0].mxu0
    %v1885 = vpop.f32.mrb[0].mxu0
    %1886 = vdwg.mxu0
    %v1887 = vmul.f32 %v1882, 0.35355338
    %v1888 = vadd.f32 %v1887, %v219
    %v1889 = vsel %vm168, %v1888, -inf
    %1890 = vmax.xlane.f32.xlu0 %v1889
    %v1891 = vpop.xlane.xlu0 %1890
    %v1892 = vsub.f32 %v1888, %v1891
    %v1893 = vmul.f32 %v1892, 1.442695
    %v1894 = vpow.pop %v1893
    %v1895 = vsel %vm168, %v1894, 0.0
    %1896 = vadd.xlane.f32.xlu0 %v1895
    %v1897 = vpop.xlane.xlu0 %1896
    %v1898 = vrcp.pop %v1897
    %v1899 = vmul.f32 %v1894, %v1898
    %v1900 = vpack.c.bf16 %v1899, %v1899
    %1901 = vrot.lane.b32.xlu0 %v1501, 40
    %v1902 = vpop.permute.xlu0 %1901
    %v1904 = vsel %vm168, %v1900, 0
    %v1907 = vsel %vm238, %v1902, 0
    %1909 = vmatprep.subr.bf16.mxu0 0
    %1910 = vmatpush1.bf16.msra.mxu0 %v1907
    %1911 = vmatprep.subr.bf16.mxu0 0
    %1912 = vmatpush1.bf16.msra.mxu0 0
    %1913 = vmatprep.subr.bf16.mxu0 0
    %1914 = vmatpush1.bf16.msra.mxu0 0
    %1915 = vmatprep.subr.bf16.mxu0 0
    %1916 = vmatpush1.bf16.msra.mxu0 0
    %1917 = vmatprep.subr.bf16.mxu0 0
    %1918 = vmatpush1.bf16.msra.mxu0 0
    %1919 = vmatprep.subr.bf16.mxu0 0
    %1920 = vmatpush1.bf16.msra.mxu0 0
    %1921 = vmatprep.subr.bf16.mxu0 0
    %1922 = vmatpush1.bf16.msra.mxu0 0
    %1923 = vmatprep.subr.bf16.mxu0 0
    %1924 = vmatpush1.bf16.msra.mxu0 0
    %1925 = vmatprep.subr.bf16.mxu0 0
    %1926 = vmatpush1.bf16.msra.mxu0 0
    %1927 = vmatprep.subr.bf16.mxu0 0
    %1928 = vmatpush1.bf16.msra.mxu0 0
    %1929 = vmatprep.subr.bf16.mxu0 0
    %1930 = vmatpush1.bf16.msra.mxu0 0
    %1931 = vmatprep.subr.bf16.mxu0 0
    %1932 = vmatpush1.bf16.msra.mxu0 0
    %1933 = vmatprep.subr.bf16.mxu0 0
    %1934 = vmatpush1.bf16.msra.mxu0 0
    %1935 = vmatprep.subr.bf16.mxu0 0
    %1936 = vmatpush1.bf16.msra.mxu0 0
    %1937 = vmatprep.subr.bf16.mxu0 0
    %1938 = vmatpush1.bf16.msra.mxu0 0
    %1939 = vmatprep.subr.bf16.mxu0 0
    %1940 = vmatpush1.bf16.msra.mxu0 0
    %1941 = vmatprep.mubr.bf16.mxu0 0
    %1942 = vmatmul.mubr.bf16.gmra.mrb[0].mxu0 %v1904
    %v1943 = vpop.f32.mrb[0].mxu0
    %v1944 = vadd.f32 0.0, %v1943
    %v1945 = vpop.f32.mrb[0].mxu0
    %v1946 = vpop.f32.mrb[0].mxu0
    %v1947 = vpop.f32.mrb[0].mxu0
    %1948 = vdwg.mxu0
    %1950 = vrot.lane.b32.xlu0 %v1720, 8
    %v1951 = vpop.permute.xlu0 %1950
    %1954 = vrot.lane.b32.xlu0 %v1832, 16
    %v1955 = vpop.permute.xlu0 %1954
    %1958 = vrot.lane.b32.xlu0 %v1944, 24
    %v1959 = vpop.permute.xlu0 %1958
    %v1961 = vsel %vm168, %v1608, %v1951
    %v1962 = vsel %vm631, %v1961, %v1955
    %v1963 = vsel %vm633, %v1962, %v1959
    %v1964 = vpack.c.bf16 %v1498, %v1498
    %1966 = vrot.lane.b32.xlu0 %v1964, 96
    %v1967 = vpop.permute.xlu0 %1966
    %v1969 = vsel %vm168, %v1964, 0
    %v1972 = vsel %vm168, %v1967, 0
    %1974 = vmatprep.subr.bf16.mxu0 0
    %1975 = vmatpush1.bf16.xpose.msra.mxu0 %v1972
    %1976 = vmatprep.subr.bf16.mxu0 0
    %1977 = vmatpush1.bf16.xpose.msra.mxu0 0
    %1978 = vmatprep.subr.bf16.mxu0 0
    %1979 = vmatpush1.bf16.xpose.msra.mxu0 0
    %1980 = vmatprep.subr.bf16.mxu0 0
    %1981 = vmatpush1.bf16.xpose.msra.mxu0 0
    %1982 = vmatprep.subr.bf16.mxu0 0
    %1983 = vmatpush1.bf16.xpose.msra.mxu0 0
    %1984 = vmatprep.subr.bf16.mxu0 0
    %1985 = vmatpush1.bf16.xpose.msra.mxu0 0
    %1986 = vmatprep.subr.bf16.mxu0 0
    %1987 = vmatpush1.bf16.xpose.msra.mxu0 0
    %1988 = vmatprep.subr.bf16.mxu0 0
    %1989 = vmatpush1.bf16.xpose.msra.mxu0 0
    %1990 = vmatprep.subr.bf16.mxu0 0
    %1991 = vmatpush1.bf16.xpose.msra.mxu0 0
    %1992 = vmatprep.subr.bf16.mxu0 0
    %1993 = vmatpush1.bf16.xpose.msra.mxu0 0
    %1994 = vmatprep.subr.bf16.mxu0 0
    %1995 = vmatpush1.bf16.xpose.msra.mxu0 0
    %1996 = vmatprep.subr.bf16.mxu0 0
    %1997 = vmatpush1.bf16.xpose.msra.mxu0 0
    %1998 = vmatprep.subr.bf16.mxu0 0
    %1999 = vmatpush1.bf16.xpose.msra.mxu0 0
    %2000 = vmatprep.subr.bf16.mxu0 0
    %2001 = vmatpush1.bf16.xpose.msra.mxu0 0
    %2002 = vmatprep.subr.bf16.mxu0 0
    %2003 = vmatpush1.bf16.xpose.msra.mxu0 0
    %2004 = vmatprep.subr.bf16.mxu0 0
    %2005 = vmatpush1.bf16.xpose.msra.mxu0 0
    %2006 = vmatprep.mubr.bf16.mxu0 0
    %2007 = vmatmul.mubr.bf16.gmra.mrb[0].mxu0 %v1969
    %v2008 = vpop.f32.mrb[0].mxu0
    %v2009 = vadd.f32 0.0, %v2008
    %v2010 = vpop.f32.mrb[0].mxu0
    %v2011 = vpop.f32.mrb[0].mxu0
    %v2012 = vpop.f32.mrb[0].mxu0
    %2013 = vdwg.mxu0
    %v2014 = vmul.f32 %v2009, 0.35355338
    %v2015 = vadd.f32 %v2014, %v689
    %v2016 = vsel %vm168, %v2015, -inf
    %2017 = vmax.xlane.f32.xlu0 %v2016
    %v2018 = vpop.xlane.xlu0 %2017
    %v2019 = vsub.f32 %v2015, %v2018
    %v2020 = vmul.f32 %v2019, 1.442695
    %v2021 = vpow.pop %v2020
    %v2022 = vsel %vm168, %v2021, 0.0
    %2023 = vadd.xlane.f32.xlu0 %v2022
    %v2024 = vpop.xlane.xlu0 %2023
    %v2025 = vrcp.pop %v2024
    %v2026 = vmul.f32 %v2021, %v2025
    %v2027 = vpack.c.bf16 %v2026, %v2026
    %2028 = vrot.lane.b32.xlu0 %v1964, 64
    %v2029 = vpop.permute.xlu0 %2028
    %v2031 = vsel %vm168, %v2027, 0
    %v2034 = vsel %vm238, %v2029, 0
    %2036 = vmatprep.subr.bf16.mxu0 0
    %2037 = vmatpush1.bf16.msra.mxu0 %v2034
    %2038 = vmatprep.subr.bf16.mxu0 0
    %2039 = vmatpush1.bf16.msra.mxu0 0
    %2040 = vmatprep.subr.bf16.mxu0 0
    %2041 = vmatpush1.bf16.msra.mxu0 0
    %2042 = vmatprep.subr.bf16.mxu0 0
    %2043 = vmatpush1.bf16.msra.mxu0 0
    %2044 = vmatprep.subr.bf16.mxu0 0
    %2045 = vmatpush1.bf16.msra.mxu0 0
    %2046 = vmatprep.subr.bf16.mxu0 0
    %2047 = vmatpush1.bf16.msra.mxu0 0
    %2048 = vmatprep.subr.bf16.mxu0 0
    %2049 = vmatpush1.bf16.msra.mxu0 0
    %2050 = vmatprep.subr.bf16.mxu0 0
    %2051 = vmatpush1.bf16.msra.mxu0 0
    %2052 = vmatprep.subr.bf16.mxu0 0
    %2053 = vmatpush1.bf16.msra.mxu0 0
    %2054 = vmatprep.subr.bf16.mxu0 0
    %2055 = vmatpush1.bf16.msra.mxu0 0
    %2056 = vmatprep.subr.bf16.mxu0 0
    %2057 = vmatpush1.bf16.msra.mxu0 0
    %2058 = vmatprep.subr.bf16.mxu0 0
    %2059 = vmatpush1.bf16.msra.mxu0 0
    %2060 = vmatprep.subr.bf16.mxu0 0
    %2061 = vmatpush1.bf16.msra.mxu0 0
    %2062 = vmatprep.subr.bf16.mxu0 0
    %2063 = vmatpush1.bf16.msra.mxu0 0
    %2064 = vmatprep.subr.bf16.mxu0 0
    %2065 = vmatpush1.bf16.msra.mxu0 0
    %2066 = vmatprep.subr.bf16.mxu0 0
    %2067 = vmatpush1.bf16.msra.mxu0 0
    %2068 = vmatprep.mubr.bf16.mxu0 0
    %2069 = vmatmul.mubr.bf16.gmra.mrb[0].mxu0 %v2031
    %v2070 = vpop.f32.mrb[0].mxu0
    %v2071 = vadd.f32 0.0, %v2070
    %v2072 = vpop.f32.mrb[0].mxu0
    %v2073 = vpop.f32.mrb[0].mxu0
    %v2074 = vpop.f32.mrb[0].mxu0
    %2075 = vdwg.mxu0
    %2076 = vrot.lane.b32.xlu0 %v1964, 120
    %v2077 = vpop.permute.xlu0 %2076
    %2078 = vrot.lane.b32.xlu0 %v1964, 88
    %v2079 = vpop.permute.xlu0 %2078
    %v2081 = vsel %vm168, %v2077, 0
    %v2084 = vsel %vm168, %v2079, 0
    %2086 = vmatprep.subr.bf16.mxu0 0
    %2087 = vmatpush1.bf16.xpose.msra.mxu0 %v2084
    %2088 = vmatprep.subr.bf16.mxu0 0
    %2089 = vmatpush1.bf16.xpose.msra.mxu0 0
    %2090 = vmatprep.subr.bf16.mxu0 0
    %2091 = vmatpush1.bf16.xpose.msra.mxu0 0
    %2092 = vmatprep.subr.bf16.mxu0 0
    %2093 = vmatpush1.bf16.xpose.msra.mxu0 0
    %2094 = vmatprep.subr.bf16.mxu0 0
    %2095 = vmatpush1.bf16.xpose.msra.mxu0 0
    %2096 = vmatprep.subr.bf16.mxu0 0
    %2097 = vmatpush1.bf16.xpose.msra.mxu0 0
    %2098 = vmatprep.subr.bf16.mxu0 0
    %2099 = vmatpush1.bf16.xpose.msra.mxu0 0
    %2100 = vmatprep.subr.bf16.mxu0 0
    %2101 = vmatpush1.bf16.xpose.msra.mxu0 0
    %2102 = vmatprep.subr.bf16.mxu0 0
    %2103 = vmatpush1.bf16.xpose.msra.mxu0 0
    %2104 = vmatprep.subr.bf16.mxu0 0
    %2105 = vmatpush1.bf16.xpose.msra.mxu0 0
    %2106 = vmatprep.subr.bf16.mxu0 0
    %2107 = vmatpush1.bf16.xpose.msra.mxu0 0
    %2108 = vmatprep.subr.bf16.mxu0 0
    %2109 = vmatpush1.bf16.xpose.msra.mxu0 0
    %2110 = vmatprep.subr.bf16.mxu0 0
    %2111 = vmatpush1.bf16.xpose.msra.mxu0 0
    %2112 = vmatprep.subr.bf16.mxu0 0
    %2113 = vmatpush1.bf16.xpose.msra.mxu0 0
    %2114 = vmatprep.subr.bf16.mxu0 0
    %2115 = vmatpush1.bf16.xpose.msra.mxu0 0
    %2116 = vmatprep.subr.bf16.mxu0 0
    %2117 = vmatpush1.bf16.xpose.msra.mxu0 0
    %2118 = vmatprep.mubr.bf16.mxu0 0
    %2119 = vmatmul.mubr.bf16.gmra.mrb[0].mxu0 %v2081
    %v2120 = vpop.f32.mrb[0].mxu0
    %v2121 = vadd.f32 0.0, %v2120
    %v2122 = vpop.f32.mrb[0].mxu0
    %v2123 = vpop.f32.mrb[0].mxu0
    %v2124 = vpop.f32.mrb[0].mxu0
    %2125 = vdwg.mxu0
    %v2126 = vmul.f32 %v2121, 0.35355338
    %v2127 = vadd.f32 %v2126, %v689
    %v2128 = vsel %vm168, %v2127, -inf
    %2129 = vmax.xlane.f32.xlu0 %v2128
    %v2130 = vpop.xlane.xlu0 %2129
    %v2131 = vsub.f32 %v2127, %v2130
    %v2132 = vmul.f32 %v2131, 1.442695
    %v2133 = vpow.pop %v2132
    %v2134 = vsel %vm168, %v2133, 0.0
    %2135 = vadd.xlane.f32.xlu0 %v2134
    %v2136 = vpop.xlane.xlu0 %2135
    %v2137 = vrcp.pop %v2136
    %v2138 = vmul.f32 %v2133, %v2137
    %v2139 = vpack.c.bf16 %v2138, %v2138
    %2140 = vrot.lane.b32.xlu0 %v1964, 56
    %v2141 = vpop.permute.xlu0 %2140
    %v2143 = vsel %vm168, %v2139, 0
    %v2146 = vsel %vm238, %v2141, 0
    %2148 = vmatprep.subr.bf16.mxu0 0
    %2149 = vmatpush1.bf16.msra.mxu0 %v2146
    %2150 = vmatprep.subr.bf16.mxu0 0
    %2151 = vmatpush1.bf16.msra.mxu0 0
    %2152 = vmatprep.subr.bf16.mxu0 0
    %2153 = vmatpush1.bf16.msra.mxu0 0
    %2154 = vmatprep.subr.bf16.mxu0 0
    %2155 = vmatpush1.bf16.msra.mxu0 0
    %2156 = vmatprep.subr.bf16.mxu0 0
    %2157 = vmatpush1.bf16.msra.mxu0 0
    %2158 = vmatprep.subr.bf16.mxu0 0
    %2159 = vmatpush1.bf16.msra.mxu0 0
    %2160 = vmatprep.subr.bf16.mxu0 0
    %2161 = vmatpush1.bf16.msra.mxu0 0
    %2162 = vmatprep.subr.bf16.mxu0 0
    %2163 = vmatpush1.bf16.msra.mxu0 0
    %2164 = vmatprep.subr.bf16.mxu0 0
    %2165 = vmatpush1.bf16.msra.mxu0 0
    %2166 = vmatprep.subr.bf16.mxu0 0
    %2167 = vmatpush1.bf16.msra.mxu0 0
    %2168 = vmatprep.subr.bf16.mxu0 0
    %2169 = vmatpush1.bf16.msra.mxu0 0
    %2170 = vmatprep.subr.bf16.mxu0 0
    %2171 = vmatpush1.bf16.msra.mxu0 0
    %2172 = vmatprep.subr.bf16.mxu0 0
    %2173 = vmatpush1.bf16.msra.mxu0 0
    %2174 = vmatprep.subr.bf16.mxu0 0
    %2175 = vmatpush1.bf16.msra.mxu0 0
    %2176 = vmatprep.subr.bf16.mxu0 0
    %2177 = vmatpush1.bf16.msra.mxu0 0
    %2178 = vmatprep.subr.bf16.mxu0 0
    %2179 = vmatpush1.bf16.msra.mxu0 0
    %2180 = vmatprep.mubr.bf16.mxu0 0
    %2181 = vmatmul.mubr.bf16.gmra.mrb[0].mxu0 %v2143
    %v2182 = vpop.f32.mrb[0].mxu0
    %v2183 = vadd.f32 0.0, %v2182
    %v2184 = vpop.f32.mrb[0].mxu0
    %v2185 = vpop.f32.mrb[0].mxu0
    %v2186 = vpop.f32.mrb[0].mxu0
    %2187 = vdwg.mxu0
    %2188 = vrot.lane.b32.xlu0 %v1964, 112
    %v2189 = vpop.permute.xlu0 %2188
    %2190 = vrot.lane.b32.xlu0 %v1964, 80
    %v2191 = vpop.permute.xlu0 %2190
    %v2193 = vsel %vm168, %v2189, 0
    %v2196 = vsel %vm168, %v2191, 0
    %2198 = vmatprep.subr.bf16.mxu0 0
    %2199 = vmatpush1.bf16.xpose.msra.mxu0 %v2196
    %2200 = vmatprep.subr.bf16.mxu0 0
    %2201 = vmatpush1.bf16.xpose.msra.mxu0 0
    %2202 = vmatprep.subr.bf16.mxu0 0
    %2203 = vmatpush1.bf16.xpose.msra.mxu0 0
    %2204 = vmatprep.subr.bf16.mxu0 0
    %2205 = vmatpush1.bf16.xpose.msra.mxu0 0
    %2206 = vmatprep.subr.bf16.mxu0 0
    %2207 = vmatpush1.bf16.xpose.msra.mxu0 0
    %2208 = vmatprep.subr.bf16.mxu0 0
    %2209 = vmatpush1.bf16.xpose.msra.mxu0 0
    %2210 = vmatprep.subr.bf16.mxu0 0
    %2211 = vmatpush1.bf16.xpose.msra.mxu0 0
    %2212 = vmatprep.subr.bf16.mxu0 0
    %2213 = vmatpush1.bf16.xpose.msra.mxu0 0
    %2214 = vmatprep.subr.bf16.mxu0 0
    %2215 = vmatpush1.bf16.xpose.msra.mxu0 0
    %2216 = vmatprep.subr.bf16.mxu0 0
    %2217 = vmatpush1.bf16.xpose.msra.mxu0 0
    %2218 = vmatprep.subr.bf16.mxu0 0
    %2219 = vmatpush1.bf16.xpose.msra.mxu0 0
    %2220 = vmatprep.subr.bf16.mxu0 0
    %2221 = vmatpush1.bf16.xpose.msra.mxu0 0
    %2222 = vmatprep.subr.bf16.mxu0 0
    %2223 = vmatpush1.bf16.xpose.msra.mxu0 0
    %2224 = vmatprep.subr.bf16.mxu0 0
    %2225 = vmatpush1.bf16.xpose.msra.mxu0 0
    %2226 = vmatprep.subr.bf16.mxu0 0
    %2227 = vmatpush1.bf16.xpose.msra.mxu0 0
    %2228 = vmatprep.subr.bf16.mxu0 0
    %2229 = vmatpush1.bf16.xpose.msra.mxu0 0
    %2230 = vmatprep.mubr.bf16.mxu0 0
    %2231 = vmatmul.mubr.bf16.gmra.mrb[0].mxu0 %v2193
    %v2232 = vpop.f32.mrb[0].mxu0
    %v2233 = vadd.f32 0.0, %v2232
    %v2234 = vpop.f32.mrb[0].mxu0
    %v2235 = vpop.f32.mrb[0].mxu0
    %v2236 = vpop.f32.mrb[0].mxu0
    %2237 = vdwg.mxu0
    %v2238 = vmul.f32 %v2233, 0.35355338
    %v2239 = vadd.f32 %v2238, %v689
    %v2240 = vsel %vm168, %v2239, -inf
    %2241 = vmax.xlane.f32.xlu0 %v2240
    %v2242 = vpop.xlane.xlu0 %2241
    %v2243 = vsub.f32 %v2239, %v2242
    %v2244 = vmul.f32 %v2243, 1.442695
    %v2245 = vpow.pop %v2244
    %v2246 = vsel %vm168, %v2245, 0.0
    %2247 = vadd.xlane.f32.xlu0 %v2246
    %v2248 = vpop.xlane.xlu0 %2247
    %v2249 = vrcp.pop %v2248
    %v2250 = vmul.f32 %v2245, %v2249
    %v2251 = vpack.c.bf16 %v2250, %v2250
    %2252 = vrot.lane.b32.xlu0 %v1964, 48
    %v2253 = vpop.permute.xlu0 %2252
    %v2255 = vsel %vm168, %v2251, 0
    %v2258 = vsel %vm238, %v2253, 0
    %2260 = vmatprep.subr.bf16.mxu0 0
    %2261 = vmatpush1.bf16.msra.mxu0 %v2258
    %2262 = vmatprep.subr.bf16.mxu0 0
    %2263 = vmatpush1.bf16.msra.mxu0 0
    %2264 = vmatprep.subr.bf16.mxu0 0
    %2265 = vmatpush1.bf16.msra.mxu0 0
    %2266 = vmatprep.subr.bf16.mxu0 0
    %2267 = vmatpush1.bf16.msra.mxu0 0
    %2268 = vmatprep.subr.bf16.mxu0 0
    %2269 = vmatpush1.bf16.msra.mxu0 0
    %2270 = vmatprep.subr.bf16.mxu0 0
    %2271 = vmatpush1.bf16.msra.mxu0 0
    %2272 = vmatprep.subr.bf16.mxu0 0
    %2273 = vmatpush1.bf16.msra.mxu0 0
    %2274 = vmatprep.subr.bf16.mxu0 0
    %2275 = vmatpush1.bf16.msra.mxu0 0
    %2276 = vmatprep.subr.bf16.mxu0 0
    %2277 = vmatpush1.bf16.msra.mxu0 0
    %2278 = vmatprep.subr.bf16.mxu0 0
    %2279 = vmatpush1.bf16.msra.mxu0 0
    %2280 = vmatprep.subr.bf16.mxu0 0
    %2281 = vmatpush1.bf16.msra.mxu0 0
    %2282 = vmatprep.subr.bf16.mxu0 0
    %2283 = vmatpush1.bf16.msra.mxu0 0
    %2284 = vmatprep.subr.bf16.mxu0 0
    %2285 = vmatpush1.bf16.msra.mxu0 0
    %2286 = vmatprep.subr.bf16.mxu0 0
    %2287 = vmatpush1.bf16.msra.mxu0 0
    %2288 = vmatprep.subr.bf16.mxu0 0
    %2289 = vmatpush1.bf16.msra.mxu0 0
    %2290 = vmatprep.subr.bf16.mxu0 0
    %2291 = vmatpush1.bf16.msra.mxu0 0
    %2292 = vmatprep.mubr.bf16.mxu0 0
    %2293 = vmatmul.mubr.bf16.gmra.mrb[0].mxu0 %v2255
    %v2294 = vpop.f32.mrb[0].mxu0
    %v2295 = vadd.f32 0.0, %v2294
    %v2296 = vpop.f32.mrb[0].mxu0
    %v2297 = vpop.f32.mrb[0].mxu0
    %v2298 = vpop.f32.mrb[0].mxu0
    %2299 = vdwg.mxu0
    %2300 = vrot.lane.b32.xlu0 %v1964, 104
    %v2301 = vpop.permute.xlu0 %2300
    %2302 = vrot.lane.b32.xlu0 %v1964, 72
    %v2303 = vpop.permute.xlu0 %2302
    %v2305 = vsel %vm168, %v2301, 0
    %v2308 = vsel %vm168, %v2303, 0
    %2310 = vmatprep.subr.bf16.mxu0 0
    %2311 = vmatpush1.bf16.xpose.msra.mxu0 %v2308
    %2312 = vmatprep.subr.bf16.mxu0 0
    %2313 = vmatpush1.bf16.xpose.msra.mxu0 0
    %2314 = vmatprep.subr.bf16.mxu0 0
    %2315 = vmatpush1.bf16.xpose.msra.mxu0 0
    %2316 = vmatprep.subr.bf16.mxu0 0
    %2317 = vmatpush1.bf16.xpose.msra.mxu0 0
    %2318 = vmatprep.subr.bf16.mxu0 0
    %2319 = vmatpush1.bf16.xpose.msra.mxu0 0
    %2320 = vmatprep.subr.bf16.mxu0 0
    %2321 = vmatpush1.bf16.xpose.msra.mxu0 0
    %2322 = vmatprep.subr.bf16.mxu0 0
    %2323 = vmatpush1.bf16.xpose.msra.mxu0 0
    %2324 = vmatprep.subr.bf16.mxu0 0
    %2325 = vmatpush1.bf16.xpose.msra.mxu0 0
    %2326 = vmatprep.subr.bf16.mxu0 0
    %2327 = vmatpush1.bf16.xpose.msra.mxu0 0
    %2328 = vmatprep.subr.bf16.mxu0 0
    %2329 = vmatpush1.bf16.xpose.msra.mxu0 0
    %2330 = vmatprep.subr.bf16.mxu0 0
    %2331 = vmatpush1.bf16.xpose.msra.mxu0 0
    %2332 = vmatprep.subr.bf16.mxu0 0
    %2333 = vmatpush1.bf16.xpose.msra.mxu0 0
    %2334 = vmatprep.subr.bf16.mxu0 0
    %2335 = vmatpush1.bf16.xpose.msra.mxu0 0
    %2336 = vmatprep.subr.bf16.mxu0 0
    %2337 = vmatpush1.bf16.xpose.msra.mxu0 0
    %2338 = vmatprep.subr.bf16.mxu0 0
    %2339 = vmatpush1.bf16.xpose.msra.mxu0 0
    %2340 = vmatprep.subr.bf16.mxu0 0
    %2341 = vmatpush1.bf16.xpose.msra.mxu0 0
    %2342 = vmatprep.mubr.bf16.mxu0 0
    %2343 = vmatmul.mubr.bf16.gmra.mrb[0].mxu0 %v2305
    %v2344 = vpop.f32.mrb[0].mxu0
    %v2345 = vadd.f32 0.0, %v2344
    %v2346 = vpop.f32.mrb[0].mxu0
    %v2347 = vpop.f32.mrb[0].mxu0
    %v2348 = vpop.f32.mrb[0].mxu0
    %2349 = vdwg.mxu0
    %v2350 = vmul.f32 %v2345, 0.35355338
    %v2351 = vadd.f32 %v2350, %v689
    %v2352 = vsel %vm168, %v2351, -inf
    %2353 = vmax.xlane.f32.xlu0 %v2352
    %v2354 = vpop.xlane.xlu0 %2353
    %v2355 = vsub.f32 %v2351, %v2354
    %v2356 = vmul.f32 %v2355, 1.442695
    %v2357 = vpow.pop %v2356
    %v2358 = vsel %vm168, %v2357, 0.0
    %2359 = vadd.xlane.f32.xlu0 %v2358
    %v2360 = vpop.xlane.xlu0 %2359
    %v2361 = vrcp.pop %v2360
    %v2362 = vmul.f32 %v2357, %v2361
    %v2363 = vpack.c.bf16 %v2362, %v2362
    %2364 = vrot.lane.b32.xlu0 %v1964, 40
    %v2365 = vpop.permute.xlu0 %2364
    %v2367 = vsel %vm168, %v2363, 0
    %v2370 = vsel %vm238, %v2365, 0
    %2372 = vmatprep.subr.bf16.mxu0 0
    %2373 = vmatpush1.bf16.msra.mxu0 %v2370
    %2374 = vmatprep.subr.bf16.mxu0 0
    %2375 = vmatpush1.bf16.msra.mxu0 0
    %2376 = vmatprep.subr.bf16.mxu0 0
    %2377 = vmatpush1.bf16.msra.mxu0 0
    %2378 = vmatprep.subr.bf16.mxu0 0
    %2379 = vmatpush1.bf16.msra.mxu0 0
    %2380 = vmatprep.subr.bf16.mxu0 0
    %2381 = vmatpush1.bf16.msra.mxu0 0
    %2382 = vmatprep.subr.bf16.mxu0 0
    %2383 = vmatpush1.bf16.msra.mxu0 0
    %2384 = vmatprep.subr.bf16.mxu0 0
    %2385 = vmatpush1.bf16.msra.mxu0 0
    %2386 = vmatprep.subr.bf16.mxu0 0
    %2387 = vmatpush1.bf16.msra.mxu0 0
    %2388 = vmatprep.subr.bf16.mxu0 0
    %2389 = vmatpush1.bf16.msra.mxu0 0
    %2390 = vmatprep.subr.bf16.mxu0 0
    %2391 = vmatpush1.bf16.msra.mxu0 0
    %2392 = vmatprep.subr.bf16.mxu0 0
    %2393 = vmatpush1.bf16.msra.mxu0 0
    %2394 = vmatprep.subr.bf16.mxu0 0
    %2395 = vmatpush1.bf16.msra.mxu0 0
    %2396 = vmatprep.subr.bf16.mxu0 0
    %2397 = vmatpush1.bf16.msra.mxu0 0
    %2398 = vmatprep.subr.bf16.mxu0 0
    %2399 = vmatpush1.bf16.msra.mxu0 0
    %2400 = vmatprep.subr.bf16.mxu0 0
    %2401 = vmatpush1.bf16.msra.mxu0 0
    %2402 = vmatprep.subr.bf16.mxu0 0
    %2403 = vmatpush1.bf16.msra.mxu0 0
    %2404 = vmatprep.mubr.bf16.mxu0 0
    %2405 = vmatmul.mubr.bf16.gmra.mrb[0].mxu0 %v2367
    %v2406 = vpop.f32.mrb[0].mxu0
    %v2407 = vadd.f32 0.0, %v2406
    %v2408 = vpop.f32.mrb[0].mxu0
    %v2409 = vpop.f32.mrb[0].mxu0
    %v2410 = vpop.f32.mrb[0].mxu0
    %2411 = vdwg.mxu0
    %2413 = vrot.lane.b32.xlu0 %v2183, 8
    %v2414 = vpop.permute.xlu0 %2413
    %2417 = vrot.lane.b32.xlu0 %v2295, 16
    %v2418 = vpop.permute.xlu0 %2417
    %2421 = vrot.lane.b32.xlu0 %v2407, 24
    %v2422 = vpop.permute.xlu0 %2421
    %v2424 = vsel %vm168, %v2071, %v2414
    %v2425 = vsel %vm631, %v2424, %v2418
    %v2426 = vsel %vm633, %v2425, %v2422
    %v2427 = vpack.c.bf16 %v2426, %v1963
    %s2428 = scalar_lea.vmem %s5, 16
    %v2429 = vld [vmem:[%s2428] sm:$0xf]
    %v2430 = vld [vmem:[%s2428 + $0x4] sm:$0xf]
    %v2431 = vld [vmem:[%s2428 + $0x8] sm:$0xf]
    %v2432 = vld [vmem:[%s2428 + $0xc] sm:$0xf]
    %s2433 = scalar_lea.vmem %s6, 1
    %v2434 = vld [vmem:[%s2433] sm:$0x1]
    %v2436 = vlaneseq
    %v2437 = vshrl.u32 %v2436, 7
    %v2438 = vsub.s32 0, %v2437
    %v2439 = vrot.slane %v2434, %v2438
    %v2445 = vunpack.c.l.b16 %v2429
    %v2446 = vunpack.c.l.b16 %v2430
    %v2447 = vunpack.c.l.b16 %v2431
    %v2448 = vunpack.c.l.b16 %v2432
    %v2449 = vpack.c.b16 %v2446, %v2445
    %v2450 = vpack.c.b16 %v2448, %v2447
    %v2454 = vsel %vm50, %v2427, 0
    %2456 = vmatprep.subr.bf16.mxu0 0
    %2457 = vmatpush1.bf16.msra.mxu0 %v2449
    %2458 = vmatprep.subr.bf16.mxu0 0
    %2459 = vmatpush1.bf16.msra.mxu0 %v2450
    %2460 = vmatprep.subr.bf16.mxu0 0
    %2461 = vmatpush1.bf16.msra.mxu0 0
    %2462 = vmatprep.subr.bf16.mxu0 0
    %2463 = vmatpush1.bf16.msra.mxu0 0
    %2464 = vmatprep.subr.bf16.mxu0 0
    %2465 = vmatpush1.bf16.msra.mxu0 0
    %2466 = vmatprep.subr.bf16.mxu0 0
    %2467 = vmatpush1.bf16.msra.mxu0 0
    %2468 = vmatprep.subr.bf16.mxu0 0
    %2469 = vmatpush1.bf16.msra.mxu0 0
    %2470 = vmatprep.subr.bf16.mxu0 0
    %2471 = vmatpush1.bf16.msra.mxu0 0
    %2472 = vmatprep.subr.bf16.mxu0 0
    %2473 = vmatpush1.bf16.msra.mxu0 0
    %2474 = vmatprep.subr.bf16.mxu0 0
    %2475 = vmatpush1.bf16.msra.mxu0 0
    %2476 = vmatprep.subr.bf16.mxu0 0
    %2477 = vmatpush1.bf16.msra.mxu0 0
    %2478 = vmatprep.subr.bf16.mxu0 0
    %2479 = vmatpush1.bf16.msra.mxu0 0
    %2480 = vmatprep.subr.bf16.mxu0 0
    %2481 = vmatpush1.bf16.msra.mxu0 0
    %2482 = vmatprep.subr.bf16.mxu0 0
    %2483 = vmatpush1.bf16.msra.mxu0 0
    %2484 = vmatprep.subr.bf16.mxu0 0
    %2485 = vmatpush1.bf16.msra.mxu0 0
    %2486 = vmatprep.subr.bf16.mxu0 0
    %2487 = vmatpush1.bf16.msra.mxu0 0
    %2488 = vmatprep.mubr.bf16.mxu0 0
    %2489 = vmatmul.mubr.bf16.gmra.mrb[0].mxu0 %v2454
    %v2490 = vpop.f32.mrb[0].mxu0
    %v2491 = vadd.f32 %v2439, %v2490
    %v2492 = vpop.f32.mrb[0].mxu0
    %v2493 = vpop.f32.mrb[0].mxu0
    %v2494 = vadd.f32 %v2439, %v2493
    %v2495 = vpop.f32.mrb[0].mxu0
    %2496 = vdwg.mxu0
    %v2497 = vadd.f32 %v1429, %v2491
    %v2498 = vadd.f32 %v1430, %v2494
    %s2499 = scalar_lea.vmem %s7, 2
    %v2500 = vld [vmem:[%s2499] sm:$0x3]
    %v2501 = vsel %vm50, %v2497, 0.0
    %2502 = vadd.xlane.f32.xlu0 %v2501
    %v2503 = vpop.xlane.xlu0 %2502
    %v2504 = vsel %vm50, %v2498, 0.0
    %2505 = vadd.xlane.f32.xlu0 %v2504
    %v2506 = vpop.xlane.xlu0 %2505
    %v2507 = vmul.f32 %v2503, %v57
    %v2508 = vmul.f32 %v2506, %v57
    %v2509 = vmul.f32 %v2497, %v2497
    %v2510 = vmul.f32 %v2498, %v2498
    %v2511 = vsel %vm50, %v2509, 0.0
    %2512 = vadd.xlane.f32.xlu0 %v2511
    %v2513 = vpop.xlane.xlu0 %2512
    %v2514 = vsel %vm50, %v2510, 0.0
    %2515 = vadd.xlane.f32.xlu0 %v2514
    %v2516 = vpop.xlane.xlu0 %2515
    %v2517 = vmul.f32 %v2513, %v57
    %v2518 = vmul.f32 %v2516, %v57
    %v2519 = vmul.f32 %v2507, %v2507
    %v2520 = vmul.f32 %v2508, %v2508
    %v2521 = vsub.f32 %v2517, %v2519
    %v2522 = vsub.f32 %v2518, %v2520
    %v2523 = vsub.f32 %v2497, %v2507
    %v2524 = vsub.f32 %v2498, %v2508
    %v2525 = vadd.f32 %v2521, 1e-12
    %v2526 = vadd.f32 %v2522, 1e-12
    %v2527 = vrsqrt.pop %v2525
    %v2528 = vrsqrt.pop %v2526
    %v2529 = vmul.f32 %v2523, %v2527
    %v2530 = vmul.f32 %v2524, %v2528
    %v2531 = vlaneseq
    %v2532 = vshrl.u32 %v2531, 7
    %v2533 = vsub.s32 0, %v2532
    %v2534 = vrot.slane %v2500, %v2533
    %v2535 = vmul.f32 %v2529, %v2534
    %v2536 = vmul.f32 %v2530, %v2534
    %v2537 = vlaneseq
    %v2538 = vshrl.u32 %v2537, 7
    %v2539 = vsub.s32 1, %v2538
    %v2540 = vrot.slane %v2500, %v2539
    %v2541 = vadd.f32 %v2535, %v2540
    %v2542 = vadd.f32 %v2536, %v2540
    %v2543 = vpack.c.bf16 %v2542, %v2541
    %s2544 = scalar_lea.vmem %s8, 16
    %v2545 = vld [vmem:[%s2544] sm:$0xf]
    %v2546 = vld [vmem:[%s2544 + $0x4] sm:$0xf]
    %v2547 = vld [vmem:[%s2544 + $0x8] sm:$0xf]
    %v2548 = vld [vmem:[%s2544 + $0xc] sm:$0xf]
    %s2549 = scalar_lea.vmem %s9, 1
    %v2550 = vld [vmem:[%s2549] sm:$0x1]
    %v2552 = vlaneseq
    %v2553 = vshrl.u32 %v2552, 7
    %v2554 = vsub.s32 0, %v2553
    %v2555 = vrot.slane %v2550, %v2554
    %v2561 = vunpack.c.l.b16 %v2545
    %v2562 = vunpack.c.l.b16 %v2546
    %v2563 = vunpack.c.l.b16 %v2547
    %v2564 = vunpack.c.l.b16 %v2548
    %v2565 = vpack.c.b16 %v2562, %v2561
    %v2566 = vpack.c.b16 %v2564, %v2563
    %v2570 = vsel %vm50, %v2543, 0
    %2572 = vmatprep.subr.bf16.mxu0 0
    %2573 = vmatpush1.bf16.msra.mxu0 %v2565
    %2574 = vmatprep.subr.bf16.mxu0 0
    %2575 = vmatpush1.bf16.msra.mxu0 %v2566
    %2576 = vmatprep.subr.bf16.mxu0 0
    %2577 = vmatpush1.bf16.msra.mxu0 0
    %2578 = vmatprep.subr.bf16.mxu0 0
    %2579 = vmatpush1.bf16.msra.mxu0 0
    %2580 = vmatprep.subr.bf16.mxu0 0
    %2581 = vmatpush1.bf16.msra.mxu0 0
    %2582 = vmatprep.subr.bf16.mxu0 0
    %2583 = vmatpush1.bf16.msra.mxu0 0
    %2584 = vmatprep.subr.bf16.mxu0 0
    %2585 = vmatpush1.bf16.msra.mxu0 0
    %2586 = vmatprep.subr.bf16.mxu0 0
    %2587 = vmatpush1.bf16.msra.mxu0 0
    %2588 = vmatprep.subr.bf16.mxu0 0
    %2589 = vmatpush1.bf16.msra.mxu0 0
    %2590 = vmatprep.subr.bf16.mxu0 0
    %2591 = vmatpush1.bf16.msra.mxu0 0
    %2592 = vmatprep.subr.bf16.mxu0 0
    %2593 = vmatpush1.bf16.msra.mxu0 0
    %2594 = vmatprep.subr.bf16.mxu0 0
    %2595 = vmatpush1.bf16.msra.mxu0 0
    %2596 = vmatprep.subr.bf16.mxu0 0
    %2597 = vmatpush1.bf16.msra.mxu0 0
    %2598 = vmatprep.subr.bf16.mxu0 0
    %2599 = vmatpush1.bf16.msra.mxu0 0
    %2600 = vmatprep.subr.bf16.mxu0 0
    %2601 = vmatpush1.bf16.msra.mxu0 0
    %2602 = vmatprep.subr.bf16.mxu0 0
    %2603 = vmatpush1.bf16.msra.mxu0 0
    %2604 = vmatprep.mubr.bf16.mxu0 0
    %2605 = vmatmul.mubr.bf16.gmra.mrb[0].mxu0 %v2570
    %v2606 = vpop.f32.mrb[0].mxu0
    %v2607 = vadd.f32 %v2555, %v2606
    %v2608 = vpop.f32.mrb[0].mxu0
    %v2609 = vpop.f32.mrb[0].mxu0
    %v2610 = vadd.f32 %v2555, %v2609
    %v2611 = vpop.f32.mrb[0].mxu0
    %2612 = vdwg.mxu0
    %v2613 = vmul.f32 %v2607, %v2607
    %v2614 = vmul.f32 %v2610, %v2610
    %v2615 = vmul.f32 %v2607, %v2613
    %v2616 = vmul.f32 %v2610, %v2614
    %v2617 = vmul.f32 %v2615, 0.044715
    %v2618 = vmul.f32 %v2616, 0.044715
    %v2619 = vadd.f32 %v2607, %v2617
    %v2620 = vadd.f32 %v2610, %v2618
    %v2621 = vmul.f32 %v2619, 0.7978846
    %v2622 = vmul.f32 %v2620, 0.7978846
    %v2623 = vtanh.pop %v2621
    %v2624 = vtanh.pop %v2622
    %v2625 = vadd.f32 %v2623, 1.0
    %v2626 = vadd.f32 %v2624, 1.0
    %v2627 = vmul.f32 %v2625, 0.5
    %v2628 = vmul.f32 %v2626, 0.5
    %v2629 = vmul.f32 %v2607, %v2627
    %v2630 = vmul.f32 %v2610, %v2628
    %v2631 = vpack.c.bf16 %v2630, %v2629
    %s2632 = scalar_lea.vmem %s10, 32
    %v2633 = vld [vmem:[%s2632] sm:$0xf]
    %v2634 = vld [vmem:[%s2632 + $0x4] sm:$0xf]
    %v2635 = vld [vmem:[%s2632 + $0x8] sm:$0xf]
    %v2636 = vld [vmem:[%s2632 + $0xc] sm:$0xf]
    %v2637 = vld [vmem:[%s2632 + $0x10] sm:$0xf]
    %v2638 = vld [vmem:[%s2632 + $0x14] sm:$0xf]
    %v2639 = vld [vmem:[%s2632 + $0x18] sm:$0xf]
    %v2640 = vld [vmem:[%s2632 + $0x1c] sm:$0xf]
    %s2641 = scalar_lea.vmem %s11, 1
    %v2642 = vld [vmem:[%s2641] sm:$0x1]
    %v2644 = vlaneseq
    %v2645 = vshrl.u32 %v2644, 7
    %v2646 = vsub.s32 0, %v2645
    %v2647 = vrot.slane %v2642, %v2646
    %v2657 = vunpack.c.l.b16 %v2633
    %v2658 = vunpack.c.l.b16 %v2634
    %v2659 = vunpack.c.l.b16 %v2635
    %v2660 = vunpack.c.l.b16 %v2636
    %v2661 = vunpack.c.l.b16 %v2637
    %v2662 = vunpack.c.l.b16 %v2638
    %v2663 = vunpack.c.l.b16 %v2639
    %v2664 = vunpack.c.l.b16 %v2640
    %v2665 = vpack.c.b16 %v2658, %v2657
    %v2666 = vpack.c.b16 %v2660, %v2659
    %v2667 = vpack.c.b16 %v2662, %v2661
    %v2668 = vpack.c.b16 %v2664, %v2663
    %v2674 = vsel %vm1341, %v2631, 0
    %2676 = vmatprep.subr.bf16.mxu0 0
    %2677 = vmatpush1.bf16.msra.mxu0 %v2665
    %2678 = vmatprep.subr.bf16.mxu0 0
    %2679 = vmatpush1.bf16.msra.mxu0 %v2666
    %2680 = vmatprep.subr.bf16.mxu0 0
    %2681 = vmatpush1.bf16.msra.mxu0 %v2667
    %2682 = vmatprep.subr.bf16.mxu0 0
    %2683 = vmatpush1.bf16.msra.mxu0 %v2668
    %2684 = vmatprep.subr.bf16.mxu0 0
    %2685 = vmatpush1.bf16.msra.mxu0 0
    %2686 = vmatprep.subr.bf16.mxu0 0
    %2687 = vmatpush1.bf16.msra.mxu0 0
    %2688 = vmatprep.subr.bf16.mxu0 0
    %2689 = vmatpush1.bf16.msra.mxu0 0
    %2690 = vmatprep.subr.bf16.mxu0 0
    %2691 = vmatpush1.bf16.msra.mxu0 0
    %2692 = vmatprep.subr.bf16.mxu0 0
    %2693 = vmatpush1.bf16.msra.mxu0 0
    %2694 = vmatprep.subr.bf16.mxu0 0
    %2695 = vmatpush1.bf16.msra.mxu0 0
    %2696 = vmatprep.subr.bf16.mxu0 0
    %2697 = vmatpush1.bf16.msra.mxu0 0
    %2698 = vmatprep.subr.bf16.mxu0 0
    %2699 = vmatpush1.bf16.msra.mxu0 0
    %2700 = vmatprep.subr.bf16.mxu0 0
    %2701 = vmatpush1.bf16.msra.mxu0 0
    %2702 = vmatprep.subr.bf16.mxu0 0
    %2703 = vmatpush1.bf16.msra.mxu0 0
    %2704 = vmatprep.subr.bf16.mxu0 0
    %2705 = vmatpush1.bf16.msra.mxu0 0
    %2706 = vmatprep.subr.bf16.mxu0 0
    %2707 = vmatpush1.bf16.msra.mxu0 0
    %2708 = vmatprep.mubr.bf16.mxu0 0
    %2709 = vmatmul.mubr.bf16.gmra.mrb[0].mxu0 %v2674
    %v2710 = vpop.f32.mrb[0].mxu0
    %v2711 = vadd.f32 %v2647, %v2710
    %v2712 = vpop.f32.mrb[0].mxu0
    %v2713 = vpop.f32.mrb[0].mxu0
    %v2714 = vadd.f32 %v2647, %v2713
    %v2715 = vpop.f32.mrb[0].mxu0
    %2716 = vdwg.mxu0
    %v2717 = vadd.f32 %v2541, %v2711
    %v2718 = vadd.f32 %v2542, %v2714
    %s2719 = scalar_lea.vmem %s12, 2
    %v2720 = vld [vmem:[%s2719] sm:$0x3]
    %v2721 = vsel %vm50, %v2717, 0.0
    %2722 = vadd.xlane.f32.xlu0 %v2721
    %v2723 = vpop.xlane.xlu0 %2722
    %v2724 = vsel %vm50, %v2718, 0.0
    %2725 = vadd.xlane.f32.xlu0 %v2724
    %v2726 = vpop.xlane.xlu0 %2725
    %v2727 = vmul.f32 %v2723, %v57
    %v2728 = vmul.f32 %v2726, %v57
    %v2729 = vmul.f32 %v2717, %v2717
    %v2730 = vmul.f32 %v2718, %v2718
    %v2731 = vsel %vm50, %v2729, 0.0
    %2732 = vadd.xlane.f32.xlu0 %v2731
    %v2733 = vpop.xlane.xlu0 %2732
    %v2734 = vsel %vm50, %v2730, 0.0
    %2735 = vadd.xlane.f32.xlu0 %v2734
    %v2736 = vpop.xlane.xlu0 %2735
    %v2737 = vmul.f32 %v2733, %v57
    %v2738 = vmul.f32 %v2736, %v57
    %v2739 = vmul.f32 %v2727, %v2727
    %v2740 = vmul.f32 %v2728, %v2728
    %v2741 = vsub.f32 %v2737, %v2739
    %v2742 = vsub.f32 %v2738, %v2740
    %v2743 = vsub.f32 %v2717, %v2727
    %v2744 = vsub.f32 %v2718, %v2728
    %v2745 = vadd.f32 %v2741, 1e-12
    %v2746 = vadd.f32 %v2742, 1e-12
    %v2747 = vrsqrt.pop %v2745
    %v2748 = vrsqrt.pop %v2746
    %v2749 = vmul.f32 %v2743, %v2747
    %v2750 = vmul.f32 %v2744, %v2748
    %v2751 = vlaneseq
    %v2752 = vshrl.u32 %v2751, 7
    %v2753 = vsub.s32 0, %v2752
    %v2754 = vrot.slane %v2720, %v2753
    %v2755 = vmul.f32 %v2749, %v2754
    %v2756 = vmul.f32 %v2750, %v2754
    %v2757 = vlaneseq
    %v2758 = vshrl.u32 %v2757, 7
    %v2759 = vsub.s32 1, %v2758
    %v2760 = vrot.slane %v2720, %v2759
    %v2761 = vadd.f32 %v2755, %v2760
    %v2762 = vadd.f32 %v2756, %v2760
    %v2764 = vsel %vm168, %v48, 0
    %2766 = vmatprep.subr.mxu0 0.0
    %2767 = vmatpush1.msra.mxu0 %v2761
    %2768 = vmatprep.subr.mxu0 0.0
    %2769 = vmatpush1.msra.mxu0 0.0
    %2770 = vmatprep.subr.mxu0 0.0
    %2771 = vmatpush1.msra.mxu0 0.0
    %2772 = vmatprep.subr.mxu0 0.0
    %2773 = vmatpush1.msra.mxu0 0.0
    %2774 = vmatprep.subr.mxu0 0.0
    %2775 = vmatpush1.msra.mxu0 0.0
    %2776 = vmatprep.subr.mxu0 0.0
    %2777 = vmatpush1.msra.mxu0 0.0
    %2778 = vmatprep.subr.mxu0 0.0
    %2779 = vmatpush1.msra.mxu0 0.0
    %2780 = vmatprep.subr.mxu0 0.0
    %2781 = vmatpush1.msra.mxu0 0.0
    %2782 = vmatprep.subr.mxu0 0.0
    %2783 = vmatpush1.msra.mxu0 0.0
    %2784 = vmatprep.subr.mxu0 0.0
    %2785 = vmatpush1.msra.mxu0 0.0
    %2786 = vmatprep.subr.mxu0 0.0
    %2787 = vmatpush1.msra.mxu0 0.0
    %2788 = vmatprep.subr.mxu0 0.0
    %2789 = vmatpush1.msra.mxu0 0.0
    %2790 = vmatprep.subr.mxu0 0.0
    %2791 = vmatpush1.msra.mxu0 0.0
    %2792 = vmatprep.subr.mxu0 0.0
    %2793 = vmatpush1.msra.mxu0 0.0
    %2794 = vmatprep.subr.mxu0 0.0
    %2795 = vmatpush1.msra.mxu0 0.0
    %2796 = vmatprep.subr.mxu0 0.0
    %2797 = vmatpush1.msra.mxu0 0.0
    %2798 = vmatprep.subr.mxu0 0.0
    %2799 = vmatpush1.msra.mxu0 0.0
    %2800 = vmatprep.subr.mxu0 0.0
    %2801 = vmatpush1.msra.mxu0 0.0
    %2802 = vmatprep.subr.mxu0 0.0
    %2803 = vmatpush1.msra.mxu0 0.0
    %2804 = vmatprep.subr.mxu0 0.0
    %2805 = vmatpush1.msra.mxu0 0.0
    %2806 = vmatprep.subr.mxu0 0.0
    %2807 = vmatpush1.msra.mxu0 0.0
    %2808 = vmatprep.subr.mxu0 0.0
    %2809 = vmatpush1.msra.mxu0 0.0
    %2810 = vmatprep.subr.mxu0 0.0
    %2811 = vmatpush1.msra.mxu0 0.0
    %2812 = vmatprep.subr.mxu0 0.0
    %2813 = vmatpush1.msra.mxu0 0.0
    %2814 = vmatprep.subr.mxu0 0.0
    %2815 = vmatpush1.msra.mxu0 0.0
    %2816 = vmatprep.subr.mxu0 0.0
    %2817 = vmatpush1.msra.mxu0 0.0
    %2818 = vmatprep.subr.mxu0 0.0
    %2819 = vmatpush1.msra.mxu0 0.0
    %2820 = vmatprep.subr.mxu0 0.0
    %2821 = vmatpush1.msra.mxu0 0.0
    %2822 = vmatprep.subr.mxu0 0.0
    %2823 = vmatpush1.msra.mxu0 0.0
    %2824 = vmatprep.subr.mxu0 0.0
    %2825 = vmatpush1.msra.mxu0 0.0
    %2826 = vmatprep.subr.mxu0 0.0
    %2827 = vmatpush1.msra.mxu0 0.0
    %2828 = vmatprep.subr.mxu0 0.0
    %2829 = vmatpush1.msra.mxu0 0.0
    %2830 = vmatprep.mubr.f32.mxu0 0.0
    %2831 = vmatmul.mubr.f32.gmra.mrb[0].mxu0 %v2764
    %v2832 = vpop.f32.mrb[0].mxu0
    %v2833 = vadd.f32 0.0, %v2832
    %v2834 = vpop.f32.mrb[0].mxu0
    %2835 = vdwg.mxu0
    %v2836 = vrot.slane %v48, 1
    %v2837 = vsel %vm168, %v2836, 0
    %2839 = vmatprep.subr.mxu0 0.0
    %2840 = vmatpush1.msra.mxu0 %v2762
    %2841 = vmatprep.subr.mxu0 0.0
    %2842 = vmatpush1.msra.mxu0 0.0
    %2843 = vmatprep.subr.mxu0 0.0
    %2844 = vmatpush1.msra.mxu0 0.0
    %2845 = vmatprep.subr.mxu0 0.0
    %2846 = vmatpush1.msra.mxu0 0.0
    %2847 = vmatprep.subr.mxu0 0.0
    %2848 = vmatpush1.msra.mxu0 0.0
    %2849 = vmatprep.subr.mxu0 0.0
    %2850 = vmatpush1.msra.mxu0 0.0
    %2851 = vmatprep.subr.mxu0 0.0
    %2852 = vmatpush1.msra.mxu0 0.0
    %2853 = vmatprep.subr.mxu0 0.0
    %2854 = vmatpush1.msra.mxu0 0.0
    %2855 = vmatprep.subr.mxu0 0.0
    %2856 = vmatpush1.msra.mxu0 0.0
    %2857 = vmatprep.subr.mxu0 0.0
    %2858 = vmatpush1.msra.mxu0 0.0
    %2859 = vmatprep.subr.mxu0 0.0
    %2860 = vmatpush1.msra.mxu0 0.0
    %2861 = vmatprep.subr.mxu0 0.0
    %2862 = vmatpush1.msra.mxu0 0.0
    %2863 = vmatprep.subr.mxu0 0.0
    %2864 = vmatpush1.msra.mxu0 0.0
    %2865 = vmatprep.subr.mxu0 0.0
    %2866 = vmatpush1.msra.mxu0 0.0
    %2867 = vmatprep.subr.mxu0 0.0
    %2868 = vmatpush1.msra.mxu0 0.0
    %2869 = vmatprep.subr.mxu0 0.0
    %2870 = vmatpush1.msra.mxu0 0.0
    %2871 = vmatprep.subr.mxu0 0.0
    %2872 = vmatpush1.msra.mxu0 0.0
    %2873 = vmatprep.subr.mxu0 0.0
    %2874 = vmatpush1.msra.mxu0 0.0
    %2875 = vmatprep.subr.mxu0 0.0
    %2876 = vmatpush1.msra.mxu0 0.0
    %2877 = vmatprep.subr.mxu0 0.0
    %2878 = vmatpush1.msra.mxu0 0.0
    %2879 = vmatprep.subr.mxu0 0.0
    %2880 = vmatpush1.msra.mxu0 0.0
    %2881 = vmatprep.subr.mxu0 0.0
    %2882 = vmatpush1.msra.mxu0 0.0
    %2883 = vmatprep.subr.mxu0 0.0
    %2884 = vmatpush1.msra.mxu0 0.0
    %2885 = vmatprep.subr.mxu0 0.0
    %2886 = vmatpush1.msra.mxu0 0.0
    %2887 = vmatprep.subr.mxu0 0.0
    %2888 = vmatpush1.msra.mxu0 0.0
    %2889 = vmatprep.subr.mxu0 0.0
    %2890 = vmatpush1.msra.mxu0 0.0
    %2891 = vmatprep.subr.mxu0 0.0
    %2892 = vmatpush1.msra.mxu0 0.0
    %2893 = vmatprep.subr.mxu0 0.0
    %2894 = vmatpush1.msra.mxu0 0.0
    %2895 = vmatprep.subr.mxu0 0.0
    %2896 = vmatpush1.msra.mxu0 0.0
    %2897 = vmatprep.subr.mxu0 0.0
    %2898 = vmatpush1.msra.mxu0 0.0
    %2899 = vmatprep.subr.mxu0 0.0
    %2900 = vmatpush1.msra.mxu0 0.0
    %2901 = vmatprep.subr.mxu0 0.0
    %2902 = vmatpush1.msra.mxu0 0.0
    %2903 = vmatprep.mubr.f32.mxu0 0.0
    %2904 = vmatmul.mubr.f32.gmra.mrb[0].mxu0 %v2837
    %v2905 = vpop.f32.mrb[0].mxu0
    %v2906 = vadd.f32 0.0, %v2905
    %v2907 = vpop.f32.mrb[0].mxu0
    %2908 = vdwg.mxu0
    %v2910 = vrot.slane %v2906, 7
    %vm2912 = vcmask 1040384
    %v2913 = vsel %vm2912, %v2833, %v2910
    %vm2914 = vcmask 58368
    %v2915 = vsel %vm2914, %v48, 0.0
    %2916 = vadd.xlane.f32.xlu0 %v2915
    %v2917 = vpop.xlane.xlu0 %2916
    %v2918 = vmax.f32 %v2917, 1e-09
    %v2919 = vrcp.pop %v2918
    %v2920 = vmul.f32 %v2913, %v2919
    %vm2921 = vcmask 254976
    %2922 = vst.msk [vmem:[#allocation2] sm:$0x3] %vm2921, %v2920
    // Predicated region
    $region54: #{encode.1} parent=1 // pred_check
      _
    $region55: #{encode.1} parent=1 // pred_check_branch
      %2924 = sbr.rel (0) target = $region57
    $region56: #{encode.1} parent=1 // pred_region
      %s2926 = ssub.s32 32, 32
      %2927 = vsyncadd [#allocation3], %s2926
      %s2929 = sshll.u32 [#allocation2], 4
      %s2930 = int_to_ptr.vmem [resolvable:$true] %s2929
      %2932 = dma.vmem_to_hbm [thread:$0]  %s2930, 32, %s13, [#allocation3]
    $region57: #{encode.1} parent=1 // pred_fallthru
      _
    // Predicated region
    $region58: #{encode.1} parent=1 // pred_check
      _
    $region59: #{encode.1} parent=1 // pred_check_branch
      %2934 = sbr.rel (0) target = $region61
    $region60: #{encode.1} parent=1 // pred_region
      %2935 = dma.done [#allocation3], 32
    $region61: #{encode.1} parent=1 // pred_fallthru
      _
    %2936 = vsyncpa [#allocation3], 1

</llo_original>
